<compile_context>
chip_gen: v7x
topology: tpu7x:2x2x1
jax: 0.10.0
libtpu: 0.0.40
codegen_flags: <defaults>
</compile_context>

<pallas_src>
import functools

import jax
import jax.numpy as jnp
import numpy as np
from jax.experimental import pallas as pl
from jax.experimental.pallas import tpu as pltpu

BN_EPS = 1e-5


def _hardswish(v):
    # x * hardtanh(x + 3, 0, 6) / 6   (as defined in the PyTorch module)
    return v * jnp.clip(v + 3.0, 0.0, 6.0) * (1.0 / 6.0)


# --------------------------------- kernels -----------------------------------
def _conv1x1_kernel(x_ref, w_ref, b_ref, o_ref):
    # x_ref: (1, c1, thw)  w_ref: (c2, c1)  b_ref: (c2, 1)  o_ref: (1, c2, thw)
    z = jnp.dot(w_ref[...], x_ref[0], preferred_element_type=jnp.float32)
    o_ref[0] = _hardswish(z + b_ref[...])


def _conv3x3_kernel(*refs, add_residual):
    # taps_ref: (9, 1, c2, thw)  w_ref: (9, c2, c2)  b_ref: (c2, 1)
    # [res_ref: (1, c2, thw)]    o_ref: (1, c2, thw)
    if add_residual:
        taps_ref, w_ref, b_ref, res_ref, o_ref = refs
    else:
        taps_ref, w_ref, b_ref, o_ref = refs

    acc = jnp.zeros(o_ref.shape[1:], jnp.float32)
    for t in range(9):                       # static unroll: 9 MXU matmuls
        acc = acc + jnp.dot(w_ref[t], taps_ref[t, 0],
                            preferred_element_type=jnp.float32)
    z = _hardswish(acc + b_ref[...])
    if add_residual:
        z = z + res_ref[0]
    o_ref[0] = z


# --------------------------------- wrappers ----------------------------------
def _round_up(v, m):
    return (v + m - 1) // m * m


def _pick_tile(hwp, cap=1024):
    """Largest multiple-of-128 tile (<= cap) that divides the padded HW axis."""
    best, t = 128, 128
    while t <= min(hwp, cap):
        if hwp % t == 0:
            best = t
        t += 128
    return best


def _conv1x1_call(x_flat, w, b, thw):
    bs, c1, hwp = x_flat.shape
    c2 = w.shape[0]
    grid = (bs, hwp // thw)
    return pl.pallas_call(
        _conv1x1_kernel,
        grid=grid,
        in_specs=[
            pl.BlockSpec((1, c1, thw), lambda i, j: (i, 0, j)),
            pl.BlockSpec((c2, c1), lambda i, j: (0, 0)),      # weights resident
            pl.BlockSpec((c2, 1), lambda i, j: (0, 0)),       # folded bias
        ],
        out_specs=pl.BlockSpec((1, c2, thw), lambda i, j: (i, 0, j)),
        out_shape=jax.ShapeDtypeStruct((bs, c2, hwp), jnp.float32),
        compiler_params=pltpu.CompilerParams(
            dimension_semantics=("parallel", "parallel")),
    )(x_flat, w, b)


def _conv3x3_call(y_nchw, w_taps, b, thw, residual_flat=None):
    bs, c2, H, W = y_nchw.shape
    hw = H * W
    hwp = _round_up(hw, 128)

    # im2col-lite: 9 shifted, spatially-flattened views of the padded map.
    # TODO(synk): a halo-aware in-kernel shift would avoid this 9x HBM staging.
    yp = jnp.pad(y_nchw, ((0, 0), (0, 0), (1, 1), (1, 1)))
    taps = jnp.stack(
        [yp[:, :, ky:ky + H, kx:kx + W].reshape(bs, c2, hw)
         for ky in range(3) for kx in range(3)], axis=0)          # (9,bs,c2,hw)
    taps = jnp.pad(taps, ((0, 0), (0, 0), (0, 0), (0, hwp - hw)))

    add_res = residual_flat is not None
    grid = (bs, hwp // thw)
    in_specs = [
        pl.BlockSpec((9, 1, c2, thw), lambda i, j: (0, i, 0, j)),
        pl.BlockSpec((9, c2, c2), lambda i, j: (0, 0, 0)),
        pl.BlockSpec((c2, 1), lambda i, j: (0, 0)),
    ]
    args = [taps, w_taps, b]
    if add_res:
        in_specs.append(pl.BlockSpec((1, c2, thw), lambda i, j: (i, 0, j)))
        args.append(residual_flat)

    return pl.pallas_call(
        functools.partial(_conv3x3_kernel, add_residual=add_res),
        grid=grid,
        in_specs=in_specs,
        out_specs=pl.BlockSpec((1, c2, thw), lambda i, j: (i, 0, j)),
        out_shape=jax.ShapeDtypeStruct((bs, c2, hwp), jnp.float32),
        compiler_params=pltpu.CompilerParams(
            dimension_semantics=("parallel", "parallel")),
    )(*args)


# --------------------------- parameter preparation ---------------------------
def fold_conv_bn(w, gamma, beta, mean, var, eps=BN_EPS):
    """Fold eval-mode BatchNorm into the (bias-free) conv that precedes it."""
    scale = gamma / jnp.sqrt(var + eps)
    w_f = w * scale[:, None, None, None]
    b_f = beta - mean * scale
    return w_f, b_f


def prepare_c1_params(raw):
    w1, bn1 = raw["cv1"]
    w1f, b1f = fold_conv_bn(w1, *bn1)
    c2 = w1f.shape[0]
    cv1 = (w1f.reshape(c2, -1), b1f.reshape(c2, 1))
    m = []
    for w3, bn3 in raw["m"]:
        w3f, b3f = fold_conv_bn(w3, *bn3)
        w_taps = jnp.transpose(w3f, (2, 3, 0, 1)).reshape(9, c2, c2)
        m.append((w_taps, b3f.reshape(c2, 1)))
    return {"cv1": cv1, "m": m}


# --------------------------------- forward -----------------------------------
def c1_forward_pallas(x, params):
    bs, c1, H, W = x.shape
    hw = H * W
    hwp = _round_up(hw, 128)        # lane-dense: pad flat spatial axis to 128k
    thw = _pick_tile(hwp)

    w1, b1 = params["cv1"]
    c2 = w1.shape[0]
    x_flat = jnp.pad(x.reshape(bs, c1, hw), ((0, 0), (0, 0), (0, hwp - hw)))

    y_flat = _conv1x1_call(x_flat, w1, b1, thw)              # cv1: (bs, c2, hwp)
    y_nchw = y_flat[:, :, :hw].reshape(bs, c2, H, W)

    m = params["m"]
    if not m:                                                # n == 0 degenerate
        return y_nchw + y_nchw

    t_nchw = y_nchw
    for li, (w_taps, b3) in enumerate(m):
        res = y_flat if li == len(m) - 1 else None           # fuse residual add
        out_flat = _conv3x3_call(t_nchw, w_taps, b3, thw, residual_flat=res)
        t_nchw = out_flat[:, :, :hw].reshape(bs, c2, H, W)
    return t_nchw


c1_forward = jax.jit(c1_forward_pallas)


# --------------------------- pure-JAX reference -------------------------------
def _conv_bn_act_ref(x, w, bn, k):
    gamma, beta, mean, var = bn
    pad = k // 2
    z = jax.lax.conv_general_dilated(
        x, w, window_strides=(1, 1), padding=[(pad, pad), (pad, pad)],
        dimension_numbers=("NCHW", "OIHW", "NCHW"),
        precision=jax.lax.Precision.HIGHEST)
    z = (z - mean[None, :, None, None]) / jnp.sqrt(var[None, :, None, None] + BN_EPS)
    z = z * gamma[None, :, None, None] + beta[None, :, None, None]
    return _hardswish(z)


def c1_forward_ref(x, raw):
    w1, bn1 = raw["cv1"]
    y = _conv_bn_act_ref(x, w1, bn1, 1)
    t = y
    for w3, bn3 in raw["m"]:
        t = _conv_bn_act_ref(t, w3, bn3, 3)
    return t + y


# ----------------------------------- main -------------------------------------
if __name__ == "__main__":
    key = jax.random.PRNGKey(0)
    bs, c1, c2, H, W, n = 2, 8, 16, 16, 16, 2

    keys = jax.random.split(key, 7)
    x = jax.random.normal(keys[0], (bs, c1, H, W), dtype=jnp.float32)

    # cv1: 1x1 conv + BN params
    w1 = jax.random.normal(keys[1], (c2, c1, 1, 1), jnp.float32) / np.sqrt(c1)
    bn1 = (1.0 + 0.1 * jax.random.normal(keys[2], (c2,), jnp.float32),   # gamma
           0.1 * jax.random.normal(keys[3], (c2,), jnp.float32),         # beta
           0.1 * jax.random.normal(keys[4], (c2,), jnp.float32),         # mean
           jax.random.uniform(keys[5], (c2,), jnp.float32, 0.5, 1.5))    # var

    # m: n x (3x3 conv + BN params)
    m_raw = []
    kk = keys[6]
    for _ in range(n):
        kk, k1, k2, k3, k4, k5 = jax.random.split(kk, 6)
        w3 = jax.random.normal(k1, (c2, c2, 3, 3), jnp.float32) / np.sqrt(c2 * 9)
        bn3 = (1.0 + 0.1 * jax.random.normal(k2, (c2,), jnp.float32),
               0.1 * jax.random.normal(k3, (c2,), jnp.float32),
               0.1 * jax.random.normal(k4, (c2,), jnp.float32),
               jax.random.uniform(k5, (c2,), jnp.float32, 0.5, 1.5))
        m_raw.append((w3, bn3))

    raw_params = {"cv1": (w1, bn1), "m": m_raw}
    params = prepare_c1_params(raw_params)

    out = c1_forward(x, params)
    jax.block_until_ready(out)

    ref = c1_forward_ref(x, raw_params)
    assert out.shape == (bs, c2, H, W)
    np.testing.assert_allclose(np.asarray(out), np.asarray(ref),
                               rtol=1e-2, atol=1e-2)

    print("KERNEL_OK")
</pallas_src>

<mosaic_0001>
module attributes {stable_mosaic.version = 11 : i64} {
  func.func @_conv1x1_kernel(%arg0: i32, %arg1: i32, %arg2: memref<1x8x256xf32, #tpu.memory_space<vmem>>, %arg3: memref<16x8xf32, #tpu.memory_space<vmem>>, %arg4: memref<16x1xf32, #tpu.memory_space<vmem>>, %arg5: memref<1x16x256xf32, #tpu.memory_space<vmem>>) attributes {dimension_semantics = [#tpu.dimension_semantics<parallel>, #tpu.dimension_semantics<parallel>], iteration_bounds = array<i64: 2, 1>, scalar_prefetch = 0 : i64, scratch_operands = 0 : i64, tpu.core_type = #tpu.core_type<tc>, window_params = [{transform_indices = @transform_0, window_bounds = array<i64: 1, 8, 256>}, {pipeline_mode = #tpu.pipeline_mode<synchronous>, transform_indices = @transform_1, window_bounds = array<i64: 16, 8>}, {pipeline_mode = #tpu.pipeline_mode<synchronous>, transform_indices = @transform_2, window_bounds = array<i64: 16, 1>}, {transform_indices = @transform_3, window_bounds = array<i64: 1, 16, 256>}]} {
    %c0 = arith.constant 0 : index
    %c0_0 = arith.constant 0 : index
    %0 = vector.load %arg3[%c0, %c0_0] : memref<16x8xf32, #tpu.memory_space<vmem>>, vector<16x8xf32>
    %c0_1 = arith.constant 0 : index
    %c0_2 = arith.constant 0 : index
    %c0_3 = arith.constant 0 : index
    %1 = vector.load %arg2[%c0_1, %c0_2, %c0_3] : memref<1x8x256xf32, #tpu.memory_space<vmem>>, vector<1x8x256xf32>
    %2 = vector.shape_cast %1 : vector<1x8x256xf32> to vector<8x256xf32>
    %cst = arith.constant dense<0.000000e+00> : vector<16x256xf32>
    %3 = tpu.matmul %0, %2, %cst {dimension_numbers = #tpu.dot_dimension_numbers<[1], [0], [0], [1], [0, 0, 1, 1], [], []>} : vector<16x8xf32>, vector<8x256xf32>, vector<16x256xf32> -> vector<16x256xf32>
    %c0_4 = arith.constant 0 : index
    %c0_5 = arith.constant 0 : index
    %4 = vector.load %arg4[%c0_4, %c0_5] : memref<16x1xf32, #tpu.memory_space<vmem>>, vector<16x1xf32>
    %5 = vector.broadcast %4 : vector<16x1xf32> to vector<16x256xf32>
    %6 = arith.addf %3, %5 : vector<16x256xf32>
    %cst_6 = arith.constant 3.000000e+00 : f32
    %7 = vector.broadcast %cst_6 : f32 to vector<16x256xf32>
    %8 = arith.addf %6, %7 : vector<16x256xf32>
    %cst_7 = arith.constant 0.000000e+00 : f32
    %cst_8 = arith.constant 6.000000e+00 : f32
    %9 = vector.broadcast %cst_7 : f32 to vector<16x256xf32>
    %10 = arith.maximumf %9, %8 : vector<16x256xf32>
    %11 = vector.broadcast %cst_8 : f32 to vector<16x256xf32>
    %12 = arith.minimumf %11, %10 : vector<16x256xf32>
    %13 = arith.mulf %6, %12 : vector<16x256xf32>
    %cst_9 = arith.constant 0.166666672 : f32
    %14 = vector.broadcast %cst_9 : f32 to vector<16x256xf32>
    %15 = arith.mulf %13, %14 : vector<16x256xf32>
    %c0_10 = arith.constant 0 : index
    %c0_11 = arith.constant 0 : index
    %c0_12 = arith.constant 0 : index
    %16 = vector.load %arg5[%c0_10, %c0_11, %c0_12] : memref<1x16x256xf32, #tpu.memory_space<vmem>>, vector<1x16x256xf32>
    %17 = vector.shape_cast %16 : vector<1x16x256xf32> to vector<16x256xf32>
    %18 = vector.shape_cast %15 : vector<16x256xf32> to vector<1x16x256xf32>
    tpu.vector_store %arg5[%c0_10, %c0_11, %c0_12], %18 {strides = array<i32>} : memref<1x16x256xf32, #tpu.memory_space<vmem>>, vector<1x16x256xf32>,
    return
  }
  func.func @transform_0(%arg0: i32, %arg1: i32) -> (i32, i32, i32) {
    %c0_i32 = arith.constant 0 : i32
    %c0_i32_0 = arith.constant 0 : i32
    return %arg0, %c0_i32, %arg1 : i32, i32, i32
  }
  func.func @transform_1(%arg0: i32, %arg1: i32) -> (i32, i32) {
    %c0_i32 = arith.constant 0 : i32
    %c0_i32_0 = arith.constant 0 : i32
    %c0_i32_1 = arith.constant 0 : i32
    return %c0_i32, %c0_i32_0 : i32, i32
  }
  func.func @transform_2(%arg0: i32, %arg1: i32) -> (i32, i32) {
    %c0_i32 = arith.constant 0 : i32
    %c0_i32_0 = arith.constant 0 : i32
    %c0_i32_1 = arith.constant 0 : i32
    return %c0_i32, %c0_i32_0 : i32, i32
  }
  func.func @transform_3(%arg0: i32, %arg1: i32) -> (i32, i32, i32) {
    %c0_i32 = arith.constant 0 : i32
    %c0_i32_0 = arith.constant 0 : i32
    return %arg0, %c0_i32, %arg1 : i32, i32, i32
  }
}

module attributes {stable_mosaic.version = 11 : i64} {
  func.func @_conv3x3_kernel(%arg0: i32, %arg1: i32, %arg2: memref<9x1x16x256xf32, #tpu.memory_space<vmem>>, %arg3: memref<9x16x16xf32, #tpu.memory_space<vmem>>, %arg4: memref<16x1xf32, #tpu.memory_space<vmem>>, %arg5: memref<1x16x256xf32, #tpu.memory_space<vmem>>) attributes {dimension_semantics = [#tpu.dimension_semantics<parallel>, #tpu.dimension_semantics<parallel>], iteration_bounds = array<i64: 2, 1>, scalar_prefetch = 0 : i64, scratch_operands = 0 : i64, tpu.core_type = #tpu.core_type<tc>, window_params = [{transform_indices = @transform_0, window_bounds = array<i64: 9, 1, 16, 256>}, {pipeline_mode = #tpu.pipeline_mode<synchronous>, transform_indices = @transform_1, window_bounds = array<i64: 9, 16, 16>}, {pipeline_mode = #tpu.pipeline_mode<synchronous>, transform_indices = @transform_2, window_bounds = array<i64: 16, 1>}, {transform_indices = @transform_3, window_bounds = array<i64: 1, 16, 256>}]} {
    %cst = arith.constant 0.000000e+00 : f32
    %0 = vector.broadcast %cst : f32 to vector<16x256xf32>
    %c0 = arith.constant 0 : index
    %c0_0 = arith.constant 0 : index
    %c0_1 = arith.constant 0 : index
    %1 = vector.load %arg3[%c0, %c0_0, %c0_1] : memref<9x16x16xf32, #tpu.memory_space<vmem>>, vector<1x16x16xf32>
    %2 = vector.shape_cast %1 : vector<1x16x16xf32> to vector<16x16xf32>
    %c0_2 = arith.constant 0 : index
    %c0_3 = arith.constant 0 : index
    %c0_4 = arith.constant 0 : index
    %c0_5 = arith.constant 0 : index
    %3 = vector.load %arg2[%c0_2, %c0_3, %c0_4, %c0_5] : memref<9x1x16x256xf32, #tpu.memory_space<vmem>>, vector<1x1x16x256xf32>
    %4 = vector.shape_cast %3 : vector<1x1x16x256xf32> to vector<16x256xf32>
    %cst_6 = arith.constant dense<0.000000e+00> : vector<16x256xf32>
    %5 = tpu.matmul %2, %4, %cst_6 {dimension_numbers = #tpu.dot_dimension_numbers<[1], [0], [0], [1], [0, 0, 1, 1], [], []>} : vector<16x16xf32>, vector<16x256xf32>, vector<16x256xf32> -> vector<16x256xf32>
    %6 = arith.addf %0, %5 : vector<16x256xf32>
    %c1 = arith.constant 1 : index
    %c0_7 = arith.constant 0 : index
    %c0_8 = arith.constant 0 : index
    %7 = vector.load %arg3[%c1, %c0_7, %c0_8] : memref<9x16x16xf32, #tpu.memory_space<vmem>>, vector<1x16x16xf32>
    %8 = vector.shape_cast %7 : vector<1x16x16xf32> to vector<16x16xf32>
    %c1_9 = arith.constant 1 : index
    %c0_10 = arith.constant 0 : index
    %c0_11 = arith.constant 0 : index
    %c0_12 = arith.constant 0 : index
    %9 = vector.load %arg2[%c1_9, %c0_10, %c0_11, %c0_12] : memref<9x1x16x256xf32, #tpu.memory_space<vmem>>, vector<1x1x16x256xf32>
    %10 = vector.shape_cast %9 : vector<1x1x16x256xf32> to vector<16x256xf32>
    %cst_13 = arith.constant dense<0.000000e+00> : vector<16x256xf32>
    %11 = tpu.matmul %8, %10, %cst_13 {dimension_numbers = #tpu.dot_dimension_numbers<[1], [0], [0], [1], [0, 0, 1, 1], [], []>} : vector<16x16xf32>, vector<16x256xf32>, vector<16x256xf32> -> vector<16x256xf32>
    %12 = arith.addf %6, %11 : vector<16x256xf32>
    %c2 = arith.constant 2 : index
    %c0_14 = arith.constant 0 : index
    %c0_15 = arith.constant 0 : index
    %13 = vector.load %arg3[%c2, %c0_14, %c0_15] : memref<9x16x16xf32, #tpu.memory_space<vmem>>, vector<1x16x16xf32>
    %14 = vector.shape_cast %13 : vector<1x16x16xf32> to vector<16x16xf32>
    %c2_16 = arith.constant 2 : index
    %c0_17 = arith.constant 0 : index
    %c0_18 = arith.constant 0 : index
    %c0_19 = arith.constant 0 : index
    %15 = vector.load %arg2[%c2_16, %c0_17, %c0_18, %c0_19] : memref<9x1x16x256xf32, #tpu.memory_space<vmem>>, vector<1x1x16x256xf32>
    %16 = vector.shape_cast %15 : vector<1x1x16x256xf32> to vector<16x256xf32>
    %cst_20 = arith.constant dense<0.000000e+00> : vector<16x256xf32>
    %17 = tpu.matmul %14, %16, %cst_20 {dimension_numbers = #tpu.dot_dimension_numbers<[1], [0], [0], [1], [0, 0, 1, 1], [], []>} : vector<16x16xf32>, vector<16x256xf32>, vector<16x256xf32> -> vector<16x256xf32>
    %18 = arith.addf %12, %17 : vector<16x256xf32>
    %c3 = arith.constant 3 : index
    %c0_21 = arith.constant 0 : index
    %c0_22 = arith.constant 0 : index
    %19 = vector.load %arg3[%c3, %c0_21, %c0_22] : memref<9x16x16xf32, #tpu.memory_space<vmem>>, vector<1x16x16xf32>
    %20 = vector.shape_cast %19 : vector<1x16x16xf32> to vector<16x16xf32>
    %c3_23 = arith.constant 3 : index
    %c0_24 = arith.constant 0 : index
    %c0_25 = arith.constant 0 : index
    %c0_26 = arith.constant 0 : index
    %21 = vector.load %arg2[%c3_23, %c0_24, %c0_25, %c0_26] : memref<9x1x16x256xf32, #tpu.memory_space<vmem>>, vector<1x1x16x256xf32>
    %22 = vector.shape_cast %21 : vector<1x1x16x256xf32> to vector<16x256xf32>
    %cst_27 = arith.constant dense<0.000000e+00> : vector<16x256xf32>
    %23 = tpu.matmul %20, %22, %cst_27 {dimension_numbers = #tpu.dot_dimension_numbers<[1], [0], [0], [1], [0, 0, 1, 1], [], []>} : vector<16x16xf32>, vector<16x256xf32>, vector<16x256xf32> -> vector<16x256xf32>
    %24 = arith.addf %18, %23 : vector<16x256xf32>
    %c4 = arith.constant 4 : index
    %c0_28 = arith.constant 0 : index
    %c0_29 = arith.constant 0 : index
    %25 = vector.load %arg3[%c4, %c0_28, %c0_29] : memref<9x16x16xf32, #tpu.memory_space<vmem>>, vector<1x16x16xf32>
    %26 = vector.shape_cast %25 : vector<1x16x16xf32> to vector<16x16xf32>
    %c4_30 = arith.constant 4 : index
    %c0_31 = arith.constant 0 : index
    %c0_32 = arith.constant 0 : index
    %c0_33 = arith.constant 0 : index
    %27 = vector.load %arg2[%c4_30, %c0_31, %c0_32, %c0_33] : memref<9x1x16x256xf32, #tpu.memory_space<vmem>>, vector<1x1x16x256xf32>
    %28 = vector.shape_cast %27 : vector<1x1x16x256xf32> to vector<16x256xf32>
    %cst_34 = arith.constant dense<0.000000e+00> : vector<16x256xf32>
    %29 = tpu.matmul %26, %28, %cst_34 {dimension_numbers = #tpu.dot_dimension_numbers<[1], [0], [0], [1], [0, 0, 1, 1], [], []>} : vector<16x16xf32>, vector<16x256xf32>, vector<16x256xf32> -> vector<16x256xf32>
    %30 = arith.addf %24, %29 : vector<16x256xf32>
    %c5 = arith.constant 5 : index
    %c0_35 = arith.constant 0 : index
    %c0_36 = arith.constant 0 : index
    %31 = vector.load %arg3[%c5, %c0_35, %c0_36] : memref<9x16x16xf32, #tpu.memory_space<vmem>>, vector<1x16x16xf32>
    %32 = vector.shape_cast %31 : vector<1x16x16xf32> to vector<16x16xf32>
    %c5_37 = arith.constant 5 : index
    %c0_38 = arith.constant 0 : index
    %c0_39 = arith.constant 0 : index
    %c0_40 = arith.constant 0 : index
    %33 = vector.load %arg2[%c5_37, %c0_38, %c0_39, %c0_40] : memref<9x1x16x256xf32, #tpu.memory_space<vmem>>, vector<1x1x16x256xf32>
    %34 = vector.shape_cast %33 : vector<1x1x16x256xf32> to vector<16x256xf32>
    %cst_41 = arith.constant dense<0.000000e+00> : vector<16x256xf32>
    %35 = tpu.matmul %32, %34, %cst_41 {dimension_numbers = #tpu.dot_dimension_numbers<[1], [0], [0], [1], [0, 0, 1, 1], [], []>} : vector<16x16xf32>, vector<16x256xf32>, vector<16x256xf32> -> vector<16x256xf32>
    %36 = arith.addf %30, %35 : vector<16x256xf32>
    %c6 = arith.constant 6 : index
    %c0_42 = arith.constant 0 : index
    %c0_43 = arith.constant 0 : index
    %37 = vector.load %arg3[%c6, %c0_42, %c0_43] : memref<9x16x16xf32, #tpu.memory_space<vmem>>, vector<1x16x16xf32>
    %38 = vector.shape_cast %37 : vector<1x16x16xf32> to vector<16x16xf32>
    %c6_44 = arith.constant 6 : index
    %c0_45 = arith.constant 0 : index
    %c0_46 = arith.constant 0 : index
    %c0_47 = arith.constant 0 : index
    %39 = vector.load %arg2[%c6_44, %c0_45, %c0_46, %c0_47] : memref<9x1x16x256xf32, #tpu.memory_space<vmem>>, vector<1x1x16x256xf32>
    %40 = vector.shape_cast %39 : vector<1x1x16x256xf32> to vector<16x256xf32>
    %cst_48 = arith.constant dense<0.000000e+00> : vector<16x256xf32>
    %41 = tpu.matmul %38, %40, %cst_48 {dimension_numbers = #tpu.dot_dimension_numbers<[1], [0], [0], [1], [0, 0, 1, 1], [], []>} : vector<16x16xf32>, vector<16x256xf32>, vector<16x256xf32> -> vector<16x256xf32>
    %42 = arith.addf %36, %41 : vector<16x256xf32>
    %c7 = arith.constant 7 : index
    %c0_49 = arith.constant 0 : index
    %c0_50 = arith.constant 0 : index
    %43 = vector.load %arg3[%c7, %c0_49, %c0_50] : memref<9x16x16xf32, #tpu.memory_space<vmem>>, vector<1x16x16xf32>
    %44 = vector.shape_cast %43 : vector<1x16x16xf32> to vector<16x16xf32>
    %c7_51 = arith.constant 7 : index
    %c0_52 = arith.constant 0 : index
    %c0_53 = arith.constant 0 : index
    %c0_54 = arith.constant 0 : index
    %45 = vector.load %arg2[%c7_51, %c0_52, %c0_53, %c0_54] : memref<9x1x16x256xf32, #tpu.memory_space<vmem>>, vector<1x1x16x256xf32>
    %46 = vector.shape_cast %45 : vector<1x1x16x256xf32> to vector<16x256xf32>
    %cst_55 = arith.constant dense<0.000000e+00> : vector<16x256xf32>
    %47 = tpu.matmul %44, %46, %cst_55 {dimension_numbers = #tpu.dot_dimension_numbers<[1], [0], [0], [1], [0, 0, 1, 1], [], []>} : vector<16x16xf32>, vector<16x256xf32>, vector<16x256xf32> -> vector<16x256xf32>
    %48 = arith.addf %42, %47 : vector<16x256xf32>
    %c8 = arith.constant 8 : index
    %c0_56 = arith.constant 0 : index
    %c0_57 = arith.constant 0 : index
    %49 = vector.load %arg3[%c8, %c0_56, %c0_57] : memref<9x16x16xf32, #tpu.memory_space<vmem>>, vector<1x16x16xf32>
    %50 = vector.shape_cast %49 : vector<1x16x16xf32> to vector<16x16xf32>
    %c8_58 = arith.constant 8 : index
    %c0_59 = arith.constant 0 : index
    %c0_60 = arith.constant 0 : index
    %c0_61 = arith.constant 0 : index
    %51 = vector.load %arg2[%c8_58, %c0_59, %c0_60, %c0_61] : memref<9x1x16x256xf32, #tpu.memory_space<vmem>>, vector<1x1x16x256xf32>
    %52 = vector.shape_cast %51 : vector<1x1x16x256xf32> to vector<16x256xf32>
    %cst_62 = arith.constant dense<0.000000e+00> : vector<16x256xf32>
    %53 = tpu.matmul %50, %52, %cst_62 {dimension_numbers = #tpu.dot_dimension_numbers<[1], [0], [0], [1], [0, 0, 1, 1], [], []>} : vector<16x16xf32>, vector<16x256xf32>, vector<16x256xf32> -> vector<16x256xf32>
    %54 = arith.addf %48, %53 : vector<16x256xf32>
    %c0_63 = arith.constant 0 : index
    %c0_64 = arith.constant 0 : index
    %55 = vector.load %arg4[%c0_63, %c0_64] : memref<16x1xf32, #tpu.memory_space<vmem>>, vector<16x1xf32>
    %56 = vector.broadcast %55 : vector<16x1xf32> to vector<16x256xf32>
    %57 = arith.addf %54, %56 : vector<16x256xf32>
    %cst_65 = arith.constant 3.000000e+00 : f32
    %58 = vector.broadcast %cst_65 : f32 to vector<16x256xf32>
    %59 = arith.addf %57, %58 : vector<16x256xf32>
    %cst_66 = arith.constant 0.000000e+00 : f32
    %cst_67 = arith.constant 6.000000e+00 : f32
    %60 = vector.broadcast %cst_66 : f32 to vector<16x256xf32>
    %61 = arith.maximumf %60, %59 : vector<16x256xf32>
    %62 = vector.broadcast %cst_67 : f32 to vector<16x256xf32>
    %63 = arith.minimumf %62, %61 : vector<16x256xf32>
    %64 = arith.mulf %57, %63 : vector<16x256xf32>
    %cst_68 = arith.constant 0.166666672 : f32
    %65 = vector.broadcast %cst_68 : f32 to vector<16x256xf32>
    %66 = arith.mulf %64, %65 : vector<16x256xf32>
    %c0_69 = arith.constant 0 : index
    %c0_70 = arith.constant 0 : index
    %c0_71 = arith.constant 0 : index
    %67 = vector.load %arg5[%c0_69, %c0_70, %c0_71] : memref<1x16x256xf32, #tpu.memory_space<vmem>>, vector<1x16x256xf32>
    %68 = vector.shape_cast %67 : vector<1x16x256xf32> to vector<16x256xf32>
    %69 = vector.shape_cast %66 : vector<16x256xf32> to vector<1x16x256xf32>
    tpu.vector_store %arg5[%c0_69, %c0_70, %c0_71], %69 {strides = array<i32>} : memref<1x16x256xf32, #tpu.memory_space<vmem>>, vector<1x16x256xf32>,
    return
  }
  func.func @transform_0(%arg0: i32, %arg1: i32) -> (i32, i32, i32, i32) {
    %c0_i32 = arith.constant 0 : i32
    %c0_i32_0 = arith.constant 0 : i32
    %c0_i32_1 = arith.constant 0 : i32
    return %c0_i32, %arg0, %c0_i32_0, %arg1 : i32, i32, i32, i32
  }
  func.func @transform_1(%arg0: i32, %arg1: i32) -> (i32, i32, i32) {
    %c0_i32 = arith.constant 0 : i32
    %c0_i32_0 = arith.constant 0 : i32
    %c0_i32_1 = arith.constant 0 : i32
    %c0_i32_2 = arith.constant 0 : i32
    return %c0_i32, %c0_i32_0, %c0_i32_1 : i32, i32, i32
  }
  func.func @transform_2(%arg0: i32, %arg1: i32) -> (i32, i32) {
    %c0_i32 = arith.constant 0 : i32
    %c0_i32_0 = arith.constant 0 : i32
    %c0_i32_1 = arith.constant 0 : i32
    return %c0_i32, %c0_i32_0 : i32, i32
  }
  func.func @transform_3(%arg0: i32, %arg1: i32) -> (i32, i32, i32) {
    %c0_i32 = arith.constant 0 : i32
    %c0_i32_0 = arith.constant 0 : i32
    return %arg0, %c0_i32, %arg1 : i32, i32, i32
  }
}

module attributes {stable_mosaic.version = 11 : i64} {
  func.func @_conv3x3_kernel(%arg0: i32, %arg1: i32, %arg2: memref<9x1x16x256xf32, #tpu.memory_space<vmem>>, %arg3: memref<9x16x16xf32, #tpu.memory_space<vmem>>, %arg4: memref<16x1xf32, #tpu.memory_space<vmem>>, %arg5: memref<1x16x256xf32, #tpu.memory_space<vmem>>, %arg6: memref<1x16x256xf32, #tpu.memory_space<vmem>>) attributes {dimension_semantics = [#tpu.dimension_semantics<parallel>, #tpu.dimension_semantics<parallel>], iteration_bounds = array<i64: 2, 1>, scalar_prefetch = 0 : i64, scratch_operands = 0 : i64, tpu.core_type = #tpu.core_type<tc>, window_params = [{transform_indices = @transform_0, window_bounds = array<i64: 9, 1, 16, 256>}, {pipeline_mode = #tpu.pipeline_mode<synchronous>, transform_indices = @transform_1, window_bounds = array<i64: 9, 16, 16>}, {pipeline_mode = #tpu.pipeline_mode<synchronous>, transform_indices = @transform_2, window_bounds = array<i64: 16, 1>}, {transform_indices = @transform_3, window_bounds = array<i64: 1, 16, 256>}, {transform_indices = @transform_4, window_bounds = array<i64: 1, 16, 256>}]} {
    %cst = arith.constant 0.000000e+00 : f32
    %0 = vector.broadcast %cst : f32 to vector<16x256xf32>
    %c0 = arith.constant 0 : index
    %c0_0 = arith.constant 0 : index
    %c0_1 = arith.constant 0 : index
    %1 = vector.load %arg3[%c0, %c0_0, %c0_1] : memref<9x16x16xf32, #tpu.memory_space<vmem>>, vector<1x16x16xf32>
    %2 = vector.shape_cast %1 : vector<1x16x16xf32> to vector<16x16xf32>
    %c0_2 = arith.constant 0 : index
    %c0_3 = arith.constant 0 : index
    %c0_4 = arith.constant 0 : index
    %c0_5 = arith.constant 0 : index
    %3 = vector.load %arg2[%c0_2, %c0_3, %c0_4, %c0_5] : memref<9x1x16x256xf32, #tpu.memory_space<vmem>>, vector<1x1x16x256xf32>
    %4 = vector.shape_cast %3 : vector<1x1x16x256xf32> to vector<16x256xf32>
    %cst_6 = arith.constant dense<0.000000e+00> : vector<16x256xf32>
    %5 = tpu.matmul %2, %4, %cst_6 {dimension_numbers = #tpu.dot_dimension_numbers<[1], [0], [0], [1], [0, 0, 1, 1], [], []>} : vector<16x16xf32>, vector<16x256xf32>, vector<16x256xf32> -> vector<16x256xf32>
    %6 = arith.addf %0, %5 : vector<16x256xf32>
    %c1 = arith.constant 1 : index
    %c0_7 = arith.constant 0 : index
    %c0_8 = arith.constant 0 : index
    %7 = vector.load %arg3[%c1, %c0_7, %c0_8] : memref<9x16x16xf32, #tpu.memory_space<vmem>>, vector<1x16x16xf32>
    %8 = vector.shape_cast %7 : vector<1x16x16xf32> to vector<16x16xf32>
    %c1_9 = arith.constant 1 : index
    %c0_10 = arith.constant 0 : index
    %c0_11 = arith.constant 0 : index
    %c0_12 = arith.constant 0 : index
    %9 = vector.load %arg2[%c1_9, %c0_10, %c0_11, %c0_12] : memref<9x1x16x256xf32, #tpu.memory_space<vmem>>, vector<1x1x16x256xf32>
    %10 = vector.shape_cast %9 : vector<1x1x16x256xf32> to vector<16x256xf32>
    %cst_13 = arith.constant dense<0.000000e+00> : vector<16x256xf32>
    %11 = tpu.matmul %8, %10, %cst_13 {dimension_numbers = #tpu.dot_dimension_numbers<[1], [0], [0], [1], [0, 0, 1, 1], [], []>} : vector<16x16xf32>, vector<16x256xf32>, vector<16x256xf32> -> vector<16x256xf32>
    %12 = arith.addf %6, %11 : vector<16x256xf32>
    %c2 = arith.constant 2 : index
    %c0_14 = arith.constant 0 : index
    %c0_15 = arith.constant 0 : index
    %13 = vector.load %arg3[%c2, %c0_14, %c0_15] : memref<9x16x16xf32, #tpu.memory_space<vmem>>, vector<1x16x16xf32>
    %14 = vector.shape_cast %13 : vector<1x16x16xf32> to vector<16x16xf32>
    %c2_16 = arith.constant 2 : index
    %c0_17 = arith.constant 0 : index
    %c0_18 = arith.constant 0 : index
    %c0_19 = arith.constant 0 : index
    %15 = vector.load %arg2[%c2_16, %c0_17, %c0_18, %c0_19] : memref<9x1x16x256xf32, #tpu.memory_space<vmem>>, vector<1x1x16x256xf32>
    %16 = vector.shape_cast %15 : vector<1x1x16x256xf32> to vector<16x256xf32>
    %cst_20 = arith.constant dense<0.000000e+00> : vector<16x256xf32>
    %17 = tpu.matmul %14, %16, %cst_20 {dimension_numbers = #tpu.dot_dimension_numbers<[1], [0], [0], [1], [0, 0, 1, 1], [], []>} : vector<16x16xf32>, vector<16x256xf32>, vector<16x256xf32> -> vector<16x256xf32>
    %18 = arith.addf %12, %17 : vector<16x256xf32>
    %c3 = arith.constant 3 : index
    %c0_21 = arith.constant 0 : index
    %c0_22 = arith.constant 0 : index
    %19 = vector.load %arg3[%c3, %c0_21, %c0_22] : memref<9x16x16xf32, #tpu.memory_space<vmem>>, vector<1x16x16xf32>
    %20 = vector.shape_cast %19 : vector<1x16x16xf32> to vector<16x16xf32>
    %c3_23 = arith.constant 3 : index
    %c0_24 = arith.constant 0 : index
    %c0_25 = arith.constant 0 : index
    %c0_26 = arith.constant 0 : index
    %21 = vector.load %arg2[%c3_23, %c0_24, %c0_25, %c0_26] : memref<9x1x16x256xf32, #tpu.memory_space<vmem>>, vector<1x1x16x256xf32>
    %22 = vector.shape_cast %21 : vector<1x1x16x256xf32> to vector<16x256xf32>
    %cst_27 = arith.constant dense<0.000000e+00> : vector<16x256xf32>
    %23 = tpu.matmul %20, %22, %cst_27 {dimension_numbers = #tpu.dot_dimension_numbers<[1], [0], [0], [1], [0, 0, 1, 1], [], []>} : vector<16x16xf32>, vector<16x256xf32>, vector<16x256xf32> -> vector<16x256xf32>
    %24 = arith.addf %18, %23 : vector<16x256xf32>
    %c4 = arith.constant 4 : index
    %c0_28 = arith.constant 0 : index
    %c0_29 = arith.constant 0 : index
    %25 = vector.load %arg3[%c4, %c0_28, %c0_29] : memref<9x16x16xf32, #tpu.memory_space<vmem>>, vector<1x16x16xf32>
    %26 = vector.shape_cast %25 : vector<1x16x16xf32> to vector<16x16xf32>
    %c4_30 = arith.constant 4 : index
    %c0_31 = arith.constant 0 : index
    %c0_32 = arith.constant 0 : index
    %c0_33 = arith.constant 0 : index
    %27 = vector.load %arg2[%c4_30, %c0_31, %c0_32, %c0_33] : memref<9x1x16x256xf32, #tpu.memory_space<vmem>>, vector<1x1x16x256xf32>
    %28 = vector.shape_cast %27 : vector<1x1x16x256xf32> to vector<16x256xf32>
    %cst_34 = arith.constant dense<0.000000e+00> : vector<16x256xf32>
    %29 = tpu.matmul %26, %28, %cst_34 {dimension_numbers = #tpu.dot_dimension_numbers<[1], [0], [0], [1], [0, 0, 1, 1], [], []>} : vector<16x16xf32>, vector<16x256xf32>, vector<16x256xf32> -> vector<16x256xf32>
    %30 = arith.addf %24, %29 : vector<16x256xf32>
    %c5 = arith.constant 5 : index
    %c0_35 = arith.constant 0 : index
    %c0_36 = arith.constant 0 : index
    %31 = vector.load %arg3[%c5, %c0_35, %c0_36] : memref<9x16x16xf32, #tpu.memory_space<vmem>>, vector<1x16x16xf32>
    %32 = vector.shape_cast %31 : vector<1x16x16xf32> to vector<16x16xf32>
    %c5_37 = arith.constant 5 : index
    %c0_38 = arith.constant 0 : index
    %c0_39 = arith.constant 0 : index
    %c0_40 = arith.constant 0 : index
    %33 = vector.load %arg2[%c5_37, %c0_38, %c0_39, %c0_40] : memref<9x1x16x256xf32, #tpu.memory_space<vmem>>, vector<1x1x16x256xf32>
    %34 = vector.shape_cast %33 : vector<1x1x16x256xf32> to vector<16x256xf32>
    %cst_41 = arith.constant dense<0.000000e+00> : vector<16x256xf32>
    %35 = tpu.matmul %32, %34, %cst_41 {dimension_numbers = #tpu.dot_dimension_numbers<[1], [0], [0], [1], [0, 0, 1, 1], [], []>} : vector<16x16xf32>, vector<16x256xf32>, vector<16x256xf32> -> vector<16x256xf32>
    %36 = arith.addf %30, %35 : vector<16x256xf32>
    %c6 = arith.constant 6 : index
    %c0_42 = arith.constant 0 : index
    %c0_43 = arith.constant 0 : index
    %37 = vector.load %arg3[%c6, %c0_42, %c0_43] : memref<9x16x16xf32, #tpu.memory_space<vmem>>, vector<1x16x16xf32>
    %38 = vector.shape_cast %37 : vector<1x16x16xf32> to vector<16x16xf32>
    %c6_44 = arith.constant 6 : index
    %c0_45 = arith.constant 0 : index
    %c0_46 = arith.constant 0 : index
    %c0_47 = arith.constant 0 : index
    %39 = vector.load %arg2[%c6_44, %c0_45, %c0_46, %c0_47] : memref<9x1x16x256xf32, #tpu.memory_space<vmem>>, vector<1x1x16x256xf32>
    %40 = vector.shape_cast %39 : vector<1x1x16x256xf32> to vector<16x256xf32>
    %cst_48 = arith.constant dense<0.000000e+00> : vector<16x256xf32>
    %41 = tpu.matmul %38, %40, %cst_48 {dimension_numbers = #tpu.dot_dimension_numbers<[1], [0], [0], [1], [0, 0, 1, 1], [], []>} : vector<16x16xf32>, vector<16x256xf32>, vector<16x256xf32> -> vector<16x256xf32>
    %42 = arith.addf %36, %41 : vector<16x256xf32>
    %c7 = arith.constant 7 : index
    %c0_49 = arith.constant 0 : index
    %c0_50 = arith.constant 0 : index
    %43 = vector.load %arg3[%c7, %c0_49, %c0_50] : memref<9x16x16xf32, #tpu.memory_space<vmem>>, vector<1x16x16xf32>
    %44 = vector.shape_cast %43 : vector<1x16x16xf32> to vector<16x16xf32>
    %c7_51 = arith.constant 7 : index
    %c0_52 = arith.constant 0 : index
    %c0_53 = arith.constant 0 : index
    %c0_54 = arith.constant 0 : index
    %45 = vector.load %arg2[%c7_51, %c0_52, %c0_53, %c0_54] : memref<9x1x16x256xf32, #tpu.memory_space<vmem>>, vector<1x1x16x256xf32>
    %46 = vector.shape_cast %45 : vector<1x1x16x256xf32> to vector<16x256xf32>
    %cst_55 = arith.constant dense<0.000000e+00> : vector<16x256xf32>
    %47 = tpu.matmul %44, %46, %cst_55 {dimension_numbers = #tpu.dot_dimension_numbers<[1], [0], [0], [1], [0, 0, 1, 1], [], []>} : vector<16x16xf32>, vector<16x256xf32>, vector<16x256xf32> -> vector<16x256xf32>
    %48 = arith.addf %42, %47 : vector<16x256xf32>
    %c8 = arith.constant 8 : index
    %c0_56 = arith.constant 0 : index
    %c0_57 = arith.constant 0 : index
    %49 = vector.load %arg3[%c8, %c0_56, %c0_57] : memref<9x16x16xf32, #tpu.memory_space<vmem>>, vector<1x16x16xf32>
    %50 = vector.shape_cast %49 : vector<1x16x16xf32> to vector<16x16xf32>
    %c8_58 = arith.constant 8 : index
    %c0_59 = arith.constant 0 : index
    %c0_60 = arith.constant 0 : index
    %c0_61 = arith.constant 0 : index
    %51 = vector.load %arg2[%c8_58, %c0_59, %c0_60, %c0_61] : memref<9x1x16x256xf32, #tpu.memory_space<vmem>>, vector<1x1x16x256xf32>
    %52 = vector.shape_cast %51 : vector<1x1x16x256xf32> to vector<16x256xf32>
    %cst_62 = arith.constant dense<0.000000e+00> : vector<16x256xf32>
    %53 = tpu.matmul %50, %52, %cst_62 {dimension_numbers = #tpu.dot_dimension_numbers<[1], [0], [0], [1], [0, 0, 1, 1], [], []>} : vector<16x16xf32>, vector<16x256xf32>, vector<16x256xf32> -> vector<16x256xf32>
    %54 = arith.addf %48, %53 : vector<16x256xf32>
    %c0_63 = arith.constant 0 : index
    %c0_64 = arith.constant 0 : index
    %55 = vector.load %arg4[%c0_63, %c0_64] : memref<16x1xf32, #tpu.memory_space<vmem>>, vector<16x1xf32>
    %56 = vector.broadcast %55 : vector<16x1xf32> to vector<16x256xf32>
    %57 = arith.addf %54, %56 : vector<16x256xf32>
    %cst_65 = arith.constant 3.000000e+00 : f32
    %58 = vector.broadcast %cst_65 : f32 to vector<16x256xf32>
    %59 = arith.addf %57, %58 : vector<16x256xf32>
    %cst_66 = arith.constant 0.000000e+00 : f32
    %cst_67 = arith.constant 6.000000e+00 : f32
    %60 = vector.broadcast %cst_66 : f32 to vector<16x256xf32>
    %61 = arith.maximumf %60, %59 : vector<16x256xf32>
    %62 = vector.broadcast %cst_67 : f32 to vector<16x256xf32>
    %63 = arith.minimumf %62, %61 : vector<16x256xf32>
    %64 = arith.mulf %57, %63 : vector<16x256xf32>
    %cst_68 = arith.constant 0.166666672 : f32
    %65 = vector.broadcast %cst_68 : f32 to vector<16x256xf32>
    %66 = arith.mulf %64, %65 : vector<16x256xf32>
    %c0_69 = arith.constant 0 : index
    %c0_70 = arith.constant 0 : index
    %c0_71 = arith.constant 0 : index
    %67 = vector.load %arg5[%c0_69, %c0_70, %c0_71] : memref<1x16x256xf32, #tpu.memory_space<vmem>>, vector<1x16x256xf32>
    %68 = vector.shape_cast %67 : vector<1x16x256xf32> to vector<16x256xf32>
    %69 = arith.addf %66, %68 : vector<16x256xf32>
    %c0_72 = arith.constant 0 : index
    %c0_73 = arith.constant 0 : index
    %c0_74 = arith.constant 0 : index
    %70 = vector.load %arg6[%c0_72, %c0_73, %c0_74] : memref<1x16x256xf32, #tpu.memory_space<vmem>>, vector<1x16x256xf32>
    %71 = vector.shape_cast %70 : vector<1x16x256xf32> to vector<16x256xf32>
    %72 = vector.shape_cast %69 : vector<16x256xf32> to vector<1x16x256xf32>
    tpu.vector_store %arg6[%c0_72, %c0_73, %c0_74], %72 {strides = array<i32>} : memref<1x16x256xf32, #tpu.memory_space<vmem>>, vector<1x16x256xf32>,
    return
  }
  func.func @transform_0(%arg0: i32, %arg1: i32) -> (i32, i32, i32, i32) {
    %c0_i32 = arith.constant 0 : i32
    %c0_i32_0 = arith.constant 0 : i32
    %c0_i32_1 = arith.constant 0 : i32
    return %c0_i32, %arg0, %c0_i32_0, %arg1 : i32, i32, i32, i32
  }
  func.func @transform_1(%arg0: i32, %arg1: i32) -> (i32, i32, i32) {
    %c0_i32 = arith.constant 0 : i32
    %c0_i32_0 = arith.constant 0 : i32
    %c0_i32_1 = arith.constant 0 : i32
    %c0_i32_2 = arith.constant 0 : i32
    return %c0_i32, %c0_i32_0, %c0_i32_1 : i32, i32, i32
  }
  func.func @transform_2(%arg0: i32, %arg1: i32) -> (i32, i32) {
    %c0_i32 = arith.constant 0 : i32
    %c0_i32_0 = arith.constant 0 : i32
    %c0_i32_1 = arith.constant 0 : i32
    return %c0_i32, %c0_i32_0 : i32, i32
  }
  func.func @transform_3(%arg0: i32, %arg1: i32) -> (i32, i32, i32) {
    %c0_i32 = arith.constant 0 : i32
    %c0_i32_0 = arith.constant 0 : i32
    return %arg0, %c0_i32, %arg1 : i32, i32, i32
  }
  func.func @transform_4(%arg0: i32, %arg1: i32) -> (i32, i32, i32) {
    %c0_i32 = arith.constant 0 : i32
    %c0_i32_0 = arith.constant 0 : i32
    return %arg0, %c0_i32, %arg1 : i32, i32, i32
  }
}

</mosaic_0001>

<llo_original>
// kernel: c1_forward_pallas.3
$region0: #{c1_forward_pallas.3}
  #allocation0 [shape = 'u32[]', space=smem, size = 0x4, offset = 0x4, fixed_abs, tag = 'smem constant byte address 0x4 - core index']
  #allocation1 [shape = 'u32[144,128]{1,0:T(1,128)}', space=vmem, size = 0x12000, scoped, tag = 'internal scratch']
  %s0 = inlined_call_operand.vmem [shape: f32[2,8,256], index: 0, kind: input, shape index: {}]
  %s1 = inlined_call_operand.vmem [shape: f32[16,8], index: 1, kind: input, shape index: {}]
  %s2 = inlined_call_operand.vmem [shape: f32[16,1], index: 2, kind: input, shape index: {}]
  %s3 = inlined_call_operand.vmem [shape: f32[2,16,256], index: 3, kind: output, shape index: {}]
  %s4 = sld [smem:[#allocation0]]
  $region45: #{c1_forward_pallas.3} parent=0
    _
  %s6 = ssub.s32 1, %s4
  %s7 = scalar_select 0, %s6, %s4
  loop: start=0, step=1, limit=4
  $region2: #{c1_forward_pallas.3} parent=0 // loop_pre_header
    _
  $region3: #{c1_forward_pallas.3} parent=0 // loop_header
    %s9 = sphi 0, %s13
    %p10 = scmp.ge.s32.totalorder %s9, 4
    %s16 = sphi 0, %s28
    %s17 = sphi 0, %s24
    %s18 = sphi 0, %s16
    %s19 = sphi 0, %s17
    %s20 = sphi 0, %s18
    %s21 = sphi 0, %s19
    %s33 = sphi 0, %s35
    %s36 = sphi 0, %s33
    %s37 = sphi 0, %s36
    %s53 = sphi 0, %s37
    %s57 = sphi 0, %s57
    %s59 = sphi 0, %s57
    %s60 = sphi 0, %s59
    %s74 = sphi 0, %s60
    %s78 = sphi 0, %s78
    %s80 = sphi 0, %s78
    %s81 = sphi 0, %s80
    %s95 = sphi 0, %s81
    %s103 = sphi 0, %s105
    %s106 = sphi 0, %s103
    %s107 = sphi 0, %s106
    %s123 = sphi 0, %s107
  $region4: #{c1_forward_pallas.3} parent=0 // loop_header_branch
    %12 = sbr.rel (%p10) target = $region8
  $region5: #{c1_forward_pallas.3} parent=0 // loop_body
    %s14 = ssub.s32 %s9, 1
    %s15 = ssub.s32 %s9, 2
    %s22 = sadd.s32 1, %s17
    %p23 = scmp.ge.s32.totalorder %s22, 1
    %s24 = scalar_select %p23, 0, %s22
    %s25 = sadd.s32 1, %s16
    %s26 = scalar_select %p23, %s25, %s16
    %p27 = scmp.ge.s32.totalorder %s26, 2
    %s28 = scalar_select %p27, 0, %s26
    %s29 = ssub.s32 %s16, %s28
    %s30 = ssub.s32 %s17, %s24
    %s31 = sor.u32 %s29, %s30
    %p32 = scmp.eq.s32.totalorder %s31, 0
    %s34 = sadd.s32 %s33, 1
    %s35 = scalar_select %p32, %s33, %s34
    %p38 = pneg %p32
    %p39 = scmp.eq.s32.totalorder %s9, 1
    %p40 = por %p38, %p39
    %p41 = scmp.ne.s32.totalorder %s33, %s36
    %p42 = scmp.eq.s32.totalorder %s9, 0
    %p43 = por %p41, %p42
    %p44 = scmp.ne.s32.totalorder %s33, %s36
    %p45 = scmp.eq.s32.totalorder %s14, 1
    %p46 = por %p44, %p45
    %p47 = scmp.ne.s32.totalorder %s36, %s37
    %p48 = scmp.eq.s32.totalorder %s14, 0
    %p49 = por %p47, %p48
    %p50 = scmp.ne.s32.totalorder %s36, %s37
    %p51 = scmp.eq.s32.totalorder %s15, 1
    %p52 = por %p50, %p51
    %p54 = scmp.ne.s32.totalorder %s37, %s53
    %p55 = scmp.eq.s32.totalorder %s15, 0
    %p56 = por %p54, %p55
    %s58 = sadd.s32 %s57, 1
    %p61 = scmp.eq.s32.totalorder %s9, 1
    %p62 = scmp.ne.s32.totalorder %s57, %s59
    %p63 = scmp.eq.s32.totalorder %s9, 0
    %p64 = por %p62, %p63
    %p65 = scmp.ne.s32.totalorder %s57, %s59
    %p66 = scmp.eq.s32.totalorder %s14, 1
    %p67 = por %p65, %p66
    %p68 = scmp.ne.s32.totalorder %s59, %s60
    %p69 = scmp.eq.s32.totalorder %s14, 0
    %p70 = por %p68, %p69
    %p71 = scmp.ne.s32.totalorder %s59, %s60
    %p72 = scmp.eq.s32.totalorder %s15, 1
    %p73 = por %p71, %p72
    %p75 = scmp.ne.s32.totalorder %s60, %s74
    %p76 = scmp.eq.s32.totalorder %s15, 0
    %p77 = por %p75, %p76
    %s79 = sadd.s32 %s78, 1
    %p82 = scmp.eq.s32.totalorder %s9, 1
    %p83 = scmp.ne.s32.totalorder %s78, %s80
    %p84 = scmp.eq.s32.totalorder %s9, 0
    %p85 = por %p83, %p84
    %p86 = scmp.ne.s32.totalorder %s78, %s80
    %p87 = scmp.eq.s32.totalorder %s14, 1
    %p88 = por %p86, %p87
    %p89 = scmp.ne.s32.totalorder %s80, %s81
    %p90 = scmp.eq.s32.totalorder %s14, 0
    %p91 = por %p89, %p90
    %p92 = scmp.ne.s32.totalorder %s80, %s81
    %p93 = scmp.eq.s32.totalorder %s15, 1
    %p94 = por %p92, %p93
    %p96 = scmp.ne.s32.totalorder %s81, %s95
    %p97 = scmp.eq.s32.totalorder %s15, 0
    %p98 = por %p96, %p97
    %s99 = ssub.s32 %s16, %s28
    %s100 = ssub.s32 %s17, %s24
    %s101 = sor.u32 %s99, %s100
    %p102 = scmp.eq.s32.totalorder %s101, 0
    %s104 = sadd.s32 %s103, 1
    %s105 = scalar_select %p102, %s103, %s104
    %p108 = pneg %p102
    %p109 = scmp.eq.s32.totalorder %s9, 1
    %p110 = por %p108, %p109
    %p111 = scmp.ne.s32.totalorder %s103, %s106
    %p112 = scmp.eq.s32.totalorder %s9, 0
    %p113 = por %p111, %p112
    %p114 = scmp.ne.s32.totalorder %s103, %s106
    %p115 = scmp.eq.s32.totalorder %s14, 1
    %p116 = por %p114, %p115
    %p117 = scmp.ne.s32.totalorder %s106, %s107
    %p118 = scmp.eq.s32.totalorder %s14, 0
    %p119 = por %p117, %p118
    %p120 = scmp.ne.s32.totalorder %s106, %s107
    %p121 = scmp.eq.s32.totalorder %s15, 1
    %p122 = por %p120, %p121
    %p124 = scmp.ne.s32.totalorder %s107, %s123
    %p125 = scmp.eq.s32.totalorder %s15, 0
    %p126 = por %p124, %p125
    %p127 = scmp.le.s32.totalorder 1, %s9
    %p128 = scmp.lt.s32.totalorder %s9, 3
    %p129 = pnand %p127, %p128
    %p130 = pneg %p129
    // Predicated region
    $region9: #{c1_forward_pallas.3} parent=5 // pred_check
      _
    $region10: #{c1_forward_pallas.3} parent=5 // pred_check_branch
      %132 = sbr.rel (%p129) target = $region12
    $region11: #{c1_forward_pallas.3} parent=5 // pred_region
      %s133 = ssub.s32 %s9, 1
      // Predicated region
      $region13: #{c1_forward_pallas.3} parent=11 // pred_check
        %p134 = pneg %p70
      $region14: #{c1_forward_pallas.3} parent=11 // pred_check_branch
        %136 = sbr.rel (%p134) target = $region16
      $region15: #{c1_forward_pallas.3} parent=11 // pred_region
        _
      $region16: #{c1_forward_pallas.3} parent=11 // pred_fallthru
        _
      // Predicated region
      $region17: #{c1_forward_pallas.3} parent=11 // pred_check
        %p137 = pneg %p91
      $region18: #{c1_forward_pallas.3} parent=11 // pred_check_branch
        %139 = sbr.rel (%p137) target = $region20
      $region19: #{c1_forward_pallas.3} parent=11 // pred_region
        _
      $region20: #{c1_forward_pallas.3} parent=11 // pred_fallthru
        _
    $region12: #{c1_forward_pallas.3} parent=5 // pred_fallthru
      _
    %p140 = scmp.lt.s32.totalorder %s9, 2
    // Predicated region
    $region21: #{c1_forward_pallas.3} parent=5 // pred_check
      %p141 = pneg %p140
    $region22: #{c1_forward_pallas.3} parent=5 // pred_check_branch
      %143 = sbr.rel (%p141) target = $region24
    $region23: #{c1_forward_pallas.3} parent=5 // pred_region
      // Predicated region
      $region25: #{c1_forward_pallas.3} parent=23 // pred_check
        %p144 = pneg %p43
      $region26: #{c1_forward_pallas.3} parent=23 // pred_check_branch
        %146 = sbr.rel (%p144) target = $region28
      $region27: #{c1_forward_pallas.3} parent=23 // pred_region
        %s147 = smul.u32 2, %s17
        %p148 = scmp.lt.s32.totalorder %s16, 1
        %s149 = scalar_select %p148, %s16, 1
        %p150 = scmp.lt.s32.totalorder %s147, 1
        %s151 = scalar_select %p150, %s147, 1
        %s152 = smul.addr %s149, 2
        %s153 = sadd.s32 %s151, %s152
        %s154 = smul.addr %s153, 8
        %s155 = scalar_lea.vmem %s0, %s154
        %s156 = smul.u32 2, %s17
      $region28: #{c1_forward_pallas.3} parent=23 // pred_fallthru
        _
    $region24: #{c1_forward_pallas.3} parent=5 // pred_fallthru
      _
    %p157 = scmp.le.s32.totalorder 1, %s9
    %p158 = scmp.lt.s32.totalorder %s9, 3
    %p159 = pnand %p157, %p158
    %p160 = pneg %p159
    // Predicated region
    $region29: #{c1_forward_pallas.3} parent=5 // pred_check
      _
    $region30: #{c1_forward_pallas.3} parent=5 // pred_check_branch
      %162 = sbr.rel (%p159) target = $region32
    $region31: #{c1_forward_pallas.3} parent=5 // pred_region
      %s163 = ssub.s32 %s9, 1
      %s164 = smul.u32 2, %s19
      %p165 = scmp.lt.s32.totalorder %s18, 1
      %s166 = scalar_select %p165, %s18, 1
      %p167 = scmp.lt.s32.totalorder %s164, 1
      %s168 = scalar_select %p167, %s164, 1
      %s169 = smul.addr %s166, 2
      %s170 = sadd.s32 %s168, %s169
      %s171 = smul.addr %s170, 8
      %s172 = scalar_lea.vmem %s0, %s171
      %p173 = pneg %p49
      %p174 = pneg %p46
      %p175 = pneg %p70
      %p176 = pneg %p67
      %p177 = pneg %p91
      %p178 = pneg %p88
      %p179 = pneg %p119
      %p180 = pneg %p116
      %s181 = smul.u32 2, %s19
      %p182 = scmp.lt.s32.totalorder %s18, 1
      %s183 = scalar_select %p182, %s18, 1
      %p184 = scmp.lt.s32.totalorder %s181, 1
      %s185 = scalar_select %p184, %s181, 1
      %s186 = smul.addr %s183, 4
      %s187 = sadd.s32 %s185, %s186
      %s188 = smul.addr %s187, 8
      %s189 = scalar_lea.vmem %s3, %s188
      %s190 = smul.u32 2, %s19
      %p191 = scmp.lt.s32.totalorder %s18, 1
      %s192 = scalar_select %p191, %s18, 1
      %p193 = scmp.lt.s32.totalorder %s190, 1
      %s194 = scalar_select %p193, %s190, 1
      %s195 = smul.addr %s192, 2
      %s196 = sadd.s32 %s194, %s195
      %s197 = smul.addr %s196, 8
      %s198 = scalar_lea.vmem %s0, %s197
      %s199 = smul.u32 2, %s19
      %s200 = smul.u32 2, %s19
      %p201 = scmp.lt.s32.totalorder %s18, 1
      %s202 = scalar_select %p201, %s18, 1
      %p203 = scmp.lt.s32.totalorder %s200, 1
      %s204 = scalar_select %p203, %s200, 1
      %s205 = smul.addr %s202, 4
      %s206 = sadd.s32 %s204, %s205
      %s207 = smul.addr %s206, 8
      %s208 = scalar_lea.vmem %s3, %s207
      %s209 = smul.u32 2, %s19
      %v210 = vld [vmem:[%s1] sm:$0xff]
      %v211 = vld [vmem:[%s1 + $0x8] sm:$0xff]
      %v212 = vld [vmem:[%s198] sm:$0xff]
      %v213 = vld [vmem:[%s198 + $0x8] sm:$0xff]
      %v214 = vld [vmem:[%s2] sm:$0xff]
      %v215 = vld [vmem:[%s2 + $0x8] sm:$0xff]
      %217 = vset.pattern.permute.xlu0 0
      %218 = vperm.xlu0 %217, %v214
      %v219 = vpop.permute.xlu0 %218
      %222 = vset.pattern.permute.xlu0 0
      %223 = vperm.xlu0 %222, %v215
      %v224 = vpop.permute.xlu0 %223
      %vm226 = vcmask 64512
      %v228 = vsel %vm226, %v210, 0
      %v231 = vsel %vm226, %v211, 0
      %233 = vmatprep.subr.mxu0 %v213
      %234 = vmatpush1.msra.mxu0 %v212
      %235 = vmatprep.subr.mxu0 0.0
      %236 = vmatpush1.msra.mxu0 0.0
      %237 = vmatprep.subr.mxu0 0.0
      %238 = vmatpush1.msra.mxu0 0.0
      %239 = vmatprep.subr.mxu0 0.0
      %240 = vmatpush1.msra.mxu0 0.0
      %241 = vmatprep.subr.mxu0 0.0
      %242 = vmatpush1.msra.mxu0 0.0
      %243 = vmatprep.subr.mxu0 0.0
      %244 = vmatpush1.msra.mxu0 0.0
      %245 = vmatprep.subr.mxu0 0.0
      %246 = vmatpush1.msra.mxu0 0.0
      %247 = vmatprep.subr.mxu0 0.0
      %248 = vmatpush1.msra.mxu0 0.0
      %249 = vmatprep.subr.mxu0 0.0
      %250 = vmatpush1.msra.mxu0 0.0
      %251 = vmatprep.subr.mxu0 0.0
      %252 = vmatpush1.msra.mxu0 0.0
      %253 = vmatprep.subr.mxu0 0.0
      %254 = vmatpush1.msra.mxu0 0.0
      %255 = vmatprep.subr.mxu0 0.0
      %256 = vmatpush1.msra.mxu0 0.0
      %257 = vmatprep.subr.mxu0 0.0
      %258 = vmatpush1.msra.mxu0 0.0
      %259 = vmatprep.subr.mxu0 0.0
      %260 = vmatpush1.msra.mxu0 0.0
      %261 = vmatprep.subr.mxu0 0.0
      %262 = vmatpush1.msra.mxu0 0.0
      %263 = vmatprep.subr.mxu0 0.0
      %264 = vmatpush1.msra.mxu0 0.0
      %265 = vmatprep.subr.mxu0 0.0
      %266 = vmatpush1.msra.mxu0 0.0
      %267 = vmatprep.subr.mxu0 0.0
      %268 = vmatpush1.msra.mxu0 0.0
      %269 = vmatprep.subr.mxu0 0.0
      %270 = vmatpush1.msra.mxu0 0.0
      %271 = vmatprep.subr.mxu0 0.0
      %272 = vmatpush1.msra.mxu0 0.0
      %273 = vmatprep.subr.mxu0 0.0
      %274 = vmatpush1.msra.mxu0 0.0
      %275 = vmatprep.subr.mxu0 0.0
      %276 = vmatpush1.msra.mxu0 0.0
      %277 = vmatprep.subr.mxu0 0.0
      %278 = vmatpush1.msra.mxu0 0.0
      %279 = vmatprep.subr.mxu0 0.0
      %280 = vmatpush1.msra.mxu0 0.0
      %281 = vmatprep.subr.mxu0 0.0
      %282 = vmatpush1.msra.mxu0 0.0
      %283 = vmatprep.subr.mxu0 0.0
      %284 = vmatpush1.msra.mxu0 0.0
      %285 = vmatprep.subr.mxu0 0.0
      %286 = vmatpush1.msra.mxu0 0.0
      %287 = vmatprep.subr.mxu0 0.0
      %288 = vmatpush1.msra.mxu0 0.0
      %289 = vmatprep.subr.mxu0 0.0
      %290 = vmatpush1.msra.mxu0 0.0
      %291 = vmatprep.subr.mxu0 0.0
      %292 = vmatpush1.msra.mxu0 0.0
      %293 = vmatprep.subr.mxu0 0.0
      %294 = vmatpush1.msra.mxu0 0.0
      %295 = vmatprep.subr.mxu0 0.0
      %296 = vmatpush1.msra.mxu0 0.0
      %297 = vmatprep.mubr.f32.mxu0 0.0
      %298 = vmatmul.mubr.f32.gmra.mrb[0].mxu0 %v228
      %v299 = vpop.f32.mrb[0].mxu0
      %v300 = vadd.f32 %v219, %v299
      %v301 = vpop.f32.mrb[0].mxu0
      %v302 = vadd.f32 %v219, %v301
      %303 = vmatprep.mubr.f32.mxu0 0.0
      %304 = vmatmul.mubr.f32.gmra.mrb[0].mxu0 %v231
      %v305 = vpop.f32.mrb[0].mxu0
      %v306 = vadd.f32 %v224, %v305
      %v307 = vpop.f32.mrb[0].mxu0
      %v308 = vadd.f32 %v224, %v307
      %309 = vdwg.mxu0
      %v310 = vadd.f32 %v300, 3.0
      %v311 = vadd.f32 %v302, 3.0
      %v312 = vadd.f32 %v306, 3.0
      %v313 = vadd.f32 %v308, 3.0
      %v314 = vmax.f32 %v310, 0.0
      %v315 = vmax.f32 %v311, 0.0
      %v316 = vmax.f32 %v312, 0.0
      %v317 = vmax.f32 %v313, 0.0
      %v318 = vmin.f32 %v314, 6.0
      %v319 = vmin.f32 %v315, 6.0
      %v320 = vmin.f32 %v316, 6.0
      %v321 = vmin.f32 %v317, 6.0
      %v322 = vmul.f32 %v300, %v318
      %v323 = vmul.f32 %v302, %v319
      %v324 = vmul.f32 %v306, %v320
      %v325 = vmul.f32 %v308, %v321
      %v326 = vmul.f32 %v322, 0.16666667
      %v327 = vmul.f32 %v323, 0.16666667
      %v328 = vmul.f32 %v324, 0.16666667
      %v329 = vmul.f32 %v325, 0.16666667
      %330 = vst [vmem:[%s208] sm:$0xff] %v326
      %331 = vst [vmem:[%s208 + $0x8] sm:$0xff] %v327
      %332 = vst [vmem:[%s208 + $0x10] sm:$0xff] %v328
      %333 = vst [vmem:[%s208 + $0x18] sm:$0xff] %v329
      %s334 = smul.u32 2, %s19
      %p335 = scmp.lt.s32.totalorder %s18, 1
      %s336 = scalar_select %p335, %s18, 1
      %p337 = scmp.lt.s32.totalorder %s334, 1
      %s338 = scalar_select %p337, %s334, 1
      %s339 = smul.addr %s336, 4
      %s340 = sadd.s32 %s338, %s339
      %s341 = smul.addr %s340, 8
      %s342 = scalar_lea.vmem %s3, %s341
      // Predicated region
      $region33: #{c1_forward_pallas.3} parent=31 // pred_check
        %p343 = pneg %p116
      $region34: #{c1_forward_pallas.3} parent=31 // pred_check_branch
        %345 = sbr.rel (%p343) target = $region36
      $region35: #{c1_forward_pallas.3} parent=31 // pred_region
        %s346 = smul.u32 2, %s19
      $region36: #{c1_forward_pallas.3} parent=31 // pred_fallthru
        _
    $region32: #{c1_forward_pallas.3} parent=5 // pred_fallthru
      _
    %p347 = scmp.le.s32.totalorder 2, %s9
    // Predicated region
    $region37: #{c1_forward_pallas.3} parent=5 // pred_check
      %p348 = pneg %p347
    $region38: #{c1_forward_pallas.3} parent=5 // pred_check_branch
      %350 = sbr.rel (%p348) target = $region40
    $region39: #{c1_forward_pallas.3} parent=5 // pred_region
      %s351 = ssub.s32 %s9, 2
      // Predicated region
      $region41: #{c1_forward_pallas.3} parent=39 // pred_check
        %p352 = pneg %p122
      $region42: #{c1_forward_pallas.3} parent=39 // pred_check_branch
        %354 = sbr.rel (%p352) target = $region44
      $region43: #{c1_forward_pallas.3} parent=39 // pred_region
        %s355 = smul.u32 2, %s21
        %p356 = scmp.lt.s32.totalorder %s20, 1
        %s357 = scalar_select %p356, %s20, 1
        %p358 = scmp.lt.s32.totalorder %s355, 1
        %s359 = scalar_select %p358, %s355, 1
        %s360 = smul.addr %s357, 4
        %s361 = sadd.s32 %s359, %s360
        %s362 = smul.addr %s361, 8
        %s363 = scalar_lea.vmem %s3, %s362
      $region44: #{c1_forward_pallas.3} parent=39 // pred_fallthru
        _
    $region40: #{c1_forward_pallas.3} parent=5 // pred_fallthru
      _
  $region6: #{c1_forward_pallas.3} parent=0 // loop_footer
    %s13 = sadd.s32 1, %s9
  $region7: #{c1_forward_pallas.3} parent=0 // loop_footer_branch
    %8 = sbr.rel target = $region3
  $region8: #{c1_forward_pallas.3} parent=0 // loop_exit
    _

// kernel: c1_forward_pallas.4
$region0: #{c1_forward_pallas.4}
  #allocation0 [shape = 'u32[]', space=smem, size = 0x4, offset = 0x4, fixed_abs, tag = 'smem constant byte address 0x4 - core index']
  #allocation1 [shape = 'u32[144,128]{1,0:T(1,128)}', space=vmem, size = 0x12000, scoped, tag = 'internal scratch']
  %s0 = inlined_call_operand.vmem [shape: f32[9,2,16,256], index: 0, kind: input, shape index: {}]
  %s1 = inlined_call_operand.vmem [shape: f32[9,16,16], index: 1, kind: input, shape index: {}]
  %s2 = inlined_call_operand.vmem [shape: f32[16,1], index: 2, kind: input, shape index: {}]
  %s3 = inlined_call_operand.vmem [shape: f32[2,16,256], index: 3, kind: output, shape index: {}]
  %s4 = sld [smem:[#allocation0]]
  $region68: #{c1_forward_pallas.4} parent=0
    _
  %s6 = ssub.s32 1, %s4
  %s7 = scalar_select 0, %s6, %s4
  $region1: #{c1_forward_pallas.4} parent=0
    #allocation2 [shape = 'u8[294912]{0}', space=vmem, size = 0x48000, scoped, tag = 'input window, operand 0']
    loop: start=0, step=1, limit=4
    $region2: #{c1_forward_pallas.4} parent=1 // loop_pre_header
      _
    $region3: #{c1_forward_pallas.4} parent=1 // loop_header
      %s9 = sphi 0, %s13
      %p10 = scmp.ge.s32.totalorder %s9, 4
      %s16 = sphi 0, %s28
      %s17 = sphi 0, %s24
      %s18 = sphi 0, %s16
      %s19 = sphi 0, %s17
      %s20 = sphi 0, %s18
      %s21 = sphi 0, %s19
      %s33 = sphi 0, %s35
      %s36 = sphi 0, %s33
      %s37 = sphi 0, %s36
      %s53 = sphi 0, %s37
      %s57 = sphi 0, %s57
      %s59 = sphi 0, %s57
      %s60 = sphi 0, %s59
      %s74 = sphi 0, %s60
      %s78 = sphi 0, %s78
      %s80 = sphi 0, %s78
      %s81 = sphi 0, %s80
      %s95 = sphi 0, %s81
      %s103 = sphi 0, %s105
      %s106 = sphi 0, %s103
      %s107 = sphi 0, %s106
      %s123 = sphi 0, %s107
    $region4: #{c1_forward_pallas.4} parent=1 // loop_header_branch
      %12 = sbr.rel (%p10) target = $region8
    $region5: #{c1_forward_pallas.4} parent=1 // loop_body
      %s14 = ssub.s32 %s9, 1
      %s15 = ssub.s32 %s9, 2
      %s22 = sadd.s32 1, %s17
      %p23 = scmp.ge.s32.totalorder %s22, 1
      %s24 = scalar_select %p23, 0, %s22
      %s25 = sadd.s32 1, %s16
      %s26 = scalar_select %p23, %s25, %s16
      %p27 = scmp.ge.s32.totalorder %s26, 2
      %s28 = scalar_select %p27, 0, %s26
      %s29 = ssub.s32 %s16, %s28
      %s30 = ssub.s32 %s17, %s24
      %s31 = sor.u32 %s29, %s30
      %p32 = scmp.eq.s32.totalorder %s31, 0
      %s34 = sadd.s32 %s33, 1
      %s35 = scalar_select %p32, %s33, %s34
      %p38 = pneg %p32
      %p39 = scmp.eq.s32.totalorder %s9, 1
      %p40 = por %p38, %p39
      %p41 = scmp.ne.s32.totalorder %s33, %s36
      %p42 = scmp.eq.s32.totalorder %s9, 0
      %p43 = por %p41, %p42
      %p44 = scmp.ne.s32.totalorder %s33, %s36
      %p45 = scmp.eq.s32.totalorder %s14, 1
      %p46 = por %p44, %p45
      %p47 = scmp.ne.s32.totalorder %s36, %s37
      %p48 = scmp.eq.s32.totalorder %s14, 0
      %p49 = por %p47, %p48
      %p50 = scmp.ne.s32.totalorder %s36, %s37
      %p51 = scmp.eq.s32.totalorder %s15, 1
      %p52 = por %p50, %p51
      %p54 = scmp.ne.s32.totalorder %s37, %s53
      %p55 = scmp.eq.s32.totalorder %s15, 0
      %p56 = por %p54, %p55
      %s58 = sadd.s32 %s57, 1
      %p61 = scmp.eq.s32.totalorder %s9, 1
      %p62 = scmp.ne.s32.totalorder %s57, %s59
      %p63 = scmp.eq.s32.totalorder %s9, 0
      %p64 = por %p62, %p63
      %p65 = scmp.ne.s32.totalorder %s57, %s59
      %p66 = scmp.eq.s32.totalorder %s14, 1
      %p67 = por %p65, %p66
      %p68 = scmp.ne.s32.totalorder %s59, %s60
      %p69 = scmp.eq.s32.totalorder %s14, 0
      %p70 = por %p68, %p69
      %p71 = scmp.ne.s32.totalorder %s59, %s60
      %p72 = scmp.eq.s32.totalorder %s15, 1
      %p73 = por %p71, %p72
      %p75 = scmp.ne.s32.totalorder %s60, %s74
      %p76 = scmp.eq.s32.totalorder %s15, 0
      %p77 = por %p75, %p76
      %s79 = sadd.s32 %s78, 1
      %p82 = scmp.eq.s32.totalorder %s9, 1
      %p83 = scmp.ne.s32.totalorder %s78, %s80
      %p84 = scmp.eq.s32.totalorder %s9, 0
      %p85 = por %p83, %p84
      %p86 = scmp.ne.s32.totalorder %s78, %s80
      %p87 = scmp.eq.s32.totalorder %s14, 1
      %p88 = por %p86, %p87
      %p89 = scmp.ne.s32.totalorder %s80, %s81
      %p90 = scmp.eq.s32.totalorder %s14, 0
      %p91 = por %p89, %p90
      %p92 = scmp.ne.s32.totalorder %s80, %s81
      %p93 = scmp.eq.s32.totalorder %s15, 1
      %p94 = por %p92, %p93
      %p96 = scmp.ne.s32.totalorder %s81, %s95
      %p97 = scmp.eq.s32.totalorder %s15, 0
      %p98 = por %p96, %p97
      %s99 = ssub.s32 %s16, %s28
      %s100 = ssub.s32 %s17, %s24
      %s101 = sor.u32 %s99, %s100
      %p102 = scmp.eq.s32.totalorder %s101, 0
      %s104 = sadd.s32 %s103, 1
      %s105 = scalar_select %p102, %s103, %s104
      %p108 = pneg %p102
      %p109 = scmp.eq.s32.totalorder %s9, 1
      %p110 = por %p108, %p109
      %p111 = scmp.ne.s32.totalorder %s103, %s106
      %p112 = scmp.eq.s32.totalorder %s9, 0
      %p113 = por %p111, %p112
      %p114 = scmp.ne.s32.totalorder %s103, %s106
      %p115 = scmp.eq.s32.totalorder %s14, 1
      %p116 = por %p114, %p115
      %p117 = scmp.ne.s32.totalorder %s106, %s107
      %p118 = scmp.eq.s32.totalorder %s14, 0
      %p119 = por %p117, %p118
      %p120 = scmp.ne.s32.totalorder %s106, %s107
      %p121 = scmp.eq.s32.totalorder %s15, 1
      %p122 = por %p120, %p121
      %p124 = scmp.ne.s32.totalorder %s107, %s123
      %p125 = scmp.eq.s32.totalorder %s15, 0
      %p126 = por %p124, %p125
      %p127 = scmp.le.s32.totalorder 1, %s9
      %p128 = scmp.lt.s32.totalorder %s9, 3
      %p129 = pnand %p127, %p128
      %p130 = pneg %p129
      // Predicated region
      $region9: #{c1_forward_pallas.4} parent=5 // pred_check
        _
      $region10: #{c1_forward_pallas.4} parent=5 // pred_check_branch
        %132 = sbr.rel (%p129) target = $region12
      $region11: #{c1_forward_pallas.4} parent=5 // pred_region
        %s133 = ssub.s32 %s9, 1
        // Predicated region
        $region13: #{c1_forward_pallas.4} parent=11 // pred_check
          %p134 = pneg %p70
        $region14: #{c1_forward_pallas.4} parent=11 // pred_check_branch
          %136 = sbr.rel (%p134) target = $region16
        $region15: #{c1_forward_pallas.4} parent=11 // pred_region
          _
        $region16: #{c1_forward_pallas.4} parent=11 // pred_fallthru
          _
        // Predicated region
        $region17: #{c1_forward_pallas.4} parent=11 // pred_check
          %p137 = pneg %p91
        $region18: #{c1_forward_pallas.4} parent=11 // pred_check_branch
          %139 = sbr.rel (%p137) target = $region20
        $region19: #{c1_forward_pallas.4} parent=11 // pred_region
          _
        $region20: #{c1_forward_pallas.4} parent=11 // pred_fallthru
          _
      $region12: #{c1_forward_pallas.4} parent=5 // pred_fallthru
        _
      %p140 = scmp.lt.s32.totalorder %s9, 2
      // Predicated region
      $region21: #{c1_forward_pallas.4} parent=5 // pred_check
        %p141 = pneg %p140
      $region22: #{c1_forward_pallas.4} parent=5 // pred_check_branch
        %143 = sbr.rel (%p141) target = $region24
      $region23: #{c1_forward_pallas.4} parent=5 // pred_region
        // Predicated region
        $region25: #{c1_forward_pallas.4} parent=23 // pred_check
          %p144 = pneg %p43
        $region26: #{c1_forward_pallas.4} parent=23 // pred_check_branch
          %146 = sbr.rel (%p144) target = $region28
        $region27: #{c1_forward_pallas.4} parent=23 // pred_region
          %s147 = sand.u32 %s33, 1
          %s148 = sand.u32 %s33, 1
          %s149 = smul.addr %s148, 288
          %s150 = scalar_lea.vmem [#allocation2], %s149
          %s151 = smul.u32 2, %s17
          %s152 = smul.addr %s16, 4
          %s153 = sadd.s32 %s151, %s152
          %s154 = smul.addr %s153, 8
          %s155 = scalar_lea.vmem %s0, %s154
          // Predicated region
          $region29: #{c1_forward_pallas.4} parent=27 // pred_check
            _
          $region30: #{c1_forward_pallas.4} parent=27 // pred_check_branch
            %157 = sbr.rel (0) target = $region32
          $region31: #{c1_forward_pallas.4} parent=27 // pred_region
            // Predicated region
            $region33: #{c1_forward_pallas.4} parent=31 // pred_check
              _
            $region34: #{c1_forward_pallas.4} parent=31 // pred_check_branch
              %159 = sbr.rel (0) target = $region36
            $region35: #{c1_forward_pallas.4} parent=31 // pred_region
              loop: start=0, step=1, limit=1
              $region37: #{c1_forward_pallas.4} parent=35 // loop_pre_header
                _
              $region38: #{c1_forward_pallas.4} parent=35 // loop_header
                %s161 = sphi 0, %s165
                %p162 = scmp.ge.s32.totalorder %s161, 1
                %s166 = sphi %s155, %s155
                %s167 = sphi %s150, %s150
              $region39: #{c1_forward_pallas.4} parent=35 // loop_header_branch
                %164 = sbr.rel (%p162) target = $region43
              $region40: #{c1_forward_pallas.4} parent=35 // loop_body
                %v168 = vld [vmem:[%s166] sm:$0xff]
                %169 = vst [vmem:[%s167] sm:$0xff] %v168
                %v170 = vld [vmem:[%s166 + $0x8] sm:$0xff]
                %171 = vst [vmem:[%s167 + $0x8] sm:$0xff] %v170
                %v172 = vld [vmem:[%s166 + $0x10] sm:$0xff]
                %173 = vst [vmem:[%s167 + $0x10] sm:$0xff] %v172
                %v174 = vld [vmem:[%s166 + $0x18] sm:$0xff]
                %175 = vst [vmem:[%s167 + $0x18] sm:$0xff] %v174
                %v176 = vld [vmem:[%s166 + $0x40] sm:$0xff]
                %177 = vst [vmem:[%s167 + $0x20] sm:$0xff] %v176
                %v178 = vld [vmem:[%s166 + $0x48] sm:$0xff]
                %179 = vst [vmem:[%s167 + $0x28] sm:$0xff] %v178
                %v180 = vld [vmem:[%s166 + $0x50] sm:$0xff]
                %181 = vst [vmem:[%s167 + $0x30] sm:$0xff] %v180
                %v182 = vld [vmem:[%s166 + $0x58] sm:$0xff]
                %183 = vst [vmem:[%s167 + $0x38] sm:$0xff] %v182
                %v184 = vld [vmem:[%s166 + $0x80] sm:$0xff]
                %185 = vst [vmem:[%s167 + $0x40] sm:$0xff] %v184
                %v186 = vld [vmem:[%s166 + $0x88] sm:$0xff]
                %187 = vst [vmem:[%s167 + $0x48] sm:$0xff] %v186
                %v188 = vld [vmem:[%s166 + $0x90] sm:$0xff]
                %189 = vst [vmem:[%s167 + $0x50] sm:$0xff] %v188
                %v190 = vld [vmem:[%s166 + $0x98] sm:$0xff]
                %191 = vst [vmem:[%s167 + $0x58] sm:$0xff] %v190
                %v192 = vld [vmem:[%s166 + $0xc0] sm:$0xff]
                %193 = vst [vmem:[%s167 + $0x60] sm:$0xff] %v192
                %v194 = vld [vmem:[%s166 + $0xc8] sm:$0xff]
                %195 = vst [vmem:[%s167 + $0x68] sm:$0xff] %v194
                %v196 = vld [vmem:[%s166 + $0xd0] sm:$0xff]
                %197 = vst [vmem:[%s167 + $0x70] sm:$0xff] %v196
                %v198 = vld [vmem:[%s166 + $0xd8] sm:$0xff]
                %199 = vst [vmem:[%s167 + $0x78] sm:$0xff] %v198
                %v200 = vld [vmem:[%s166 + $0x100] sm:$0xff]
                %201 = vst [vmem:[%s167 + $0x80] sm:$0xff] %v200
                %v202 = vld [vmem:[%s166 + $0x108] sm:$0xff]
                %203 = vst [vmem:[%s167 + $0x88] sm:$0xff] %v202
                %v204 = vld [vmem:[%s166 + $0x110] sm:$0xff]
                %205 = vst [vmem:[%s167 + $0x90] sm:$0xff] %v204
                %v206 = vld [vmem:[%s166 + $0x118] sm:$0xff]
                %207 = vst [vmem:[%s167 + $0x98] sm:$0xff] %v206
                %v208 = vld [vmem:[%s166 + $0x140] sm:$0xff]
                %209 = vst [vmem:[%s167 + $0xa0] sm:$0xff] %v208
                %v210 = vld [vmem:[%s166 + $0x148] sm:$0xff]
                %211 = vst [vmem:[%s167 + $0xa8] sm:$0xff] %v210
                %v212 = vld [vmem:[%s166 + $0x150] sm:$0xff]
                %213 = vst [vmem:[%s167 + $0xb0] sm:$0xff] %v212
                %v214 = vld [vmem:[%s166 + $0x158] sm:$0xff]
                %215 = vst [vmem:[%s167 + $0xb8] sm:$0xff] %v214
                %v216 = vld [vmem:[%s166 + $0x180] sm:$0xff]
                %217 = vst [vmem:[%s167 + $0xc0] sm:$0xff] %v216
                %v218 = vld [vmem:[%s166 + $0x188] sm:$0xff]
                %219 = vst [vmem:[%s167 + $0xc8] sm:$0xff] %v218
                %v220 = vld [vmem:[%s166 + $0x190] sm:$0xff]
                %221 = vst [vmem:[%s167 + $0xd0] sm:$0xff] %v220
                %v222 = vld [vmem:[%s166 + $0x198] sm:$0xff]
                %223 = vst [vmem:[%s167 + $0xd8] sm:$0xff] %v222
                %v224 = vld [vmem:[%s166 + $0x1c0] sm:$0xff]
                %225 = vst [vmem:[%s167 + $0xe0] sm:$0xff] %v224
                %v226 = vld [vmem:[%s166 + $0x1c8] sm:$0xff]
                %227 = vst [vmem:[%s167 + $0xe8] sm:$0xff] %v226
                %v228 = vld [vmem:[%s166 + $0x1d0] sm:$0xff]
                %229 = vst [vmem:[%s167 + $0xf0] sm:$0xff] %v228
                %v230 = vld [vmem:[%s166 + $0x1d8] sm:$0xff]
                %231 = vst [vmem:[%s167 + $0xf8] sm:$0xff] %v230
                %v232 = vld [vmem:[%s166 + $0x200] sm:$0xff]
                %233 = vst [vmem:[%s167 + $0x100] sm:$0xff] %v232
                %v234 = vld [vmem:[%s166 + $0x208] sm:$0xff]
                %235 = vst [vmem:[%s167 + $0x108] sm:$0xff] %v234
                %v236 = vld [vmem:[%s166 + $0x210] sm:$0xff]
                %237 = vst [vmem:[%s167 + $0x110] sm:$0xff] %v236
                %v238 = vld [vmem:[%s166 + $0x218] sm:$0xff]
                %239 = vst [vmem:[%s167 + $0x118] sm:$0xff] %v238
              $region41: #{c1_forward_pallas.4} parent=35 // loop_footer
                %s165 = sadd.s32 1, %s161
              $region42: #{c1_forward_pallas.4} parent=35 // loop_footer_branch
                %160 = sbr.rel target = $region38
              $region43: #{c1_forward_pallas.4} parent=35 // loop_exit
                _
            $region36: #{c1_forward_pallas.4} parent=31 // pred_fallthru
              _
            // Predicated region
            $region44: #{c1_forward_pallas.4} parent=31 // pred_check
              _
            $region45: #{c1_forward_pallas.4} parent=31 // pred_check_branch
              %241 = sbr.rel target = $region47
            $region46: #{c1_forward_pallas.4} parent=31 // pred_region
              _
            $region47: #{c1_forward_pallas.4} parent=31 // pred_fallthru
              _
          $region32: #{c1_forward_pallas.4} parent=27 // pred_fallthru
            _
          %242 = vnop
        $region28: #{c1_forward_pallas.4} parent=23 // pred_fallthru
          _
      $region24: #{c1_forward_pallas.4} parent=5 // pred_fallthru
        _
      %p243 = scmp.le.s32.totalorder 1, %s9
      %p244 = scmp.lt.s32.totalorder %s9, 3
      %p245 = pnand %p243, %p244
      %p246 = pneg %p245
      // Predicated region
      $region48: #{c1_forward_pallas.4} parent=5 // pred_check
        _
      $region49: #{c1_forward_pallas.4} parent=5 // pred_check_branch
        %248 = sbr.rel (%p245) target = $region51
      $region50: #{c1_forward_pallas.4} parent=5 // pred_region
        %s249 = ssub.s32 %s9, 1
        %s250 = sand.u32 %s36, 1
        %s251 = sand.u32 %s36, 1
        %s252 = smul.addr %s251, 288
        %s253 = scalar_lea.vmem [#allocation2], %s252
        // Predicated region
        $region52: #{c1_forward_pallas.4} parent=50 // pred_check
          %p254 = pneg %p49
        $region53: #{c1_forward_pallas.4} parent=50 // pred_check_branch
          %256 = sbr.rel (%p254) target = $region55
        $region54: #{c1_forward_pallas.4} parent=50 // pred_region
          _
        $region55: #{c1_forward_pallas.4} parent=50 // pred_fallthru
          _
        %s257 = sand.u32 %s36, 1
        %s258 = sand.u32 %s36, 1
        %s259 = smul.addr %s258, 288
        %s260 = scalar_lea.vmem [#allocation2], %s259
        %p261 = pneg %p49
        %p262 = pneg %p46
        %p263 = pneg %p70
        %p264 = pneg %p67
        %p265 = pneg %p91
        %p266 = pneg %p88
        %p267 = pneg %p119
        %p268 = pneg %p116
        %s269 = smul.u32 2, %s19
        %p270 = scmp.lt.s32.totalorder %s18, 1
        %s271 = scalar_select %p270, %s18, 1
        %p272 = scmp.lt.s32.totalorder %s269, 1
        %s273 = scalar_select %p272, %s269, 1
        %s274 = smul.addr %s271, 4
        %s275 = sadd.s32 %s273, %s274
        %s276 = smul.addr %s275, 8
        %s277 = scalar_lea.vmem %s3, %s276
        %s278 = smul.u32 2, %s19
        %s279 = smul.u32 2, %s19
        %p280 = scmp.lt.s32.totalorder %s18, 1
        %s281 = scalar_select %p280, %s18, 1
        %p282 = scmp.lt.s32.totalorder %s279, 1
        %s283 = scalar_select %p282, %s279, 1
        %s284 = smul.addr %s281, 4
        %s285 = sadd.s32 %s283, %s284
        %s286 = smul.addr %s285, 8
        %s287 = scalar_lea.vmem %s3, %s286
        %s288 = smul.u32 2, %s19
        %v289 = vld [vmem:[%s1] sm:$0xff]
        %v290 = vld [vmem:[%s1 + $0x8] sm:$0xff]
        %v291 = vld [vmem:[%s253] sm:$0xff]
        %v292 = vld [vmem:[%s253 + $0x8] sm:$0xff]
        %v293 = vld [vmem:[%s253 + $0x10] sm:$0xff]
        %v294 = vld [vmem:[%s253 + $0x18] sm:$0xff]
        %s295 = scalar_lea.vmem %s1, 16
        %v296 = vld [vmem:[%s295] sm:$0xff]
        %v297 = vld [vmem:[%s295 + $0x8] sm:$0xff]
        %s298 = scalar_lea.vmem %s253, 32 [#allocation2]
        %v299 = vld [vmem:[%s298] sm:$0xff]
        %v300 = vld [vmem:[%s298 + $0x8] sm:$0xff]
        %v301 = vld [vmem:[%s298 + $0x10] sm:$0xff]
        %v302 = vld [vmem:[%s298 + $0x18] sm:$0xff]
        %vm303 = vcmask 130048
        %v305 = vsel %vm303, %v296, 0
        %v308 = vsel %vm303, %v297, 0
        %310 = vmatprep.subr.mxu0 %v300
        %311 = vmatpush1.msra.mxu0 %v299
        %312 = vmatprep.subr.mxu0 %v302
        %313 = vmatpush1.msra.mxu0 %v301
        %314 = vmatprep.subr.mxu0 0.0
        %315 = vmatpush1.msra.mxu0 0.0
        %316 = vmatprep.subr.mxu0 0.0
        %317 = vmatpush1.msra.mxu0 0.0
        %318 = vmatprep.subr.mxu0 0.0
        %319 = vmatpush1.msra.mxu0 0.0
        %320 = vmatprep.subr.mxu0 0.0
        %321 = vmatpush1.msra.mxu0 0.0
        %322 = vmatprep.subr.mxu0 0.0
        %323 = vmatpush1.msra.mxu0 0.0
        %324 = vmatprep.subr.mxu0 0.0
        %325 = vmatpush1.msra.mxu0 0.0
        %326 = vmatprep.subr.mxu0 0.0
        %327 = vmatpush1.msra.mxu0 0.0
        %328 = vmatprep.subr.mxu0 0.0
        %329 = vmatpush1.msra.mxu0 0.0
        %330 = vmatprep.subr.mxu0 0.0
        %331 = vmatpush1.msra.mxu0 0.0
        %332 = vmatprep.subr.mxu0 0.0
        %333 = vmatpush1.msra.mxu0 0.0
        %334 = vmatprep.subr.mxu0 0.0
        %335 = vmatpush1.msra.mxu0 0.0
        %336 = vmatprep.subr.mxu0 0.0
        %337 = vmatpush1.msra.mxu0 0.0
        %338 = vmatprep.subr.mxu0 0.0
        %339 = vmatpush1.msra.mxu0 0.0
        %340 = vmatprep.subr.mxu0 0.0
        %341 = vmatpush1.msra.mxu0 0.0
        %342 = vmatprep.subr.mxu0 0.0
        %343 = vmatpush1.msra.mxu0 0.0
        %344 = vmatprep.subr.mxu0 0.0
        %345 = vmatpush1.msra.mxu0 0.0
        %346 = vmatprep.subr.mxu0 0.0
        %347 = vmatpush1.msra.mxu0 0.0
        %348 = vmatprep.subr.mxu0 0.0
        %349 = vmatpush1.msra.mxu0 0.0
        %350 = vmatprep.subr.mxu0 0.0
        %351 = vmatpush1.msra.mxu0 0.0
        %352 = vmatprep.subr.mxu0 0.0
        %353 = vmatpush1.msra.mxu0 0.0
        %354 = vmatprep.subr.mxu0 0.0
        %355 = vmatpush1.msra.mxu0 0.0
        %356 = vmatprep.subr.mxu0 0.0
        %357 = vmatpush1.msra.mxu0 0.0
        %358 = vmatprep.subr.mxu0 0.0
        %359 = vmatpush1.msra.mxu0 0.0
        %360 = vmatprep.subr.mxu0 0.0
        %361 = vmatpush1.msra.mxu0 0.0
        %362 = vmatprep.subr.mxu0 0.0
        %363 = vmatpush1.msra.mxu0 0.0
        %364 = vmatprep.subr.mxu0 0.0
        %365 = vmatpush1.msra.mxu0 0.0
        %366 = vmatprep.subr.mxu0 0.0
        %367 = vmatpush1.msra.mxu0 0.0
        %368 = vmatprep.subr.mxu0 0.0
        %369 = vmatpush1.msra.mxu0 0.0
        %370 = vmatprep.subr.mxu0 0.0
        %371 = vmatpush1.msra.mxu0 0.0
        %372 = vmatprep.subr.mxu0 0.0
        %373 = vmatpush1.msra.mxu0 0.0
        %374 = vmatprep.mubr.f32.mxu0 0.0
        %375 = vmatmul.mubr.f32.gmra.mrb[0].mxu0 %v305
        %v376 = vpop.f32.mrb[0].mxu0
        %v377 = vadd.f32 0.0, %v376
        %v378 = vpop.f32.mrb[0].mxu0
        %v379 = vadd.f32 0.0, %v378
        %380 = vmatprep.mubr.f32.mxu0 0.0
        %381 = vmatmul.mubr.f32.gmra.mrb[0].mxu0 %v308
        %v382 = vpop.f32.mrb[0].mxu0
        %v383 = vadd.f32 0.0, %v382
        %v384 = vpop.f32.mrb[0].mxu0
        %v385 = vadd.f32 0.0, %v384
        %386 = vdwg.mxu0
        %v388 = vsel %vm303, %v289, 0
        %v391 = vsel %vm303, %v290, 0
        %393 = vmatprep.subr.mxu0 %v292
        %394 = vmatpush1.msra.mxu0 %v291
        %395 = vmatprep.subr.mxu0 %v294
        %396 = vmatpush1.msra.mxu0 %v293
        %397 = vmatprep.subr.mxu0 0.0
        %398 = vmatpush1.msra.mxu0 0.0
        %399 = vmatprep.subr.mxu0 0.0
        %400 = vmatpush1.msra.mxu0 0.0
        %401 = vmatprep.subr.mxu0 0.0
        %402 = vmatpush1.msra.mxu0 0.0
        %403 = vmatprep.subr.mxu0 0.0
        %404 = vmatpush1.msra.mxu0 0.0
        %405 = vmatprep.subr.mxu0 0.0
        %406 = vmatpush1.msra.mxu0 0.0
        %407 = vmatprep.subr.mxu0 0.0
        %408 = vmatpush1.msra.mxu0 0.0
        %409 = vmatprep.subr.mxu0 0.0
        %410 = vmatpush1.msra.mxu0 0.0
        %411 = vmatprep.subr.mxu0 0.0
        %412 = vmatpush1.msra.mxu0 0.0
        %413 = vmatprep.subr.mxu0 0.0
        %414 = vmatpush1.msra.mxu0 0.0
        %415 = vmatprep.subr.mxu0 0.0
        %416 = vmatpush1.msra.mxu0 0.0
        %417 = vmatprep.subr.mxu0 0.0
        %418 = vmatpush1.msra.mxu0 0.0
        %419 = vmatprep.subr.mxu0 0.0
        %420 = vmatpush1.msra.mxu0 0.0
        %421 = vmatprep.subr.mxu0 0.0
        %422 = vmatpush1.msra.mxu0 0.0
        %423 = vmatprep.subr.mxu0 0.0
        %424 = vmatpush1.msra.mxu0 0.0
        %425 = vmatprep.subr.mxu0 0.0
        %426 = vmatpush1.msra.mxu0 0.0
        %427 = vmatprep.subr.mxu0 0.0
        %428 = vmatpush1.msra.mxu0 0.0
        %429 = vmatprep.subr.mxu0 0.0
        %430 = vmatpush1.msra.mxu0 0.0
        %431 = vmatprep.subr.mxu0 0.0
        %432 = vmatpush1.msra.mxu0 0.0
        %433 = vmatprep.subr.mxu0 0.0
        %434 = vmatpush1.msra.mxu0 0.0
        %435 = vmatprep.subr.mxu0 0.0
        %436 = vmatpush1.msra.mxu0 0.0
        %437 = vmatprep.subr.mxu0 0.0
        %438 = vmatpush1.msra.mxu0 0.0
        %439 = vmatprep.subr.mxu0 0.0
        %440 = vmatpush1.msra.mxu0 0.0
        %441 = vmatprep.subr.mxu0 0.0
        %442 = vmatpush1.msra.mxu0 0.0
        %443 = vmatprep.subr.mxu0 0.0
        %444 = vmatpush1.msra.mxu0 0.0
        %445 = vmatprep.subr.mxu0 0.0
        %446 = vmatpush1.msra.mxu0 0.0
        %447 = vmatprep.subr.mxu0 0.0
        %448 = vmatpush1.msra.mxu0 0.0
        %449 = vmatprep.subr.mxu0 0.0
        %450 = vmatpush1.msra.mxu0 0.0
        %451 = vmatprep.subr.mxu0 0.0
        %452 = vmatpush1.msra.mxu0 0.0
        %453 = vmatprep.subr.mxu0 0.0
        %454 = vmatpush1.msra.mxu0 0.0
        %455 = vmatprep.subr.mxu0 0.0
        %456 = vmatpush1.msra.mxu0 0.0
        %457 = vmatprep.mubr.f32.mxu0 0.0
        %458 = vmatmul.mubr.f32.gmra.mrb[0].mxu0 %v388
        %v459 = vpop.f32.mrb[0].mxu0
        %v460 = vadd.f32 %v377, %v459
        %v461 = vpop.f32.mrb[0].mxu0
        %v462 = vadd.f32 %v379, %v461
        %463 = vmatprep.mubr.f32.mxu0 0.0
        %464 = vmatmul.mubr.f32.gmra.mrb[0].mxu0 %v391
        %v465 = vpop.f32.mrb[0].mxu0
        %v466 = vadd.f32 %v383, %v465
        %v467 = vpop.f32.mrb[0].mxu0
        %v468 = vadd.f32 %v385, %v467
        %469 = vdwg.mxu0
        %s470 = scalar_lea.vmem %s1, 32
        %v471 = vld [vmem:[%s470] sm:$0xff]
        %v472 = vld [vmem:[%s470 + $0x8] sm:$0xff]
        %s473 = scalar_lea.vmem %s253, 64 [#allocation2]
        %v474 = vld [vmem:[%s473] sm:$0xff]
        %v475 = vld [vmem:[%s473 + $0x8] sm:$0xff]
        %v476 = vld [vmem:[%s473 + $0x10] sm:$0xff]
        %v477 = vld [vmem:[%s473 + $0x18] sm:$0xff]
        %v479 = vsel %vm303, %v471, 0
        %v482 = vsel %vm303, %v472, 0
        %484 = vmatprep.subr.mxu0 %v475
        %485 = vmatpush1.msra.mxu0 %v474
        %486 = vmatprep.subr.mxu0 %v477
        %487 = vmatpush1.msra.mxu0 %v476
        %488 = vmatprep.subr.mxu0 0.0
        %489 = vmatpush1.msra.mxu0 0.0
        %490 = vmatprep.subr.mxu0 0.0
        %491 = vmatpush1.msra.mxu0 0.0
        %492 = vmatprep.subr.mxu0 0.0
        %493 = vmatpush1.msra.mxu0 0.0
        %494 = vmatprep.subr.mxu0 0.0
        %495 = vmatpush1.msra.mxu0 0.0
        %496 = vmatprep.subr.mxu0 0.0
        %497 = vmatpush1.msra.mxu0 0.0
        %498 = vmatprep.subr.mxu0 0.0
        %499 = vmatpush1.msra.mxu0 0.0
        %500 = vmatprep.subr.mxu0 0.0
        %501 = vmatpush1.msra.mxu0 0.0
        %502 = vmatprep.subr.mxu0 0.0
        %503 = vmatpush1.msra.mxu0 0.0
        %504 = vmatprep.subr.mxu0 0.0
        %505 = vmatpush1.msra.mxu0 0.0
        %506 = vmatprep.subr.mxu0 0.0
        %507 = vmatpush1.msra.mxu0 0.0
        %508 = vmatprep.subr.mxu0 0.0
        %509 = vmatpush1.msra.mxu0 0.0
        %510 = vmatprep.subr.mxu0 0.0
        %511 = vmatpush1.msra.mxu0 0.0
        %512 = vmatprep.subr.mxu0 0.0
        %513 = vmatpush1.msra.mxu0 0.0
        %514 = vmatprep.subr.mxu0 0.0
        %515 = vmatpush1.msra.mxu0 0.0
        %516 = vmatprep.subr.mxu0 0.0
        %517 = vmatpush1.msra.mxu0 0.0
        %518 = vmatprep.subr.mxu0 0.0
        %519 = vmatpush1.msra.mxu0 0.0
        %520 = vmatprep.subr.mxu0 0.0
        %521 = vmatpush1.msra.mxu0 0.0
        %522 = vmatprep.subr.mxu0 0.0
        %523 = vmatpush1.msra.mxu0 0.0
        %524 = vmatprep.subr.mxu0 0.0
        %525 = vmatpush1.msra.mxu0 0.0
        %526 = vmatprep.subr.mxu0 0.0
        %527 = vmatpush1.msra.mxu0 0.0
        %528 = vmatprep.subr.mxu0 0.0
        %529 = vmatpush1.msra.mxu0 0.0
        %530 = vmatprep.subr.mxu0 0.0
        %531 = vmatpush1.msra.mxu0 0.0
        %532 = vmatprep.subr.mxu0 0.0
        %533 = vmatpush1.msra.mxu0 0.0
        %534 = vmatprep.subr.mxu0 0.0
        %535 = vmatpush1.msra.mxu0 0.0
        %536 = vmatprep.subr.mxu0 0.0
        %537 = vmatpush1.msra.mxu0 0.0
        %538 = vmatprep.subr.mxu0 0.0
        %539 = vmatpush1.msra.mxu0 0.0
        %540 = vmatprep.subr.mxu0 0.0
        %541 = vmatpush1.msra.mxu0 0.0
        %542 = vmatprep.subr.mxu0 0.0
        %543 = vmatpush1.msra.mxu0 0.0
        %544 = vmatprep.subr.mxu0 0.0
        %545 = vmatpush1.msra.mxu0 0.0
        %546 = vmatprep.subr.mxu0 0.0
        %547 = vmatpush1.msra.mxu0 0.0
        %548 = vmatprep.mubr.f32.mxu0 0.0
        %549 = vmatmul.mubr.f32.gmra.mrb[0].mxu0 %v479
        %v550 = vpop.f32.mrb[0].mxu0
        %v551 = vadd.f32 0.0, %v550
        %v552 = vpop.f32.mrb[0].mxu0
        %v553 = vadd.f32 0.0, %v552
        %554 = vmatprep.mubr.f32.mxu0 0.0
        %555 = vmatmul.mubr.f32.gmra.mrb[0].mxu0 %v482
        %v556 = vpop.f32.mrb[0].mxu0
        %v557 = vadd.f32 0.0, %v556
        %v558 = vpop.f32.mrb[0].mxu0
        %v559 = vadd.f32 0.0, %v558
        %560 = vdwg.mxu0
        %v561 = vadd.f32 %v460, %v551
        %v562 = vadd.f32 %v462, %v553
        %v563 = vadd.f32 %v466, %v557
        %v564 = vadd.f32 %v468, %v559
        %s565 = scalar_lea.vmem %s1, 48
        %v566 = vld [vmem:[%s565] sm:$0xff]
        %v567 = vld [vmem:[%s565 + $0x8] sm:$0xff]
        %s568 = scalar_lea.vmem %s253, 96 [#allocation2]
        %v569 = vld [vmem:[%s568] sm:$0xff]
        %v570 = vld [vmem:[%s568 + $0x8] sm:$0xff]
        %v571 = vld [vmem:[%s568 + $0x10] sm:$0xff]
        %v572 = vld [vmem:[%s568 + $0x18] sm:$0xff]
        %v574 = vsel %vm303, %v566, 0
        %v577 = vsel %vm303, %v567, 0
        %579 = vmatprep.subr.mxu0 %v570
        %580 = vmatpush1.msra.mxu0 %v569
        %581 = vmatprep.subr.mxu0 %v572
        %582 = vmatpush1.msra.mxu0 %v571
        %583 = vmatprep.subr.mxu0 0.0
        %584 = vmatpush1.msra.mxu0 0.0
        %585 = vmatprep.subr.mxu0 0.0
        %586 = vmatpush1.msra.mxu0 0.0
        %587 = vmatprep.subr.mxu0 0.0
        %588 = vmatpush1.msra.mxu0 0.0
        %589 = vmatprep.subr.mxu0 0.0
        %590 = vmatpush1.msra.mxu0 0.0
        %591 = vmatprep.subr.mxu0 0.0
        %592 = vmatpush1.msra.mxu0 0.0
        %593 = vmatprep.subr.mxu0 0.0
        %594 = vmatpush1.msra.mxu0 0.0
        %595 = vmatprep.subr.mxu0 0.0
        %596 = vmatpush1.msra.mxu0 0.0
        %597 = vmatprep.subr.mxu0 0.0
        %598 = vmatpush1.msra.mxu0 0.0
        %599 = vmatprep.subr.mxu0 0.0
        %600 = vmatpush1.msra.mxu0 0.0
        %601 = vmatprep.subr.mxu0 0.0
        %602 = vmatpush1.msra.mxu0 0.0
        %603 = vmatprep.subr.mxu0 0.0
        %604 = vmatpush1.msra.mxu0 0.0
        %605 = vmatprep.subr.mxu0 0.0
        %606 = vmatpush1.msra.mxu0 0.0
        %607 = vmatprep.subr.mxu0 0.0
        %608 = vmatpush1.msra.mxu0 0.0
        %609 = vmatprep.subr.mxu0 0.0
        %610 = vmatpush1.msra.mxu0 0.0
        %611 = vmatprep.subr.mxu0 0.0
        %612 = vmatpush1.msra.mxu0 0.0
        %613 = vmatprep.subr.mxu0 0.0
        %614 = vmatpush1.msra.mxu0 0.0
        %615 = vmatprep.subr.mxu0 0.0
        %616 = vmatpush1.msra.mxu0 0.0
        %617 = vmatprep.subr.mxu0 0.0
        %618 = vmatpush1.msra.mxu0 0.0
        %619 = vmatprep.subr.mxu0 0.0
        %620 = vmatpush1.msra.mxu0 0.0
        %621 = vmatprep.subr.mxu0 0.0
        %622 = vmatpush1.msra.mxu0 0.0
        %623 = vmatprep.subr.mxu0 0.0
        %624 = vmatpush1.msra.mxu0 0.0
        %625 = vmatprep.subr.mxu0 0.0
        %626 = vmatpush1.msra.mxu0 0.0
        %627 = vmatprep.subr.mxu0 0.0
        %628 = vmatpush1.msra.mxu0 0.0
        %629 = vmatprep.subr.mxu0 0.0
        %630 = vmatpush1.msra.mxu0 0.0
        %631 = vmatprep.subr.mxu0 0.0
        %632 = vmatpush1.msra.mxu0 0.0
        %633 = vmatprep.subr.mxu0 0.0
        %634 = vmatpush1.msra.mxu0 0.0
        %635 = vmatprep.subr.mxu0 0.0
        %636 = vmatpush1.msra.mxu0 0.0
        %637 = vmatprep.subr.mxu0 0.0
        %638 = vmatpush1.msra.mxu0 0.0
        %639 = vmatprep.subr.mxu0 0.0
        %640 = vmatpush1.msra.mxu0 0.0
        %641 = vmatprep.subr.mxu0 0.0
        %642 = vmatpush1.msra.mxu0 0.0
        %643 = vmatprep.mubr.f32.mxu0 0.0
        %644 = vmatmul.mubr.f32.gmra.mrb[0].mxu0 %v574
        %v645 = vpop.f32.mrb[0].mxu0
        %v646 = vadd.f32 0.0, %v645
        %v647 = vpop.f32.mrb[0].mxu0
        %v648 = vadd.f32 0.0, %v647
        %649 = vmatprep.mubr.f32.mxu0 0.0
        %650 = vmatmul.mubr.f32.gmra.mrb[0].mxu0 %v577
        %v651 = vpop.f32.mrb[0].mxu0
        %v652 = vadd.f32 0.0, %v651
        %v653 = vpop.f32.mrb[0].mxu0
        %v654 = vadd.f32 0.0, %v653
        %655 = vdwg.mxu0
        %v656 = vadd.f32 %v561, %v646
        %v657 = vadd.f32 %v562, %v648
        %v658 = vadd.f32 %v563, %v652
        %v659 = vadd.f32 %v564, %v654
        %s660 = scalar_lea.vmem %s1, 64
        %v661 = vld [vmem:[%s660] sm:$0xff]
        %v662 = vld [vmem:[%s660 + $0x8] sm:$0xff]
        %s663 = scalar_lea.vmem %s253, 128 [#allocation2]
        %v664 = vld [vmem:[%s663] sm:$0xff]
        %v665 = vld [vmem:[%s663 + $0x8] sm:$0xff]
        %v666 = vld [vmem:[%s663 + $0x10] sm:$0xff]
        %v667 = vld [vmem:[%s663 + $0x18] sm:$0xff]
        %v669 = vsel %vm303, %v661, 0
        %v672 = vsel %vm303, %v662, 0
        %674 = vmatprep.subr.mxu0 %v665
        %675 = vmatpush1.msra.mxu0 %v664
        %676 = vmatprep.subr.mxu0 %v667
        %677 = vmatpush1.msra.mxu0 %v666
        %678 = vmatprep.subr.mxu0 0.0
        %679 = vmatpush1.msra.mxu0 0.0
        %680 = vmatprep.subr.mxu0 0.0
        %681 = vmatpush1.msra.mxu0 0.0
        %682 = vmatprep.subr.mxu0 0.0
        %683 = vmatpush1.msra.mxu0 0.0
        %684 = vmatprep.subr.mxu0 0.0
        %685 = vmatpush1.msra.mxu0 0.0
        %686 = vmatprep.subr.mxu0 0.0
        %687 = vmatpush1.msra.mxu0 0.0
        %688 = vmatprep.subr.mxu0 0.0
        %689 = vmatpush1.msra.mxu0 0.0
        %690 = vmatprep.subr.mxu0 0.0
        %691 = vmatpush1.msra.mxu0 0.0
        %692 = vmatprep.subr.mxu0 0.0
        %693 = vmatpush1.msra.mxu0 0.0
        %694 = vmatprep.subr.mxu0 0.0
        %695 = vmatpush1.msra.mxu0 0.0
        %696 = vmatprep.subr.mxu0 0.0
        %697 = vmatpush1.msra.mxu0 0.0
        %698 = vmatprep.subr.mxu0 0.0
        %699 = vmatpush1.msra.mxu0 0.0
        %700 = vmatprep.subr.mxu0 0.0
        %701 = vmatpush1.msra.mxu0 0.0
        %702 = vmatprep.subr.mxu0 0.0
        %703 = vmatpush1.msra.mxu0 0.0
        %704 = vmatprep.subr.mxu0 0.0
        %705 = vmatpush1.msra.mxu0 0.0
        %706 = vmatprep.subr.mxu0 0.0
        %707 = vmatpush1.msra.mxu0 0.0
        %708 = vmatprep.subr.mxu0 0.0
        %709 = vmatpush1.msra.mxu0 0.0
        %710 = vmatprep.subr.mxu0 0.0
        %711 = vmatpush1.msra.mxu0 0.0
        %712 = vmatprep.subr.mxu0 0.0
        %713 = vmatpush1.msra.mxu0 0.0
        %714 = vmatprep.subr.mxu0 0.0
        %715 = vmatpush1.msra.mxu0 0.0
        %716 = vmatprep.subr.mxu0 0.0
        %717 = vmatpush1.msra.mxu0 0.0
        %718 = vmatprep.subr.mxu0 0.0
        %719 = vmatpush1.msra.mxu0 0.0
        %720 = vmatprep.subr.mxu0 0.0
        %721 = vmatpush1.msra.mxu0 0.0
        %722 = vmatprep.subr.mxu0 0.0
        %723 = vmatpush1.msra.mxu0 0.0
        %724 = vmatprep.subr.mxu0 0.0
        %725 = vmatpush1.msra.mxu0 0.0
        %726 = vmatprep.subr.mxu0 0.0
        %727 = vmatpush1.msra.mxu0 0.0
        %728 = vmatprep.subr.mxu0 0.0
        %729 = vmatpush1.msra.mxu0 0.0
        %730 = vmatprep.subr.mxu0 0.0
        %731 = vmatpush1.msra.mxu0 0.0
        %732 = vmatprep.subr.mxu0 0.0
        %733 = vmatpush1.msra.mxu0 0.0
        %734 = vmatprep.subr.mxu0 0.0
        %735 = vmatpush1.msra.mxu0 0.0
        %736 = vmatprep.subr.mxu0 0.0
        %737 = vmatpush1.msra.mxu0 0.0
        %738 = vmatprep.mubr.f32.mxu0 0.0
        %739 = vmatmul.mubr.f32.gmra.mrb[0].mxu0 %v669
        %v740 = vpop.f32.mrb[0].mxu0
        %v741 = vadd.f32 0.0, %v740
        %v742 = vpop.f32.mrb[0].mxu0
        %v743 = vadd.f32 0.0, %v742
        %744 = vmatprep.mubr.f32.mxu0 0.0
        %745 = vmatmul.mubr.f32.gmra.mrb[0].mxu0 %v672
        %v746 = vpop.f32.mrb[0].mxu0
        %v747 = vadd.f32 0.0, %v746
        %v748 = vpop.f32.mrb[0].mxu0
        %v749 = vadd.f32 0.0, %v748
        %750 = vdwg.mxu0
        %v751 = vadd.f32 %v656, %v741
        %v752 = vadd.f32 %v657, %v743
        %v753 = vadd.f32 %v658, %v747
        %v754 = vadd.f32 %v659, %v749
        %s755 = scalar_lea.vmem %s1, 80
        %v756 = vld [vmem:[%s755] sm:$0xff]
        %v757 = vld [vmem:[%s755 + $0x8] sm:$0xff]
        %s758 = scalar_lea.vmem %s253, 160 [#allocation2]
        %v759 = vld [vmem:[%s758] sm:$0xff]
        %v760 = vld [vmem:[%s758 + $0x8] sm:$0xff]
        %v761 = vld [vmem:[%s758 + $0x10] sm:$0xff]
        %v762 = vld [vmem:[%s758 + $0x18] sm:$0xff]
        %v764 = vsel %vm303, %v756, 0
        %v767 = vsel %vm303, %v757, 0
        %769 = vmatprep.subr.mxu0 %v760
        %770 = vmatpush1.msra.mxu0 %v759
        %771 = vmatprep.subr.mxu0 %v762
        %772 = vmatpush1.msra.mxu0 %v761
        %773 = vmatprep.subr.mxu0 0.0
        %774 = vmatpush1.msra.mxu0 0.0
        %775 = vmatprep.subr.mxu0 0.0
        %776 = vmatpush1.msra.mxu0 0.0
        %777 = vmatprep.subr.mxu0 0.0
        %778 = vmatpush1.msra.mxu0 0.0
        %779 = vmatprep.subr.mxu0 0.0
        %780 = vmatpush1.msra.mxu0 0.0
        %781 = vmatprep.subr.mxu0 0.0
        %782 = vmatpush1.msra.mxu0 0.0
        %783 = vmatprep.subr.mxu0 0.0
        %784 = vmatpush1.msra.mxu0 0.0
        %785 = vmatprep.subr.mxu0 0.0
        %786 = vmatpush1.msra.mxu0 0.0
        %787 = vmatprep.subr.mxu0 0.0
        %788 = vmatpush1.msra.mxu0 0.0
        %789 = vmatprep.subr.mxu0 0.0
        %790 = vmatpush1.msra.mxu0 0.0
        %791 = vmatprep.subr.mxu0 0.0
        %792 = vmatpush1.msra.mxu0 0.0
        %793 = vmatprep.subr.mxu0 0.0
        %794 = vmatpush1.msra.mxu0 0.0
        %795 = vmatprep.subr.mxu0 0.0
        %796 = vmatpush1.msra.mxu0 0.0
        %797 = vmatprep.subr.mxu0 0.0
        %798 = vmatpush1.msra.mxu0 0.0
        %799 = vmatprep.subr.mxu0 0.0
        %800 = vmatpush1.msra.mxu0 0.0
        %801 = vmatprep.subr.mxu0 0.0
        %802 = vmatpush1.msra.mxu0 0.0
        %803 = vmatprep.subr.mxu0 0.0
        %804 = vmatpush1.msra.mxu0 0.0
        %805 = vmatprep.subr.mxu0 0.0
        %806 = vmatpush1.msra.mxu0 0.0
        %807 = vmatprep.subr.mxu0 0.0
        %808 = vmatpush1.msra.mxu0 0.0
        %809 = vmatprep.subr.mxu0 0.0
        %810 = vmatpush1.msra.mxu0 0.0
        %811 = vmatprep.subr.mxu0 0.0
        %812 = vmatpush1.msra.mxu0 0.0
        %813 = vmatprep.subr.mxu0 0.0
        %814 = vmatpush1.msra.mxu0 0.0
        %815 = vmatprep.subr.mxu0 0.0
        %816 = vmatpush1.msra.mxu0 0.0
        %817 = vmatprep.subr.mxu0 0.0
        %818 = vmatpush1.msra.mxu0 0.0
        %819 = vmatprep.subr.mxu0 0.0
        %820 = vmatpush1.msra.mxu0 0.0
        %821 = vmatprep.subr.mxu0 0.0
        %822 = vmatpush1.msra.mxu0 0.0
        %823 = vmatprep.subr.mxu0 0.0
        %824 = vmatpush1.msra.mxu0 0.0
        %825 = vmatprep.subr.mxu0 0.0
        %826 = vmatpush1.msra.mxu0 0.0
        %827 = vmatprep.subr.mxu0 0.0
        %828 = vmatpush1.msra.mxu0 0.0
        %829 = vmatprep.subr.mxu0 0.0
        %830 = vmatpush1.msra.mxu0 0.0
        %831 = vmatprep.subr.mxu0 0.0
        %832 = vmatpush1.msra.mxu0 0.0
        %833 = vmatprep.mubr.f32.mxu0 0.0
        %834 = vmatmul.mubr.f32.gmra.mrb[0].mxu0 %v764
        %v835 = vpop.f32.mrb[0].mxu0
        %v836 = vadd.f32 0.0, %v835
        %v837 = vpop.f32.mrb[0].mxu0
        %v838 = vadd.f32 0.0, %v837
        %839 = vmatprep.mubr.f32.mxu0 0.0
        %840 = vmatmul.mubr.f32.gmra.mrb[0].mxu0 %v767
        %v841 = vpop.f32.mrb[0].mxu0
        %v842 = vadd.f32 0.0, %v841
        %v843 = vpop.f32.mrb[0].mxu0
        %v844 = vadd.f32 0.0, %v843
        %845 = vdwg.mxu0
        %v846 = vadd.f32 %v751, %v836
        %v847 = vadd.f32 %v752, %v838
        %v848 = vadd.f32 %v753, %v842
        %v849 = vadd.f32 %v754, %v844
        %s850 = scalar_lea.vmem %s1, 96
        %v851 = vld [vmem:[%s850] sm:$0xff]
        %v852 = vld [vmem:[%s850 + $0x8] sm:$0xff]
        %s853 = scalar_lea.vmem %s253, 192 [#allocation2]
        %v854 = vld [vmem:[%s853] sm:$0xff]
        %v855 = vld [vmem:[%s853 + $0x8] sm:$0xff]
        %v856 = vld [vmem:[%s853 + $0x10] sm:$0xff]
        %v857 = vld [vmem:[%s853 + $0x18] sm:$0xff]
        %v859 = vsel %vm303, %v851, 0
        %v862 = vsel %vm303, %v852, 0
        %864 = vmatprep.subr.mxu0 %v855
        %865 = vmatpush1.msra.mxu0 %v854
        %866 = vmatprep.subr.mxu0 %v857
        %867 = vmatpush1.msra.mxu0 %v856
        %868 = vmatprep.subr.mxu0 0.0
        %869 = vmatpush1.msra.mxu0 0.0
        %870 = vmatprep.subr.mxu0 0.0
        %871 = vmatpush1.msra.mxu0 0.0
        %872 = vmatprep.subr.mxu0 0.0
        %873 = vmatpush1.msra.mxu0 0.0
        %874 = vmatprep.subr.mxu0 0.0
        %875 = vmatpush1.msra.mxu0 0.0
        %876 = vmatprep.subr.mxu0 0.0
        %877 = vmatpush1.msra.mxu0 0.0
        %878 = vmatprep.subr.mxu0 0.0
        %879 = vmatpush1.msra.mxu0 0.0
        %880 = vmatprep.subr.mxu0 0.0
        %881 = vmatpush1.msra.mxu0 0.0
        %882 = vmatprep.subr.mxu0 0.0
        %883 = vmatpush1.msra.mxu0 0.0
        %884 = vmatprep.subr.mxu0 0.0
        %885 = vmatpush1.msra.mxu0 0.0
        %886 = vmatprep.subr.mxu0 0.0
        %887 = vmatpush1.msra.mxu0 0.0
        %888 = vmatprep.subr.mxu0 0.0
        %889 = vmatpush1.msra.mxu0 0.0
        %890 = vmatprep.subr.mxu0 0.0
        %891 = vmatpush1.msra.mxu0 0.0
        %892 = vmatprep.subr.mxu0 0.0
        %893 = vmatpush1.msra.mxu0 0.0
        %894 = vmatprep.subr.mxu0 0.0
        %895 = vmatpush1.msra.mxu0 0.0
        %896 = vmatprep.subr.mxu0 0.0
        %897 = vmatpush1.msra.mxu0 0.0
        %898 = vmatprep.subr.mxu0 0.0
        %899 = vmatpush1.msra.mxu0 0.0
        %900 = vmatprep.subr.mxu0 0.0
        %901 = vmatpush1.msra.mxu0 0.0
        %902 = vmatprep.subr.mxu0 0.0
        %903 = vmatpush1.msra.mxu0 0.0
        %904 = vmatprep.subr.mxu0 0.0
        %905 = vmatpush1.msra.mxu0 0.0
        %906 = vmatprep.subr.mxu0 0.0
        %907 = vmatpush1.msra.mxu0 0.0
        %908 = vmatprep.subr.mxu0 0.0
        %909 = vmatpush1.msra.mxu0 0.0
        %910 = vmatprep.subr.mxu0 0.0
        %911 = vmatpush1.msra.mxu0 0.0
        %912 = vmatprep.subr.mxu0 0.0
        %913 = vmatpush1.msra.mxu0 0.0
        %914 = vmatprep.subr.mxu0 0.0
        %915 = vmatpush1.msra.mxu0 0.0
        %916 = vmatprep.subr.mxu0 0.0
        %917 = vmatpush1.msra.mxu0 0.0
        %918 = vmatprep.subr.mxu0 0.0
        %919 = vmatpush1.msra.mxu0 0.0
        %920 = vmatprep.subr.mxu0 0.0
        %921 = vmatpush1.msra.mxu0 0.0
        %922 = vmatprep.subr.mxu0 0.0
        %923 = vmatpush1.msra.mxu0 0.0
        %924 = vmatprep.subr.mxu0 0.0
        %925 = vmatpush1.msra.mxu0 0.0
        %926 = vmatprep.subr.mxu0 0.0
        %927 = vmatpush1.msra.mxu0 0.0
        %928 = vmatprep.mubr.f32.mxu0 0.0
        %929 = vmatmul.mubr.f32.gmra.mrb[0].mxu0 %v859
        %v930 = vpop.f32.mrb[0].mxu0
        %v931 = vadd.f32 0.0, %v930
        %v932 = vpop.f32.mrb[0].mxu0
        %v933 = vadd.f32 0.0, %v932
        %934 = vmatprep.mubr.f32.mxu0 0.0
        %935 = vmatmul.mubr.f32.gmra.mrb[0].mxu0 %v862
        %v936 = vpop.f32.mrb[0].mxu0
        %v937 = vadd.f32 0.0, %v936
        %v938 = vpop.f32.mrb[0].mxu0
        %v939 = vadd.f32 0.0, %v938
        %940 = vdwg.mxu0
        %v941 = vadd.f32 %v846, %v931
        %v942 = vadd.f32 %v847, %v933
        %v943 = vadd.f32 %v848, %v937
        %v944 = vadd.f32 %v849, %v939
        %s945 = scalar_lea.vmem %s1, 112
        %v946 = vld [vmem:[%s945] sm:$0xff]
        %v947 = vld [vmem:[%s945 + $0x8] sm:$0xff]
        %s948 = scalar_lea.vmem %s253, 224 [#allocation2]
        %v949 = vld [vmem:[%s948] sm:$0xff]
        %v950 = vld [vmem:[%s948 + $0x8] sm:$0xff]
        %v951 = vld [vmem:[%s948 + $0x10] sm:$0xff]
        %v952 = vld [vmem:[%s948 + $0x18] sm:$0xff]
        %v954 = vsel %vm303, %v946, 0
        %v957 = vsel %vm303, %v947, 0
        %959 = vmatprep.subr.mxu0 %v950
        %960 = vmatpush1.msra.mxu0 %v949
        %961 = vmatprep.subr.mxu0 %v952
        %962 = vmatpush1.msra.mxu0 %v951
        %963 = vmatprep.subr.mxu0 0.0
        %964 = vmatpush1.msra.mxu0 0.0
        %965 = vmatprep.subr.mxu0 0.0
        %966 = vmatpush1.msra.mxu0 0.0
        %967 = vmatprep.subr.mxu0 0.0
        %968 = vmatpush1.msra.mxu0 0.0
        %969 = vmatprep.subr.mxu0 0.0
        %970 = vmatpush1.msra.mxu0 0.0
        %971 = vmatprep.subr.mxu0 0.0
        %972 = vmatpush1.msra.mxu0 0.0
        %973 = vmatprep.subr.mxu0 0.0
        %974 = vmatpush1.msra.mxu0 0.0
        %975 = vmatprep.subr.mxu0 0.0
        %976 = vmatpush1.msra.mxu0 0.0
        %977 = vmatprep.subr.mxu0 0.0
        %978 = vmatpush1.msra.mxu0 0.0
        %979 = vmatprep.subr.mxu0 0.0
        %980 = vmatpush1.msra.mxu0 0.0
        %981 = vmatprep.subr.mxu0 0.0
        %982 = vmatpush1.msra.mxu0 0.0
        %983 = vmatprep.subr.mxu0 0.0
        %984 = vmatpush1.msra.mxu0 0.0
        %985 = vmatprep.subr.mxu0 0.0
        %986 = vmatpush1.msra.mxu0 0.0
        %987 = vmatprep.subr.mxu0 0.0
        %988 = vmatpush1.msra.mxu0 0.0
        %989 = vmatprep.subr.mxu0 0.0
        %990 = vmatpush1.msra.mxu0 0.0
        %991 = vmatprep.subr.mxu0 0.0
        %992 = vmatpush1.msra.mxu0 0.0
        %993 = vmatprep.subr.mxu0 0.0
        %994 = vmatpush1.msra.mxu0 0.0
        %995 = vmatprep.subr.mxu0 0.0
        %996 = vmatpush1.msra.mxu0 0.0
        %997 = vmatprep.subr.mxu0 0.0
        %998 = vmatpush1.msra.mxu0 0.0
        %999 = vmatprep.subr.mxu0 0.0
        %1000 = vmatpush1.msra.mxu0 0.0
        %1001 = vmatprep.subr.mxu0 0.0
        %1002 = vmatpush1.msra.mxu0 0.0
        %1003 = vmatprep.subr.mxu0 0.0
        %1004 = vmatpush1.msra.mxu0 0.0
        %1005 = vmatprep.subr.mxu0 0.0
        %1006 = vmatpush1.msra.mxu0 0.0
        %1007 = vmatprep.subr.mxu0 0.0
        %1008 = vmatpush1.msra.mxu0 0.0
        %1009 = vmatprep.subr.mxu0 0.0
        %1010 = vmatpush1.msra.mxu0 0.0
        %1011 = vmatprep.subr.mxu0 0.0
        %1012 = vmatpush1.msra.mxu0 0.0
        %1013 = vmatprep.subr.mxu0 0.0
        %1014 = vmatpush1.msra.mxu0 0.0
        %1015 = vmatprep.subr.mxu0 0.0
        %1016 = vmatpush1.msra.mxu0 0.0
        %1017 = vmatprep.subr.mxu0 0.0
        %1018 = vmatpush1.msra.mxu0 0.0
        %1019 = vmatprep.subr.mxu0 0.0
        %1020 = vmatpush1.msra.mxu0 0.0
        %1021 = vmatprep.subr.mxu0 0.0
        %1022 = vmatpush1.msra.mxu0 0.0
        %1023 = vmatprep.mubr.f32.mxu0 0.0
        %1024 = vmatmul.mubr.f32.gmra.mrb[0].mxu0 %v954
        %v1025 = vpop.f32.mrb[0].mxu0
        %v1026 = vadd.f32 0.0, %v1025
        %v1027 = vpop.f32.mrb[0].mxu0
        %v1028 = vadd.f32 0.0, %v1027
        %1029 = vmatprep.mubr.f32.mxu0 0.0
        %1030 = vmatmul.mubr.f32.gmra.mrb[0].mxu0 %v957
        %v1031 = vpop.f32.mrb[0].mxu0
        %v1032 = vadd.f32 0.0, %v1031
        %v1033 = vpop.f32.mrb[0].mxu0
        %v1034 = vadd.f32 0.0, %v1033
        %1035 = vdwg.mxu0
        %v1036 = vadd.f32 %v941, %v1026
        %v1037 = vadd.f32 %v942, %v1028
        %v1038 = vadd.f32 %v943, %v1032
        %v1039 = vadd.f32 %v944, %v1034
        %s1040 = scalar_lea.vmem %s1, 128
        %v1041 = vld [vmem:[%s1040] sm:$0xff]
        %v1042 = vld [vmem:[%s1040 + $0x8] sm:$0xff]
        %s1043 = scalar_lea.vmem %s253, 256 [#allocation2]
        %v1044 = vld [vmem:[%s1043] sm:$0xff]
        %v1045 = vld [vmem:[%s1043 + $0x8] sm:$0xff]
        %v1046 = vld [vmem:[%s1043 + $0x10] sm:$0xff]
        %v1047 = vld [vmem:[%s1043 + $0x18] sm:$0xff]
        %v1049 = vsel %vm303, %v1041, 0
        %v1052 = vsel %vm303, %v1042, 0
        %1054 = vmatprep.subr.mxu0 %v1045
        %1055 = vmatpush1.msra.mxu0 %v1044
        %1056 = vmatprep.subr.mxu0 %v1047
        %1057 = vmatpush1.msra.mxu0 %v1046
        %1058 = vmatprep.subr.mxu0 0.0
        %1059 = vmatpush1.msra.mxu0 0.0
        %1060 = vmatprep.subr.mxu0 0.0
        %1061 = vmatpush1.msra.mxu0 0.0
        %1062 = vmatprep.subr.mxu0 0.0
        %1063 = vmatpush1.msra.mxu0 0.0
        %1064 = vmatprep.subr.mxu0 0.0
        %1065 = vmatpush1.msra.mxu0 0.0
        %1066 = vmatprep.subr.mxu0 0.0
        %1067 = vmatpush1.msra.mxu0 0.0
        %1068 = vmatprep.subr.mxu0 0.0
        %1069 = vmatpush1.msra.mxu0 0.0
        %1070 = vmatprep.subr.mxu0 0.0
        %1071 = vmatpush1.msra.mxu0 0.0
        %1072 = vmatprep.subr.mxu0 0.0
        %1073 = vmatpush1.msra.mxu0 0.0
        %1074 = vmatprep.subr.mxu0 0.0
        %1075 = vmatpush1.msra.mxu0 0.0
        %1076 = vmatprep.subr.mxu0 0.0
        %1077 = vmatpush1.msra.mxu0 0.0
        %1078 = vmatprep.subr.mxu0 0.0
        %1079 = vmatpush1.msra.mxu0 0.0
        %1080 = vmatprep.subr.mxu0 0.0
        %1081 = vmatpush1.msra.mxu0 0.0
        %1082 = vmatprep.subr.mxu0 0.0
        %1083 = vmatpush1.msra.mxu0 0.0
        %1084 = vmatprep.subr.mxu0 0.0
        %1085 = vmatpush1.msra.mxu0 0.0
        %1086 = vmatprep.subr.mxu0 0.0
        %1087 = vmatpush1.msra.mxu0 0.0
        %1088 = vmatprep.subr.mxu0 0.0
        %1089 = vmatpush1.msra.mxu0 0.0
        %1090 = vmatprep.subr.mxu0 0.0
        %1091 = vmatpush1.msra.mxu0 0.0
        %1092 = vmatprep.subr.mxu0 0.0
        %1093 = vmatpush1.msra.mxu0 0.0
        %1094 = vmatprep.subr.mxu0 0.0
        %1095 = vmatpush1.msra.mxu0 0.0
        %1096 = vmatprep.subr.mxu0 0.0
        %1097 = vmatpush1.msra.mxu0 0.0
        %1098 = vmatprep.subr.mxu0 0.0
        %1099 = vmatpush1.msra.mxu0 0.0
        %1100 = vmatprep.subr.mxu0 0.0
        %1101 = vmatpush1.msra.mxu0 0.0
        %1102 = vmatprep.subr.mxu0 0.0
        %1103 = vmatpush1.msra.mxu0 0.0
        %1104 = vmatprep.subr.mxu0 0.0
        %1105 = vmatpush1.msra.mxu0 0.0
        %1106 = vmatprep.subr.mxu0 0.0
        %1107 = vmatpush1.msra.mxu0 0.0
        %1108 = vmatprep.subr.mxu0 0.0
        %1109 = vmatpush1.msra.mxu0 0.0
        %1110 = vmatprep.subr.mxu0 0.0
        %1111 = vmatpush1.msra.mxu0 0.0
        %1112 = vmatprep.subr.mxu0 0.0
        %1113 = vmatpush1.msra.mxu0 0.0
        %1114 = vmatprep.subr.mxu0 0.0
        %1115 = vmatpush1.msra.mxu0 0.0
        %1116 = vmatprep.subr.mxu0 0.0
        %1117 = vmatpush1.msra.mxu0 0.0
        %1118 = vmatprep.mubr.f32.mxu0 0.0
        %1119 = vmatmul.mubr.f32.gmra.mrb[0].mxu0 %v1049
        %v1120 = vpop.f32.mrb[0].mxu0
        %v1121 = vadd.f32 0.0, %v1120
        %v1122 = vpop.f32.mrb[0].mxu0
        %v1123 = vadd.f32 0.0, %v1122
        %1124 = vmatprep.mubr.f32.mxu0 0.0
        %1125 = vmatmul.mubr.f32.gmra.mrb[0].mxu0 %v1052
        %v1126 = vpop.f32.mrb[0].mxu0
        %v1127 = vadd.f32 0.0, %v1126
        %v1128 = vpop.f32.mrb[0].mxu0
        %v1129 = vadd.f32 0.0, %v1128
        %1130 = vdwg.mxu0
        %v1131 = vadd.f32 %v1036, %v1121
        %v1132 = vadd.f32 %v1037, %v1123
        %v1133 = vadd.f32 %v1038, %v1127
        %v1134 = vadd.f32 %v1039, %v1129
        %v1135 = vld [vmem:[%s2] sm:$0xff]
        %v1136 = vld [vmem:[%s2 + $0x8] sm:$0xff]
        %1138 = vset.pattern.permute.xlu0 0
        %1139 = vperm.xlu0 %1138, %v1135
        %v1140 = vpop.permute.xlu0 %1139
        %1143 = vset.pattern.permute.xlu0 0
        %1144 = vperm.xlu0 %1143, %v1136
        %v1145 = vpop.permute.xlu0 %1144
        %v1147 = vadd.f32 %v1131, %v1140
        %v1148 = vadd.f32 %v1132, %v1140
        %v1149 = vadd.f32 %v1133, %v1145
        %v1150 = vadd.f32 %v1134, %v1145
        %v1151 = vadd.f32 %v1147, 3.0
        %v1152 = vadd.f32 %v1148, 3.0
        %v1153 = vadd.f32 %v1149, 3.0
        %v1154 = vadd.f32 %v1150, 3.0
        %v1155 = vmax.f32 %v1151, 0.0
        %v1156 = vmax.f32 %v1152, 0.0
        %v1157 = vmax.f32 %v1153, 0.0
        %v1158 = vmax.f32 %v1154, 0.0
        %v1159 = vmin.f32 %v1155, 6.0
        %v1160 = vmin.f32 %v1156, 6.0
        %v1161 = vmin.f32 %v1157, 6.0
        %v1162 = vmin.f32 %v1158, 6.0
        %v1163 = vmul.f32 %v1147, %v1159
        %v1164 = vmul.f32 %v1148, %v1160
        %v1165 = vmul.f32 %v1149, %v1161
        %v1166 = vmul.f32 %v1150, %v1162
        %v1167 = vmul.f32 %v1163, 0.16666667
        %v1168 = vmul.f32 %v1164, 0.16666667
        %v1169 = vmul.f32 %v1165, 0.16666667
        %v1170 = vmul.f32 %v1166, 0.16666667
        %1171 = vst [vmem:[%s287] sm:$0xff] %v1167
        %1172 = vst [vmem:[%s287 + $0x8] sm:$0xff] %v1168
        %1173 = vst [vmem:[%s287 + $0x10] sm:$0xff] %v1169
        %1174 = vst [vmem:[%s287 + $0x18] sm:$0xff] %v1170
        %s1175 = smul.u32 2, %s19
        %p1176 = scmp.lt.s32.totalorder %s18, 1
        %s1177 = scalar_select %p1176, %s18, 1
        %p1178 = scmp.lt.s32.totalorder %s1175, 1
        %s1179 = scalar_select %p1178, %s1175, 1
        %s1180 = smul.addr %s1177, 4
        %s1181 = sadd.s32 %s1179, %s1180
        %s1182 = smul.addr %s1181, 8
        %s1183 = scalar_lea.vmem %s3, %s1182
        // Predicated region
        $region56: #{c1_forward_pallas.4} parent=50 // pred_check
          %p1184 = pneg %p116
        $region57: #{c1_forward_pallas.4} parent=50 // pred_check_branch
          %1186 = sbr.rel (%p1184) target = $region59
        $region58: #{c1_forward_pallas.4} parent=50 // pred_region
          %s1187 = smul.u32 2, %s19
        $region59: #{c1_forward_pallas.4} parent=50 // pred_fallthru
          _
      $region51: #{c1_forward_pallas.4} parent=5 // pred_fallthru
        _
      %p1188 = scmp.le.s32.totalorder 2, %s9
      // Predicated region
      $region60: #{c1_forward_pallas.4} parent=5 // pred_check
        %p1189 = pneg %p1188
      $region61: #{c1_forward_pallas.4} parent=5 // pred_check_branch
        %1191 = sbr.rel (%p1189) target = $region63
      $region62: #{c1_forward_pallas.4} parent=5 // pred_region
        %s1192 = ssub.s32 %s9, 2
        // Predicated region
        $region64: #{c1_forward_pallas.4} parent=62 // pred_check
          %p1193 = pneg %p122
        $region65: #{c1_forward_pallas.4} parent=62 // pred_check_branch
          %1195 = sbr.rel (%p1193) target = $region67
        $region66: #{c1_forward_pallas.4} parent=62 // pred_region
          %s1196 = smul.u32 2, %s21
          %p1197 = scmp.lt.s32.totalorder %s20, 1
          %s1198 = scalar_select %p1197, %s20, 1
          %p1199 = scmp.lt.s32.totalorder %s1196, 1
          %s1200 = scalar_select %p1199, %s1196, 1
          %s1201 = smul.addr %s1198, 4
          %s1202 = sadd.s32 %s1200, %s1201
          %s1203 = smul.addr %s1202, 8
          %s1204 = scalar_lea.vmem %s3, %s1203
        $region67: #{c1_forward_pallas.4} parent=62 // pred_fallthru
          _
      $region63: #{c1_forward_pallas.4} parent=5 // pred_fallthru
        _
    $region6: #{c1_forward_pallas.4} parent=1 // loop_footer
      %s13 = sadd.s32 1, %s9
    $region7: #{c1_forward_pallas.4} parent=1 // loop_footer_branch
      %8 = sbr.rel target = $region3
    $region8: #{c1_forward_pallas.4} parent=1 // loop_exit
      _

// kernel: c1_forward_pallas.5
$region0: #{c1_forward_pallas.5}
  #allocation0 [shape = 'u32[]', space=smem, size = 0x4, offset = 0x4, fixed_abs, tag = 'smem constant byte address 0x4 - core index']
  #allocation1 [shape = 'u32[144,128]{1,0:T(1,128)}', space=vmem, size = 0x12000, scoped, tag = 'internal scratch']
  %s0 = inlined_call_operand.vmem [shape: f32[9,2,16,256], index: 0, kind: input, shape index: {}]
  %s1 = inlined_call_operand.vmem [shape: f32[9,16,16], index: 1, kind: input, shape index: {}]
  %s2 = inlined_call_operand.vmem [shape: f32[16,1], index: 2, kind: input, shape index: {}]
  %s3 = inlined_call_operand.vmem [shape: f32[2,16,256], index: 3, kind: input, shape index: {}]
  %s4 = inlined_call_operand.vmem [shape: f32[2,16,256], index: 4, kind: output, shape index: {}]
  %s5 = sld [smem:[#allocation0]]
  $region72: #{c1_forward_pallas.5} parent=0
    _
  %s7 = ssub.s32 1, %s5
  %s8 = scalar_select 0, %s7, %s5
  $region1: #{c1_forward_pallas.5} parent=0
    #allocation2 [shape = 'u8[294912]{0}', space=vmem, size = 0x48000, scoped, tag = 'input window, operand 0']
    loop: start=0, step=1, limit=4
    $region2: #{c1_forward_pallas.5} parent=1 // loop_pre_header
      _
    $region3: #{c1_forward_pallas.5} parent=1 // loop_header
      %s10 = sphi 0, %s14
      %p11 = scmp.ge.s32.totalorder %s10, 4
      %s17 = sphi 0, %s29
      %s18 = sphi 0, %s25
      %s19 = sphi 0, %s17
      %s20 = sphi 0, %s18
      %s21 = sphi 0, %s19
      %s22 = sphi 0, %s20
      %s34 = sphi 0, %s36
      %s37 = sphi 0, %s34
      %s38 = sphi 0, %s37
      %s54 = sphi 0, %s38
      %s58 = sphi 0, %s58
      %s60 = sphi 0, %s58
      %s61 = sphi 0, %s60
      %s75 = sphi 0, %s61
      %s79 = sphi 0, %s79
      %s81 = sphi 0, %s79
      %s82 = sphi 0, %s81
      %s96 = sphi 0, %s82
      %s104 = sphi 0, %s106
      %s107 = sphi 0, %s104
      %s108 = sphi 0, %s107
      %s124 = sphi 0, %s108
      %s132 = sphi 0, %s134
      %s135 = sphi 0, %s132
      %s136 = sphi 0, %s135
      %s152 = sphi 0, %s136
    $region4: #{c1_forward_pallas.5} parent=1 // loop_header_branch
      %13 = sbr.rel (%p11) target = $region8
    $region5: #{c1_forward_pallas.5} parent=1 // loop_body
      %s15 = ssub.s32 %s10, 1
      %s16 = ssub.s32 %s10, 2
      %s23 = sadd.s32 1, %s18
      %p24 = scmp.ge.s32.totalorder %s23, 1
      %s25 = scalar_select %p24, 0, %s23
      %s26 = sadd.s32 1, %s17
      %s27 = scalar_select %p24, %s26, %s17
      %p28 = scmp.ge.s32.totalorder %s27, 2
      %s29 = scalar_select %p28, 0, %s27
      %s30 = ssub.s32 %s17, %s29
      %s31 = ssub.s32 %s18, %s25
      %s32 = sor.u32 %s30, %s31
      %p33 = scmp.eq.s32.totalorder %s32, 0
      %s35 = sadd.s32 %s34, 1
      %s36 = scalar_select %p33, %s34, %s35
      %p39 = pneg %p33
      %p40 = scmp.eq.s32.totalorder %s10, 1
      %p41 = por %p39, %p40
      %p42 = scmp.ne.s32.totalorder %s34, %s37
      %p43 = scmp.eq.s32.totalorder %s10, 0
      %p44 = por %p42, %p43
      %p45 = scmp.ne.s32.totalorder %s34, %s37
      %p46 = scmp.eq.s32.totalorder %s15, 1
      %p47 = por %p45, %p46
      %p48 = scmp.ne.s32.totalorder %s37, %s38
      %p49 = scmp.eq.s32.totalorder %s15, 0
      %p50 = por %p48, %p49
      %p51 = scmp.ne.s32.totalorder %s37, %s38
      %p52 = scmp.eq.s32.totalorder %s16, 1
      %p53 = por %p51, %p52
      %p55 = scmp.ne.s32.totalorder %s38, %s54
      %p56 = scmp.eq.s32.totalorder %s16, 0
      %p57 = por %p55, %p56
      %s59 = sadd.s32 %s58, 1
      %p62 = scmp.eq.s32.totalorder %s10, 1
      %p63 = scmp.ne.s32.totalorder %s58, %s60
      %p64 = scmp.eq.s32.totalorder %s10, 0
      %p65 = por %p63, %p64
      %p66 = scmp.ne.s32.totalorder %s58, %s60
      %p67 = scmp.eq.s32.totalorder %s15, 1
      %p68 = por %p66, %p67
      %p69 = scmp.ne.s32.totalorder %s60, %s61
      %p70 = scmp.eq.s32.totalorder %s15, 0
      %p71 = por %p69, %p70
      %p72 = scmp.ne.s32.totalorder %s60, %s61
      %p73 = scmp.eq.s32.totalorder %s16, 1
      %p74 = por %p72, %p73
      %p76 = scmp.ne.s32.totalorder %s61, %s75
      %p77 = scmp.eq.s32.totalorder %s16, 0
      %p78 = por %p76, %p77
      %s80 = sadd.s32 %s79, 1
      %p83 = scmp.eq.s32.totalorder %s10, 1
      %p84 = scmp.ne.s32.totalorder %s79, %s81
      %p85 = scmp.eq.s32.totalorder %s10, 0
      %p86 = por %p84, %p85
      %p87 = scmp.ne.s32.totalorder %s79, %s81
      %p88 = scmp.eq.s32.totalorder %s15, 1
      %p89 = por %p87, %p88
      %p90 = scmp.ne.s32.totalorder %s81, %s82
      %p91 = scmp.eq.s32.totalorder %s15, 0
      %p92 = por %p90, %p91
      %p93 = scmp.ne.s32.totalorder %s81, %s82
      %p94 = scmp.eq.s32.totalorder %s16, 1
      %p95 = por %p93, %p94
      %p97 = scmp.ne.s32.totalorder %s82, %s96
      %p98 = scmp.eq.s32.totalorder %s16, 0
      %p99 = por %p97, %p98
      %s100 = ssub.s32 %s17, %s29
      %s101 = ssub.s32 %s18, %s25
      %s102 = sor.u32 %s100, %s101
      %p103 = scmp.eq.s32.totalorder %s102, 0
      %s105 = sadd.s32 %s104, 1
      %s106 = scalar_select %p103, %s104, %s105
      %p109 = pneg %p103
      %p110 = scmp.eq.s32.totalorder %s10, 1
      %p111 = por %p109, %p110
      %p112 = scmp.ne.s32.totalorder %s104, %s107
      %p113 = scmp.eq.s32.totalorder %s10, 0
      %p114 = por %p112, %p113
      %p115 = scmp.ne.s32.totalorder %s104, %s107
      %p116 = scmp.eq.s32.totalorder %s15, 1
      %p117 = por %p115, %p116
      %p118 = scmp.ne.s32.totalorder %s107, %s108
      %p119 = scmp.eq.s32.totalorder %s15, 0
      %p120 = por %p118, %p119
      %p121 = scmp.ne.s32.totalorder %s107, %s108
      %p122 = scmp.eq.s32.totalorder %s16, 1
      %p123 = por %p121, %p122
      %p125 = scmp.ne.s32.totalorder %s108, %s124
      %p126 = scmp.eq.s32.totalorder %s16, 0
      %p127 = por %p125, %p126
      %s128 = ssub.s32 %s17, %s29
      %s129 = ssub.s32 %s18, %s25
      %s130 = sor.u32 %s128, %s129
      %p131 = scmp.eq.s32.totalorder %s130, 0
      %s133 = sadd.s32 %s132, 1
      %s134 = scalar_select %p131, %s132, %s133
      %p137 = pneg %p131
      %p138 = scmp.eq.s32.totalorder %s10, 1
      %p139 = por %p137, %p138
      %p140 = scmp.ne.s32.totalorder %s132, %s135
      %p141 = scmp.eq.s32.totalorder %s10, 0
      %p142 = por %p140, %p141
      %p143 = scmp.ne.s32.totalorder %s132, %s135
      %p144 = scmp.eq.s32.totalorder %s15, 1
      %p145 = por %p143, %p144
      %p146 = scmp.ne.s32.totalorder %s135, %s136
      %p147 = scmp.eq.s32.totalorder %s15, 0
      %p148 = por %p146, %p147
      %p149 = scmp.ne.s32.totalorder %s135, %s136
      %p150 = scmp.eq.s32.totalorder %s16, 1
      %p151 = por %p149, %p150
      %p153 = scmp.ne.s32.totalorder %s136, %s152
      %p154 = scmp.eq.s32.totalorder %s16, 0
      %p155 = por %p153, %p154
      %p156 = scmp.le.s32.totalorder 1, %s10
      %p157 = scmp.lt.s32.totalorder %s10, 3
      %p158 = pnand %p156, %p157
      %p159 = pneg %p158
      // Predicated region
      $region9: #{c1_forward_pallas.5} parent=5 // pred_check
        _
      $region10: #{c1_forward_pallas.5} parent=5 // pred_check_branch
        %161 = sbr.rel (%p158) target = $region12
      $region11: #{c1_forward_pallas.5} parent=5 // pred_region
        %s162 = ssub.s32 %s10, 1
        // Predicated region
        $region13: #{c1_forward_pallas.5} parent=11 // pred_check
          %p163 = pneg %p71
        $region14: #{c1_forward_pallas.5} parent=11 // pred_check_branch
          %165 = sbr.rel (%p163) target = $region16
        $region15: #{c1_forward_pallas.5} parent=11 // pred_region
          _
        $region16: #{c1_forward_pallas.5} parent=11 // pred_fallthru
          _
        // Predicated region
        $region17: #{c1_forward_pallas.5} parent=11 // pred_check
          %p166 = pneg %p92
        $region18: #{c1_forward_pallas.5} parent=11 // pred_check_branch
          %168 = sbr.rel (%p166) target = $region20
        $region19: #{c1_forward_pallas.5} parent=11 // pred_region
          _
        $region20: #{c1_forward_pallas.5} parent=11 // pred_fallthru
          _
      $region12: #{c1_forward_pallas.5} parent=5 // pred_fallthru
        _
      %p169 = scmp.lt.s32.totalorder %s10, 2
      // Predicated region
      $region21: #{c1_forward_pallas.5} parent=5 // pred_check
        %p170 = pneg %p169
      $region22: #{c1_forward_pallas.5} parent=5 // pred_check_branch
        %172 = sbr.rel (%p170) target = $region24
      $region23: #{c1_forward_pallas.5} parent=5 // pred_region
        // Predicated region
        $region25: #{c1_forward_pallas.5} parent=23 // pred_check
          %p173 = pneg %p44
        $region26: #{c1_forward_pallas.5} parent=23 // pred_check_branch
          %175 = sbr.rel (%p173) target = $region28
        $region27: #{c1_forward_pallas.5} parent=23 // pred_region
          %s176 = sand.u32 %s34, 1
          %s177 = sand.u32 %s34, 1
          %s178 = smul.addr %s177, 288
          %s179 = scalar_lea.vmem [#allocation2], %s178
          %s180 = smul.u32 2, %s18
          %s181 = smul.addr %s17, 4
          %s182 = sadd.s32 %s180, %s181
          %s183 = smul.addr %s182, 8
          %s184 = scalar_lea.vmem %s0, %s183
          // Predicated region
          $region29: #{c1_forward_pallas.5} parent=27 // pred_check
            _
          $region30: #{c1_forward_pallas.5} parent=27 // pred_check_branch
            %186 = sbr.rel (0) target = $region32
          $region31: #{c1_forward_pallas.5} parent=27 // pred_region
            // Predicated region
            $region33: #{c1_forward_pallas.5} parent=31 // pred_check
              _
            $region34: #{c1_forward_pallas.5} parent=31 // pred_check_branch
              %188 = sbr.rel (0) target = $region36
            $region35: #{c1_forward_pallas.5} parent=31 // pred_region
              loop: start=0, step=1, limit=1
              $region37: #{c1_forward_pallas.5} parent=35 // loop_pre_header
                _
              $region38: #{c1_forward_pallas.5} parent=35 // loop_header
                %s190 = sphi 0, %s194
                %p191 = scmp.ge.s32.totalorder %s190, 1
                %s195 = sphi %s184, %s184
                %s196 = sphi %s179, %s179
              $region39: #{c1_forward_pallas.5} parent=35 // loop_header_branch
                %193 = sbr.rel (%p191) target = $region43
              $region40: #{c1_forward_pallas.5} parent=35 // loop_body
                %v197 = vld [vmem:[%s195] sm:$0xff]
                %198 = vst [vmem:[%s196] sm:$0xff] %v197
                %v199 = vld [vmem:[%s195 + $0x8] sm:$0xff]
                %200 = vst [vmem:[%s196 + $0x8] sm:$0xff] %v199
                %v201 = vld [vmem:[%s195 + $0x10] sm:$0xff]
                %202 = vst [vmem:[%s196 + $0x10] sm:$0xff] %v201
                %v203 = vld [vmem:[%s195 + $0x18] sm:$0xff]
                %204 = vst [vmem:[%s196 + $0x18] sm:$0xff] %v203
                %v205 = vld [vmem:[%s195 + $0x40] sm:$0xff]
                %206 = vst [vmem:[%s196 + $0x20] sm:$0xff] %v205
                %v207 = vld [vmem:[%s195 + $0x48] sm:$0xff]
                %208 = vst [vmem:[%s196 + $0x28] sm:$0xff] %v207
                %v209 = vld [vmem:[%s195 + $0x50] sm:$0xff]
                %210 = vst [vmem:[%s196 + $0x30] sm:$0xff] %v209
                %v211 = vld [vmem:[%s195 + $0x58] sm:$0xff]
                %212 = vst [vmem:[%s196 + $0x38] sm:$0xff] %v211
                %v213 = vld [vmem:[%s195 + $0x80] sm:$0xff]
                %214 = vst [vmem:[%s196 + $0x40] sm:$0xff] %v213
                %v215 = vld [vmem:[%s195 + $0x88] sm:$0xff]
                %216 = vst [vmem:[%s196 + $0x48] sm:$0xff] %v215
                %v217 = vld [vmem:[%s195 + $0x90] sm:$0xff]
                %218 = vst [vmem:[%s196 + $0x50] sm:$0xff] %v217
                %v219 = vld [vmem:[%s195 + $0x98] sm:$0xff]
                %220 = vst [vmem:[%s196 + $0x58] sm:$0xff] %v219
                %v221 = vld [vmem:[%s195 + $0xc0] sm:$0xff]
                %222 = vst [vmem:[%s196 + $0x60] sm:$0xff] %v221
                %v223 = vld [vmem:[%s195 + $0xc8] sm:$0xff]
                %224 = vst [vmem:[%s196 + $0x68] sm:$0xff] %v223
                %v225 = vld [vmem:[%s195 + $0xd0] sm:$0xff]
                %226 = vst [vmem:[%s196 + $0x70] sm:$0xff] %v225
                %v227 = vld [vmem:[%s195 + $0xd8] sm:$0xff]
                %228 = vst [vmem:[%s196 + $0x78] sm:$0xff] %v227
                %v229 = vld [vmem:[%s195 + $0x100] sm:$0xff]
                %230 = vst [vmem:[%s196 + $0x80] sm:$0xff] %v229
                %v231 = vld [vmem:[%s195 + $0x108] sm:$0xff]
                %232 = vst [vmem:[%s196 + $0x88] sm:$0xff] %v231
                %v233 = vld [vmem:[%s195 + $0x110] sm:$0xff]
                %234 = vst [vmem:[%s196 + $0x90] sm:$0xff] %v233
                %v235 = vld [vmem:[%s195 + $0x118] sm:$0xff]
                %236 = vst [vmem:[%s196 + $0x98] sm:$0xff] %v235
                %v237 = vld [vmem:[%s195 + $0x140] sm:$0xff]
                %238 = vst [vmem:[%s196 + $0xa0] sm:$0xff] %v237
                %v239 = vld [vmem:[%s195 + $0x148] sm:$0xff]
                %240 = vst [vmem:[%s196 + $0xa8] sm:$0xff] %v239
                %v241 = vld [vmem:[%s195 + $0x150] sm:$0xff]
                %242 = vst [vmem:[%s196 + $0xb0] sm:$0xff] %v241
                %v243 = vld [vmem:[%s195 + $0x158] sm:$0xff]
                %244 = vst [vmem:[%s196 + $0xb8] sm:$0xff] %v243
                %v245 = vld [vmem:[%s195 + $0x180] sm:$0xff]
                %246 = vst [vmem:[%s196 + $0xc0] sm:$0xff] %v245
                %v247 = vld [vmem:[%s195 + $0x188] sm:$0xff]
                %248 = vst [vmem:[%s196 + $0xc8] sm:$0xff] %v247
                %v249 = vld [vmem:[%s195 + $0x190] sm:$0xff]
                %250 = vst [vmem:[%s196 + $0xd0] sm:$0xff] %v249
                %v251 = vld [vmem:[%s195 + $0x198] sm:$0xff]
                %252 = vst [vmem:[%s196 + $0xd8] sm:$0xff] %v251
                %v253 = vld [vmem:[%s195 + $0x1c0] sm:$0xff]
                %254 = vst [vmem:[%s196 + $0xe0] sm:$0xff] %v253
                %v255 = vld [vmem:[%s195 + $0x1c8] sm:$0xff]
                %256 = vst [vmem:[%s196 + $0xe8] sm:$0xff] %v255
                %v257 = vld [vmem:[%s195 + $0x1d0] sm:$0xff]
                %258 = vst [vmem:[%s196 + $0xf0] sm:$0xff] %v257
                %v259 = vld [vmem:[%s195 + $0x1d8] sm:$0xff]
                %260 = vst [vmem:[%s196 + $0xf8] sm:$0xff] %v259
                %v261 = vld [vmem:[%s195 + $0x200] sm:$0xff]
                %262 = vst [vmem:[%s196 + $0x100] sm:$0xff] %v261
                %v263 = vld [vmem:[%s195 + $0x208] sm:$0xff]
                %264 = vst [vmem:[%s196 + $0x108] sm:$0xff] %v263
                %v265 = vld [vmem:[%s195 + $0x210] sm:$0xff]
                %266 = vst [vmem:[%s196 + $0x110] sm:$0xff] %v265
                %v267 = vld [vmem:[%s195 + $0x218] sm:$0xff]
                %268 = vst [vmem:[%s196 + $0x118] sm:$0xff] %v267
              $region41: #{c1_forward_pallas.5} parent=35 // loop_footer
                %s194 = sadd.s32 1, %s190
              $region42: #{c1_forward_pallas.5} parent=35 // loop_footer_branch
                %189 = sbr.rel target = $region38
              $region43: #{c1_forward_pallas.5} parent=35 // loop_exit
                _
            $region36: #{c1_forward_pallas.5} parent=31 // pred_fallthru
              _
            // Predicated region
            $region44: #{c1_forward_pallas.5} parent=31 // pred_check
              _
            $region45: #{c1_forward_pallas.5} parent=31 // pred_check_branch
              %270 = sbr.rel target = $region47
            $region46: #{c1_forward_pallas.5} parent=31 // pred_region
              _
            $region47: #{c1_forward_pallas.5} parent=31 // pred_fallthru
              _
          $region32: #{c1_forward_pallas.5} parent=27 // pred_fallthru
            _
          %271 = vnop
        $region28: #{c1_forward_pallas.5} parent=23 // pred_fallthru
          _
        // Predicated region
        $region48: #{c1_forward_pallas.5} parent=23 // pred_check
          %p272 = pneg %p114
        $region49: #{c1_forward_pallas.5} parent=23 // pred_check_branch
          %274 = sbr.rel (%p272) target = $region51
        $region50: #{c1_forward_pallas.5} parent=23 // pred_region
          %s275 = smul.u32 2, %s18
          %p276 = scmp.lt.s32.totalorder %s17, 1
          %s277 = scalar_select %p276, %s17, 1
          %p278 = scmp.lt.s32.totalorder %s275, 1
          %s279 = scalar_select %p278, %s275, 1
          %s280 = smul.addr %s277, 4
          %s281 = sadd.s32 %s279, %s280
          %s282 = smul.addr %s281, 8
          %s283 = scalar_lea.vmem %s3, %s282
          %s284 = smul.u32 2, %s18
        $region51: #{c1_forward_pallas.5} parent=23 // pred_fallthru
          _
      $region24: #{c1_forward_pallas.5} parent=5 // pred_fallthru
        _
      %p285 = scmp.le.s32.totalorder 1, %s10
      %p286 = scmp.lt.s32.totalorder %s10, 3
      %p287 = pnand %p285, %p286
      %p288 = pneg %p287
      // Predicated region
      $region52: #{c1_forward_pallas.5} parent=5 // pred_check
        _
      $region53: #{c1_forward_pallas.5} parent=5 // pred_check_branch
        %290 = sbr.rel (%p287) target = $region55
      $region54: #{c1_forward_pallas.5} parent=5 // pred_region
        %s291 = ssub.s32 %s10, 1
        %s292 = sand.u32 %s37, 1
        %s293 = sand.u32 %s37, 1
        %s294 = smul.addr %s293, 288
        %s295 = scalar_lea.vmem [#allocation2], %s294
        // Predicated region
        $region56: #{c1_forward_pallas.5} parent=54 // pred_check
          %p296 = pneg %p50
        $region57: #{c1_forward_pallas.5} parent=54 // pred_check_branch
          %298 = sbr.rel (%p296) target = $region59
        $region58: #{c1_forward_pallas.5} parent=54 // pred_region
          _
        $region59: #{c1_forward_pallas.5} parent=54 // pred_fallthru
          _
        %s299 = sand.u32 %s37, 1
        %s300 = sand.u32 %s37, 1
        %s301 = smul.addr %s300, 288
        %s302 = scalar_lea.vmem [#allocation2], %s301
        %p303 = pneg %p50
        %p304 = pneg %p47
        %p305 = pneg %p71
        %p306 = pneg %p68
        %p307 = pneg %p92
        %p308 = pneg %p89
        %s309 = smul.u32 2, %s20
        %p310 = scmp.lt.s32.totalorder %s19, 1
        %s311 = scalar_select %p310, %s19, 1
        %p312 = scmp.lt.s32.totalorder %s309, 1
        %s313 = scalar_select %p312, %s309, 1
        %s314 = smul.addr %s311, 4
        %s315 = sadd.s32 %s313, %s314
        %s316 = smul.addr %s315, 8
        %s317 = scalar_lea.vmem %s3, %s316
        %p318 = pneg %p120
        %p319 = pneg %p117
        %p320 = pneg %p148
        %p321 = pneg %p145
        %s322 = smul.u32 2, %s20
        %p323 = scmp.lt.s32.totalorder %s19, 1
        %s324 = scalar_select %p323, %s19, 1
        %p325 = scmp.lt.s32.totalorder %s322, 1
        %s326 = scalar_select %p325, %s322, 1
        %s327 = smul.addr %s324, 4
        %s328 = sadd.s32 %s326, %s327
        %s329 = smul.addr %s328, 8
        %s330 = scalar_lea.vmem %s4, %s329
        %s331 = smul.u32 2, %s20
        %s332 = smul.u32 2, %s20
        %p333 = scmp.lt.s32.totalorder %s19, 1
        %s334 = scalar_select %p333, %s19, 1
        %p335 = scmp.lt.s32.totalorder %s332, 1
        %s336 = scalar_select %p335, %s332, 1
        %s337 = smul.addr %s334, 4
        %s338 = sadd.s32 %s336, %s337
        %s339 = smul.addr %s338, 8
        %s340 = scalar_lea.vmem %s3, %s339
        %s341 = smul.u32 2, %s20
        %s342 = smul.u32 2, %s20
        %p343 = scmp.lt.s32.totalorder %s19, 1
        %s344 = scalar_select %p343, %s19, 1
        %p345 = scmp.lt.s32.totalorder %s342, 1
        %s346 = scalar_select %p345, %s342, 1
        %s347 = smul.addr %s344, 4
        %s348 = sadd.s32 %s346, %s347
        %s349 = smul.addr %s348, 8
        %s350 = scalar_lea.vmem %s4, %s349
        %s351 = smul.u32 2, %s20
        %v352 = vld [vmem:[%s1] sm:$0xff]
        %v353 = vld [vmem:[%s1 + $0x8] sm:$0xff]
        %v354 = vld [vmem:[%s295] sm:$0xff]
        %v355 = vld [vmem:[%s295 + $0x8] sm:$0xff]
        %v356 = vld [vmem:[%s295 + $0x10] sm:$0xff]
        %v357 = vld [vmem:[%s295 + $0x18] sm:$0xff]
        %s358 = scalar_lea.vmem %s1, 16
        %v359 = vld [vmem:[%s358] sm:$0xff]
        %v360 = vld [vmem:[%s358 + $0x8] sm:$0xff]
        %s361 = scalar_lea.vmem %s295, 32 [#allocation2]
        %v362 = vld [vmem:[%s361] sm:$0xff]
        %v363 = vld [vmem:[%s361 + $0x8] sm:$0xff]
        %v364 = vld [vmem:[%s361 + $0x10] sm:$0xff]
        %v365 = vld [vmem:[%s361 + $0x18] sm:$0xff]
        %vm366 = vcmask 130048
        %v368 = vsel %vm366, %v359, 0
        %v371 = vsel %vm366, %v360, 0
        %373 = vmatprep.subr.mxu0 %v363
        %374 = vmatpush1.msra.mxu0 %v362
        %375 = vmatprep.subr.mxu0 %v365
        %376 = vmatpush1.msra.mxu0 %v364
        %377 = vmatprep.subr.mxu0 0.0
        %378 = vmatpush1.msra.mxu0 0.0
        %379 = vmatprep.subr.mxu0 0.0
        %380 = vmatpush1.msra.mxu0 0.0
        %381 = vmatprep.subr.mxu0 0.0
        %382 = vmatpush1.msra.mxu0 0.0
        %383 = vmatprep.subr.mxu0 0.0
        %384 = vmatpush1.msra.mxu0 0.0
        %385 = vmatprep.subr.mxu0 0.0
        %386 = vmatpush1.msra.mxu0 0.0
        %387 = vmatprep.subr.mxu0 0.0
        %388 = vmatpush1.msra.mxu0 0.0
        %389 = vmatprep.subr.mxu0 0.0
        %390 = vmatpush1.msra.mxu0 0.0
        %391 = vmatprep.subr.mxu0 0.0
        %392 = vmatpush1.msra.mxu0 0.0
        %393 = vmatprep.subr.mxu0 0.0
        %394 = vmatpush1.msra.mxu0 0.0
        %395 = vmatprep.subr.mxu0 0.0
        %396 = vmatpush1.msra.mxu0 0.0
        %397 = vmatprep.subr.mxu0 0.0
        %398 = vmatpush1.msra.mxu0 0.0
        %399 = vmatprep.subr.mxu0 0.0
        %400 = vmatpush1.msra.mxu0 0.0
        %401 = vmatprep.subr.mxu0 0.0
        %402 = vmatpush1.msra.mxu0 0.0
        %403 = vmatprep.subr.mxu0 0.0
        %404 = vmatpush1.msra.mxu0 0.0
        %405 = vmatprep.subr.mxu0 0.0
        %406 = vmatpush1.msra.mxu0 0.0
        %407 = vmatprep.subr.mxu0 0.0
        %408 = vmatpush1.msra.mxu0 0.0
        %409 = vmatprep.subr.mxu0 0.0
        %410 = vmatpush1.msra.mxu0 0.0
        %411 = vmatprep.subr.mxu0 0.0
        %412 = vmatpush1.msra.mxu0 0.0
        %413 = vmatprep.subr.mxu0 0.0
        %414 = vmatpush1.msra.mxu0 0.0
        %415 = vmatprep.subr.mxu0 0.0
        %416 = vmatpush1.msra.mxu0 0.0
        %417 = vmatprep.subr.mxu0 0.0
        %418 = vmatpush1.msra.mxu0 0.0
        %419 = vmatprep.subr.mxu0 0.0
        %420 = vmatpush1.msra.mxu0 0.0
        %421 = vmatprep.subr.mxu0 0.0
        %422 = vmatpush1.msra.mxu0 0.0
        %423 = vmatprep.subr.mxu0 0.0
        %424 = vmatpush1.msra.mxu0 0.0
        %425 = vmatprep.subr.mxu0 0.0
        %426 = vmatpush1.msra.mxu0 0.0
        %427 = vmatprep.subr.mxu0 0.0
        %428 = vmatpush1.msra.mxu0 0.0
        %429 = vmatprep.subr.mxu0 0.0
        %430 = vmatpush1.msra.mxu0 0.0
        %431 = vmatprep.subr.mxu0 0.0
        %432 = vmatpush1.msra.mxu0 0.0
        %433 = vmatprep.subr.mxu0 0.0
        %434 = vmatpush1.msra.mxu0 0.0
        %435 = vmatprep.subr.mxu0 0.0
        %436 = vmatpush1.msra.mxu0 0.0
        %437 = vmatprep.mubr.f32.mxu0 0.0
        %438 = vmatmul.mubr.f32.gmra.mrb[0].mxu0 %v368
        %v439 = vpop.f32.mrb[0].mxu0
        %v440 = vadd.f32 0.0, %v439
        %v441 = vpop.f32.mrb[0].mxu0
        %v442 = vadd.f32 0.0, %v441
        %443 = vmatprep.mubr.f32.mxu0 0.0
        %444 = vmatmul.mubr.f32.gmra.mrb[0].mxu0 %v371
        %v445 = vpop.f32.mrb[0].mxu0
        %v446 = vadd.f32 0.0, %v445
        %v447 = vpop.f32.mrb[0].mxu0
        %v448 = vadd.f32 0.0, %v447
        %449 = vdwg.mxu0
        %v451 = vsel %vm366, %v352, 0
        %v454 = vsel %vm366, %v353, 0
        %456 = vmatprep.subr.mxu0 %v355
        %457 = vmatpush1.msra.mxu0 %v354
        %458 = vmatprep.subr.mxu0 %v357
        %459 = vmatpush1.msra.mxu0 %v356
        %460 = vmatprep.subr.mxu0 0.0
        %461 = vmatpush1.msra.mxu0 0.0
        %462 = vmatprep.subr.mxu0 0.0
        %463 = vmatpush1.msra.mxu0 0.0
        %464 = vmatprep.subr.mxu0 0.0
        %465 = vmatpush1.msra.mxu0 0.0
        %466 = vmatprep.subr.mxu0 0.0
        %467 = vmatpush1.msra.mxu0 0.0
        %468 = vmatprep.subr.mxu0 0.0
        %469 = vmatpush1.msra.mxu0 0.0
        %470 = vmatprep.subr.mxu0 0.0
        %471 = vmatpush1.msra.mxu0 0.0
        %472 = vmatprep.subr.mxu0 0.0
        %473 = vmatpush1.msra.mxu0 0.0
        %474 = vmatprep.subr.mxu0 0.0
        %475 = vmatpush1.msra.mxu0 0.0
        %476 = vmatprep.subr.mxu0 0.0
        %477 = vmatpush1.msra.mxu0 0.0
        %478 = vmatprep.subr.mxu0 0.0
        %479 = vmatpush1.msra.mxu0 0.0
        %480 = vmatprep.subr.mxu0 0.0
        %481 = vmatpush1.msra.mxu0 0.0
        %482 = vmatprep.subr.mxu0 0.0
        %483 = vmatpush1.msra.mxu0 0.0
        %484 = vmatprep.subr.mxu0 0.0
        %485 = vmatpush1.msra.mxu0 0.0
        %486 = vmatprep.subr.mxu0 0.0
        %487 = vmatpush1.msra.mxu0 0.0
        %488 = vmatprep.subr.mxu0 0.0
        %489 = vmatpush1.msra.mxu0 0.0
        %490 = vmatprep.subr.mxu0 0.0
        %491 = vmatpush1.msra.mxu0 0.0
        %492 = vmatprep.subr.mxu0 0.0
        %493 = vmatpush1.msra.mxu0 0.0
        %494 = vmatprep.subr.mxu0 0.0
        %495 = vmatpush1.msra.mxu0 0.0
        %496 = vmatprep.subr.mxu0 0.0
        %497 = vmatpush1.msra.mxu0 0.0
        %498 = vmatprep.subr.mxu0 0.0
        %499 = vmatpush1.msra.mxu0 0.0
        %500 = vmatprep.subr.mxu0 0.0
        %501 = vmatpush1.msra.mxu0 0.0
        %502 = vmatprep.subr.mxu0 0.0
        %503 = vmatpush1.msra.mxu0 0.0
        %504 = vmatprep.subr.mxu0 0.0
        %505 = vmatpush1.msra.mxu0 0.0
        %506 = vmatprep.subr.mxu0 0.0
        %507 = vmatpush1.msra.mxu0 0.0
        %508 = vmatprep.subr.mxu0 0.0
        %509 = vmatpush1.msra.mxu0 0.0
        %510 = vmatprep.subr.mxu0 0.0
        %511 = vmatpush1.msra.mxu0 0.0
        %512 = vmatprep.subr.mxu0 0.0
        %513 = vmatpush1.msra.mxu0 0.0
        %514 = vmatprep.subr.mxu0 0.0
        %515 = vmatpush1.msra.mxu0 0.0
        %516 = vmatprep.subr.mxu0 0.0
        %517 = vmatpush1.msra.mxu0 0.0
        %518 = vmatprep.subr.mxu0 0.0
        %519 = vmatpush1.msra.mxu0 0.0
        %520 = vmatprep.mubr.f32.mxu0 0.0
        %521 = vmatmul.mubr.f32.gmra.mrb[0].mxu0 %v451
        %v522 = vpop.f32.mrb[0].mxu0
        %v523 = vadd.f32 %v440, %v522
        %v524 = vpop.f32.mrb[0].mxu0
        %v525 = vadd.f32 %v442, %v524
        %526 = vmatprep.mubr.f32.mxu0 0.0
        %527 = vmatmul.mubr.f32.gmra.mrb[0].mxu0 %v454
        %v528 = vpop.f32.mrb[0].mxu0
        %v529 = vadd.f32 %v446, %v528
        %v530 = vpop.f32.mrb[0].mxu0
        %v531 = vadd.f32 %v448, %v530
        %532 = vdwg.mxu0
        %s533 = scalar_lea.vmem %s1, 32
        %v534 = vld [vmem:[%s533] sm:$0xff]
        %v535 = vld [vmem:[%s533 + $0x8] sm:$0xff]
        %s536 = scalar_lea.vmem %s295, 64 [#allocation2]
        %v537 = vld [vmem:[%s536] sm:$0xff]
        %v538 = vld [vmem:[%s536 + $0x8] sm:$0xff]
        %v539 = vld [vmem:[%s536 + $0x10] sm:$0xff]
        %v540 = vld [vmem:[%s536 + $0x18] sm:$0xff]
        %v542 = vsel %vm366, %v534, 0
        %v545 = vsel %vm366, %v535, 0
        %547 = vmatprep.subr.mxu0 %v538
        %548 = vmatpush1.msra.mxu0 %v537
        %549 = vmatprep.subr.mxu0 %v540
        %550 = vmatpush1.msra.mxu0 %v539
        %551 = vmatprep.subr.mxu0 0.0
        %552 = vmatpush1.msra.mxu0 0.0
        %553 = vmatprep.subr.mxu0 0.0
        %554 = vmatpush1.msra.mxu0 0.0
        %555 = vmatprep.subr.mxu0 0.0
        %556 = vmatpush1.msra.mxu0 0.0
        %557 = vmatprep.subr.mxu0 0.0
        %558 = vmatpush1.msra.mxu0 0.0
        %559 = vmatprep.subr.mxu0 0.0
        %560 = vmatpush1.msra.mxu0 0.0
        %561 = vmatprep.subr.mxu0 0.0
        %562 = vmatpush1.msra.mxu0 0.0
        %563 = vmatprep.subr.mxu0 0.0
        %564 = vmatpush1.msra.mxu0 0.0
        %565 = vmatprep.subr.mxu0 0.0
        %566 = vmatpush1.msra.mxu0 0.0
        %567 = vmatprep.subr.mxu0 0.0
        %568 = vmatpush1.msra.mxu0 0.0
        %569 = vmatprep.subr.mxu0 0.0
        %570 = vmatpush1.msra.mxu0 0.0
        %571 = vmatprep.subr.mxu0 0.0
        %572 = vmatpush1.msra.mxu0 0.0
        %573 = vmatprep.subr.mxu0 0.0
        %574 = vmatpush1.msra.mxu0 0.0
        %575 = vmatprep.subr.mxu0 0.0
        %576 = vmatpush1.msra.mxu0 0.0
        %577 = vmatprep.subr.mxu0 0.0
        %578 = vmatpush1.msra.mxu0 0.0
        %579 = vmatprep.subr.mxu0 0.0
        %580 = vmatpush1.msra.mxu0 0.0
        %581 = vmatprep.subr.mxu0 0.0
        %582 = vmatpush1.msra.mxu0 0.0
        %583 = vmatprep.subr.mxu0 0.0
        %584 = vmatpush1.msra.mxu0 0.0
        %585 = vmatprep.subr.mxu0 0.0
        %586 = vmatpush1.msra.mxu0 0.0
        %587 = vmatprep.subr.mxu0 0.0
        %588 = vmatpush1.msra.mxu0 0.0
        %589 = vmatprep.subr.mxu0 0.0
        %590 = vmatpush1.msra.mxu0 0.0
        %591 = vmatprep.subr.mxu0 0.0
        %592 = vmatpush1.msra.mxu0 0.0
        %593 = vmatprep.subr.mxu0 0.0
        %594 = vmatpush1.msra.mxu0 0.0
        %595 = vmatprep.subr.mxu0 0.0
        %596 = vmatpush1.msra.mxu0 0.0
        %597 = vmatprep.subr.mxu0 0.0
        %598 = vmatpush1.msra.mxu0 0.0
        %599 = vmatprep.subr.mxu0 0.0
        %600 = vmatpush1.msra.mxu0 0.0
        %601 = vmatprep.subr.mxu0 0.0
        %602 = vmatpush1.msra.mxu0 0.0
        %603 = vmatprep.subr.mxu0 0.0
        %604 = vmatpush1.msra.mxu0 0.0
        %605 = vmatprep.subr.mxu0 0.0
        %606 = vmatpush1.msra.mxu0 0.0
        %607 = vmatprep.subr.mxu0 0.0
        %608 = vmatpush1.msra.mxu0 0.0
        %609 = vmatprep.subr.mxu0 0.0
        %610 = vmatpush1.msra.mxu0 0.0
        %611 = vmatprep.mubr.f32.mxu0 0.0
        %612 = vmatmul.mubr.f32.gmra.mrb[0].mxu0 %v542
        %v613 = vpop.f32.mrb[0].mxu0
        %v614 = vadd.f32 0.0, %v613
        %v615 = vpop.f32.mrb[0].mxu0
        %v616 = vadd.f32 0.0, %v615
        %617 = vmatprep.mubr.f32.mxu0 0.0
        %618 = vmatmul.mubr.f32.gmra.mrb[0].mxu0 %v545
        %v619 = vpop.f32.mrb[0].mxu0
        %v620 = vadd.f32 0.0, %v619
        %v621 = vpop.f32.mrb[0].mxu0
        %v622 = vadd.f32 0.0, %v621
        %623 = vdwg.mxu0
        %v624 = vadd.f32 %v523, %v614
        %v625 = vadd.f32 %v525, %v616
        %v626 = vadd.f32 %v529, %v620
        %v627 = vadd.f32 %v531, %v622
        %s628 = scalar_lea.vmem %s1, 48
        %v629 = vld [vmem:[%s628] sm:$0xff]
        %v630 = vld [vmem:[%s628 + $0x8] sm:$0xff]
        %s631 = scalar_lea.vmem %s295, 96 [#allocation2]
        %v632 = vld [vmem:[%s631] sm:$0xff]
        %v633 = vld [vmem:[%s631 + $0x8] sm:$0xff]
        %v634 = vld [vmem:[%s631 + $0x10] sm:$0xff]
        %v635 = vld [vmem:[%s631 + $0x18] sm:$0xff]
        %v637 = vsel %vm366, %v629, 0
        %v640 = vsel %vm366, %v630, 0
        %642 = vmatprep.subr.mxu0 %v633
        %643 = vmatpush1.msra.mxu0 %v632
        %644 = vmatprep.subr.mxu0 %v635
        %645 = vmatpush1.msra.mxu0 %v634
        %646 = vmatprep.subr.mxu0 0.0
        %647 = vmatpush1.msra.mxu0 0.0
        %648 = vmatprep.subr.mxu0 0.0
        %649 = vmatpush1.msra.mxu0 0.0
        %650 = vmatprep.subr.mxu0 0.0
        %651 = vmatpush1.msra.mxu0 0.0
        %652 = vmatprep.subr.mxu0 0.0
        %653 = vmatpush1.msra.mxu0 0.0
        %654 = vmatprep.subr.mxu0 0.0
        %655 = vmatpush1.msra.mxu0 0.0
        %656 = vmatprep.subr.mxu0 0.0
        %657 = vmatpush1.msra.mxu0 0.0
        %658 = vmatprep.subr.mxu0 0.0
        %659 = vmatpush1.msra.mxu0 0.0
        %660 = vmatprep.subr.mxu0 0.0
        %661 = vmatpush1.msra.mxu0 0.0
        %662 = vmatprep.subr.mxu0 0.0
        %663 = vmatpush1.msra.mxu0 0.0
        %664 = vmatprep.subr.mxu0 0.0
        %665 = vmatpush1.msra.mxu0 0.0
        %666 = vmatprep.subr.mxu0 0.0
        %667 = vmatpush1.msra.mxu0 0.0
        %668 = vmatprep.subr.mxu0 0.0
        %669 = vmatpush1.msra.mxu0 0.0
        %670 = vmatprep.subr.mxu0 0.0
        %671 = vmatpush1.msra.mxu0 0.0
        %672 = vmatprep.subr.mxu0 0.0
        %673 = vmatpush1.msra.mxu0 0.0
        %674 = vmatprep.subr.mxu0 0.0
        %675 = vmatpush1.msra.mxu0 0.0
        %676 = vmatprep.subr.mxu0 0.0
        %677 = vmatpush1.msra.mxu0 0.0
        %678 = vmatprep.subr.mxu0 0.0
        %679 = vmatpush1.msra.mxu0 0.0
        %680 = vmatprep.subr.mxu0 0.0
        %681 = vmatpush1.msra.mxu0 0.0
        %682 = vmatprep.subr.mxu0 0.0
        %683 = vmatpush1.msra.mxu0 0.0
        %684 = vmatprep.subr.mxu0 0.0
        %685 = vmatpush1.msra.mxu0 0.0
        %686 = vmatprep.subr.mxu0 0.0
        %687 = vmatpush1.msra.mxu0 0.0
        %688 = vmatprep.subr.mxu0 0.0
        %689 = vmatpush1.msra.mxu0 0.0
        %690 = vmatprep.subr.mxu0 0.0
        %691 = vmatpush1.msra.mxu0 0.0
        %692 = vmatprep.subr.mxu0 0.0
        %693 = vmatpush1.msra.mxu0 0.0
        %694 = vmatprep.subr.mxu0 0.0
        %695 = vmatpush1.msra.mxu0 0.0
        %696 = vmatprep.subr.mxu0 0.0
        %697 = vmatpush1.msra.mxu0 0.0
        %698 = vmatprep.subr.mxu0 0.0
        %699 = vmatpush1.msra.mxu0 0.0
        %700 = vmatprep.subr.mxu0 0.0
        %701 = vmatpush1.msra.mxu0 0.0
        %702 = vmatprep.subr.mxu0 0.0
        %703 = vmatpush1.msra.mxu0 0.0
        %704 = vmatprep.subr.mxu0 0.0
        %705 = vmatpush1.msra.mxu0 0.0
        %706 = vmatprep.mubr.f32.mxu0 0.0
        %707 = vmatmul.mubr.f32.gmra.mrb[0].mxu0 %v637
        %v708 = vpop.f32.mrb[0].mxu0
        %v709 = vadd.f32 0.0, %v708
        %v710 = vpop.f32.mrb[0].mxu0
        %v711 = vadd.f32 0.0, %v710
        %712 = vmatprep.mubr.f32.mxu0 0.0
        %713 = vmatmul.mubr.f32.gmra.mrb[0].mxu0 %v640
        %v714 = vpop.f32.mrb[0].mxu0
        %v715 = vadd.f32 0.0, %v714
        %v716 = vpop.f32.mrb[0].mxu0
        %v717 = vadd.f32 0.0, %v716
        %718 = vdwg.mxu0
        %v719 = vadd.f32 %v624, %v709
        %v720 = vadd.f32 %v625, %v711
        %v721 = vadd.f32 %v626, %v715
        %v722 = vadd.f32 %v627, %v717
        %s723 = scalar_lea.vmem %s1, 64
        %v724 = vld [vmem:[%s723] sm:$0xff]
        %v725 = vld [vmem:[%s723 + $0x8] sm:$0xff]
        %s726 = scalar_lea.vmem %s295, 128 [#allocation2]
        %v727 = vld [vmem:[%s726] sm:$0xff]
        %v728 = vld [vmem:[%s726 + $0x8] sm:$0xff]
        %v729 = vld [vmem:[%s726 + $0x10] sm:$0xff]
        %v730 = vld [vmem:[%s726 + $0x18] sm:$0xff]
        %v732 = vsel %vm366, %v724, 0
        %v735 = vsel %vm366, %v725, 0
        %737 = vmatprep.subr.mxu0 %v728
        %738 = vmatpush1.msra.mxu0 %v727
        %739 = vmatprep.subr.mxu0 %v730
        %740 = vmatpush1.msra.mxu0 %v729
        %741 = vmatprep.subr.mxu0 0.0
        %742 = vmatpush1.msra.mxu0 0.0
        %743 = vmatprep.subr.mxu0 0.0
        %744 = vmatpush1.msra.mxu0 0.0
        %745 = vmatprep.subr.mxu0 0.0
        %746 = vmatpush1.msra.mxu0 0.0
        %747 = vmatprep.subr.mxu0 0.0
        %748 = vmatpush1.msra.mxu0 0.0
        %749 = vmatprep.subr.mxu0 0.0
        %750 = vmatpush1.msra.mxu0 0.0
        %751 = vmatprep.subr.mxu0 0.0
        %752 = vmatpush1.msra.mxu0 0.0
        %753 = vmatprep.subr.mxu0 0.0
        %754 = vmatpush1.msra.mxu0 0.0
        %755 = vmatprep.subr.mxu0 0.0
        %756 = vmatpush1.msra.mxu0 0.0
        %757 = vmatprep.subr.mxu0 0.0
        %758 = vmatpush1.msra.mxu0 0.0
        %759 = vmatprep.subr.mxu0 0.0
        %760 = vmatpush1.msra.mxu0 0.0
        %761 = vmatprep.subr.mxu0 0.0
        %762 = vmatpush1.msra.mxu0 0.0
        %763 = vmatprep.subr.mxu0 0.0
        %764 = vmatpush1.msra.mxu0 0.0
        %765 = vmatprep.subr.mxu0 0.0
        %766 = vmatpush1.msra.mxu0 0.0
        %767 = vmatprep.subr.mxu0 0.0
        %768 = vmatpush1.msra.mxu0 0.0
        %769 = vmatprep.subr.mxu0 0.0
        %770 = vmatpush1.msra.mxu0 0.0
        %771 = vmatprep.subr.mxu0 0.0
        %772 = vmatpush1.msra.mxu0 0.0
        %773 = vmatprep.subr.mxu0 0.0
        %774 = vmatpush1.msra.mxu0 0.0
        %775 = vmatprep.subr.mxu0 0.0
        %776 = vmatpush1.msra.mxu0 0.0
        %777 = vmatprep.subr.mxu0 0.0
        %778 = vmatpush1.msra.mxu0 0.0
        %779 = vmatprep.subr.mxu0 0.0
        %780 = vmatpush1.msra.mxu0 0.0
        %781 = vmatprep.subr.mxu0 0.0
        %782 = vmatpush1.msra.mxu0 0.0
        %783 = vmatprep.subr.mxu0 0.0
        %784 = vmatpush1.msra.mxu0 0.0
        %785 = vmatprep.subr.mxu0 0.0
        %786 = vmatpush1.msra.mxu0 0.0
        %787 = vmatprep.subr.mxu0 0.0
        %788 = vmatpush1.msra.mxu0 0.0
        %789 = vmatprep.subr.mxu0 0.0
        %790 = vmatpush1.msra.mxu0 0.0
        %791 = vmatprep.subr.mxu0 0.0
        %792 = vmatpush1.msra.mxu0 0.0
        %793 = vmatprep.subr.mxu0 0.0
        %794 = vmatpush1.msra.mxu0 0.0
        %795 = vmatprep.subr.mxu0 0.0
        %796 = vmatpush1.msra.mxu0 0.0
        %797 = vmatprep.subr.mxu0 0.0
        %798 = vmatpush1.msra.mxu0 0.0
        %799 = vmatprep.subr.mxu0 0.0
        %800 = vmatpush1.msra.mxu0 0.0
        %801 = vmatprep.mubr.f32.mxu0 0.0
        %802 = vmatmul.mubr.f32.gmra.mrb[0].mxu0 %v732
        %v803 = vpop.f32.mrb[0].mxu0
        %v804 = vadd.f32 0.0, %v803
        %v805 = vpop.f32.mrb[0].mxu0
        %v806 = vadd.f32 0.0, %v805
        %807 = vmatprep.mubr.f32.mxu0 0.0
        %808 = vmatmul.mubr.f32.gmra.mrb[0].mxu0 %v735
        %v809 = vpop.f32.mrb[0].mxu0
        %v810 = vadd.f32 0.0, %v809
        %v811 = vpop.f32.mrb[0].mxu0
        %v812 = vadd.f32 0.0, %v811
        %813 = vdwg.mxu0
        %v814 = vadd.f32 %v719, %v804
        %v815 = vadd.f32 %v720, %v806
        %v816 = vadd.f32 %v721, %v810
        %v817 = vadd.f32 %v722, %v812
        %s818 = scalar_lea.vmem %s1, 80
        %v819 = vld [vmem:[%s818] sm:$0xff]
        %v820 = vld [vmem:[%s818 + $0x8] sm:$0xff]
        %s821 = scalar_lea.vmem %s295, 160 [#allocation2]
        %v822 = vld [vmem:[%s821] sm:$0xff]
        %v823 = vld [vmem:[%s821 + $0x8] sm:$0xff]
        %v824 = vld [vmem:[%s821 + $0x10] sm:$0xff]
        %v825 = vld [vmem:[%s821 + $0x18] sm:$0xff]
        %v827 = vsel %vm366, %v819, 0
        %v830 = vsel %vm366, %v820, 0
        %832 = vmatprep.subr.mxu0 %v823
        %833 = vmatpush1.msra.mxu0 %v822
        %834 = vmatprep.subr.mxu0 %v825
        %835 = vmatpush1.msra.mxu0 %v824
        %836 = vmatprep.subr.mxu0 0.0
        %837 = vmatpush1.msra.mxu0 0.0
        %838 = vmatprep.subr.mxu0 0.0
        %839 = vmatpush1.msra.mxu0 0.0
        %840 = vmatprep.subr.mxu0 0.0
        %841 = vmatpush1.msra.mxu0 0.0
        %842 = vmatprep.subr.mxu0 0.0
        %843 = vmatpush1.msra.mxu0 0.0
        %844 = vmatprep.subr.mxu0 0.0
        %845 = vmatpush1.msra.mxu0 0.0
        %846 = vmatprep.subr.mxu0 0.0
        %847 = vmatpush1.msra.mxu0 0.0
        %848 = vmatprep.subr.mxu0 0.0
        %849 = vmatpush1.msra.mxu0 0.0
        %850 = vmatprep.subr.mxu0 0.0
        %851 = vmatpush1.msra.mxu0 0.0
        %852 = vmatprep.subr.mxu0 0.0
        %853 = vmatpush1.msra.mxu0 0.0
        %854 = vmatprep.subr.mxu0 0.0
        %855 = vmatpush1.msra.mxu0 0.0
        %856 = vmatprep.subr.mxu0 0.0
        %857 = vmatpush1.msra.mxu0 0.0
        %858 = vmatprep.subr.mxu0 0.0
        %859 = vmatpush1.msra.mxu0 0.0
        %860 = vmatprep.subr.mxu0 0.0
        %861 = vmatpush1.msra.mxu0 0.0
        %862 = vmatprep.subr.mxu0 0.0
        %863 = vmatpush1.msra.mxu0 0.0
        %864 = vmatprep.subr.mxu0 0.0
        %865 = vmatpush1.msra.mxu0 0.0
        %866 = vmatprep.subr.mxu0 0.0
        %867 = vmatpush1.msra.mxu0 0.0
        %868 = vmatprep.subr.mxu0 0.0
        %869 = vmatpush1.msra.mxu0 0.0
        %870 = vmatprep.subr.mxu0 0.0
        %871 = vmatpush1.msra.mxu0 0.0
        %872 = vmatprep.subr.mxu0 0.0
        %873 = vmatpush1.msra.mxu0 0.0
        %874 = vmatprep.subr.mxu0 0.0
        %875 = vmatpush1.msra.mxu0 0.0
        %876 = vmatprep.subr.mxu0 0.0
        %877 = vmatpush1.msra.mxu0 0.0
        %878 = vmatprep.subr.mxu0 0.0
        %879 = vmatpush1.msra.mxu0 0.0
        %880 = vmatprep.subr.mxu0 0.0
        %881 = vmatpush1.msra.mxu0 0.0
        %882 = vmatprep.subr.mxu0 0.0
        %883 = vmatpush1.msra.mxu0 0.0
        %884 = vmatprep.subr.mxu0 0.0
        %885 = vmatpush1.msra.mxu0 0.0
        %886 = vmatprep.subr.mxu0 0.0
        %887 = vmatpush1.msra.mxu0 0.0
        %888 = vmatprep.subr.mxu0 0.0
        %889 = vmatpush1.msra.mxu0 0.0
        %890 = vmatprep.subr.mxu0 0.0
        %891 = vmatpush1.msra.mxu0 0.0
        %892 = vmatprep.subr.mxu0 0.0
        %893 = vmatpush1.msra.mxu0 0.0
        %894 = vmatprep.subr.mxu0 0.0
        %895 = vmatpush1.msra.mxu0 0.0
        %896 = vmatprep.mubr.f32.mxu0 0.0
        %897 = vmatmul.mubr.f32.gmra.mrb[0].mxu0 %v827
        %v898 = vpop.f32.mrb[0].mxu0
        %v899 = vadd.f32 0.0, %v898
        %v900 = vpop.f32.mrb[0].mxu0
        %v901 = vadd.f32 0.0, %v900
        %902 = vmatprep.mubr.f32.mxu0 0.0
        %903 = vmatmul.mubr.f32.gmra.mrb[0].mxu0 %v830
        %v904 = vpop.f32.mrb[0].mxu0
        %v905 = vadd.f32 0.0, %v904
        %v906 = vpop.f32.mrb[0].mxu0
        %v907 = vadd.f32 0.0, %v906
        %908 = vdwg.mxu0
        %v909 = vadd.f32 %v814, %v899
        %v910 = vadd.f32 %v815, %v901
        %v911 = vadd.f32 %v816, %v905
        %v912 = vadd.f32 %v817, %v907
        %s913 = scalar_lea.vmem %s1, 96
        %v914 = vld [vmem:[%s913] sm:$0xff]
        %v915 = vld [vmem:[%s913 + $0x8] sm:$0xff]
        %s916 = scalar_lea.vmem %s295, 192 [#allocation2]
        %v917 = vld [vmem:[%s916] sm:$0xff]
        %v918 = vld [vmem:[%s916 + $0x8] sm:$0xff]
        %v919 = vld [vmem:[%s916 + $0x10] sm:$0xff]
        %v920 = vld [vmem:[%s916 + $0x18] sm:$0xff]
        %v922 = vsel %vm366, %v914, 0
        %v925 = vsel %vm366, %v915, 0
        %927 = vmatprep.subr.mxu0 %v918
        %928 = vmatpush1.msra.mxu0 %v917
        %929 = vmatprep.subr.mxu0 %v920
        %930 = vmatpush1.msra.mxu0 %v919
        %931 = vmatprep.subr.mxu0 0.0
        %932 = vmatpush1.msra.mxu0 0.0
        %933 = vmatprep.subr.mxu0 0.0
        %934 = vmatpush1.msra.mxu0 0.0
        %935 = vmatprep.subr.mxu0 0.0
        %936 = vmatpush1.msra.mxu0 0.0
        %937 = vmatprep.subr.mxu0 0.0
        %938 = vmatpush1.msra.mxu0 0.0
        %939 = vmatprep.subr.mxu0 0.0
        %940 = vmatpush1.msra.mxu0 0.0
        %941 = vmatprep.subr.mxu0 0.0
        %942 = vmatpush1.msra.mxu0 0.0
        %943 = vmatprep.subr.mxu0 0.0
        %944 = vmatpush1.msra.mxu0 0.0
        %945 = vmatprep.subr.mxu0 0.0
        %946 = vmatpush1.msra.mxu0 0.0
        %947 = vmatprep.subr.mxu0 0.0
        %948 = vmatpush1.msra.mxu0 0.0
        %949 = vmatprep.subr.mxu0 0.0
        %950 = vmatpush1.msra.mxu0 0.0
        %951 = vmatprep.subr.mxu0 0.0
        %952 = vmatpush1.msra.mxu0 0.0
        %953 = vmatprep.subr.mxu0 0.0
        %954 = vmatpush1.msra.mxu0 0.0
        %955 = vmatprep.subr.mxu0 0.0
        %956 = vmatpush1.msra.mxu0 0.0
        %957 = vmatprep.subr.mxu0 0.0
        %958 = vmatpush1.msra.mxu0 0.0
        %959 = vmatprep.subr.mxu0 0.0
        %960 = vmatpush1.msra.mxu0 0.0
        %961 = vmatprep.subr.mxu0 0.0
        %962 = vmatpush1.msra.mxu0 0.0
        %963 = vmatprep.subr.mxu0 0.0
        %964 = vmatpush1.msra.mxu0 0.0
        %965 = vmatprep.subr.mxu0 0.0
        %966 = vmatpush1.msra.mxu0 0.0
        %967 = vmatprep.subr.mxu0 0.0
        %968 = vmatpush1.msra.mxu0 0.0
        %969 = vmatprep.subr.mxu0 0.0
        %970 = vmatpush1.msra.mxu0 0.0
        %971 = vmatprep.subr.mxu0 0.0
        %972 = vmatpush1.msra.mxu0 0.0
        %973 = vmatprep.subr.mxu0 0.0
        %974 = vmatpush1.msra.mxu0 0.0
        %975 = vmatprep.subr.mxu0 0.0
        %976 = vmatpush1.msra.mxu0 0.0
        %977 = vmatprep.subr.mxu0 0.0
        %978 = vmatpush1.msra.mxu0 0.0
        %979 = vmatprep.subr.mxu0 0.0
        %980 = vmatpush1.msra.mxu0 0.0
        %981 = vmatprep.subr.mxu0 0.0
        %982 = vmatpush1.msra.mxu0 0.0
        %983 = vmatprep.subr.mxu0 0.0
        %984 = vmatpush1.msra.mxu0 0.0
        %985 = vmatprep.subr.mxu0 0.0
        %986 = vmatpush1.msra.mxu0 0.0
        %987 = vmatprep.subr.mxu0 0.0
        %988 = vmatpush1.msra.mxu0 0.0
        %989 = vmatprep.subr.mxu0 0.0
        %990 = vmatpush1.msra.mxu0 0.0
        %991 = vmatprep.mubr.f32.mxu0 0.0
        %992 = vmatmul.mubr.f32.gmra.mrb[0].mxu0 %v922
        %v993 = vpop.f32.mrb[0].mxu0
        %v994 = vadd.f32 0.0, %v993
        %v995 = vpop.f32.mrb[0].mxu0
        %v996 = vadd.f32 0.0, %v995
        %997 = vmatprep.mubr.f32.mxu0 0.0
        %998 = vmatmul.mubr.f32.gmra.mrb[0].mxu0 %v925
        %v999 = vpop.f32.mrb[0].mxu0
        %v1000 = vadd.f32 0.0, %v999
        %v1001 = vpop.f32.mrb[0].mxu0
        %v1002 = vadd.f32 0.0, %v1001
        %1003 = vdwg.mxu0
        %v1004 = vadd.f32 %v909, %v994
        %v1005 = vadd.f32 %v910, %v996
        %v1006 = vadd.f32 %v911, %v1000
        %v1007 = vadd.f32 %v912, %v1002
        %s1008 = scalar_lea.vmem %s1, 112
        %v1009 = vld [vmem:[%s1008] sm:$0xff]
        %v1010 = vld [vmem:[%s1008 + $0x8] sm:$0xff]
        %s1011 = scalar_lea.vmem %s295, 224 [#allocation2]
        %v1012 = vld [vmem:[%s1011] sm:$0xff]
        %v1013 = vld [vmem:[%s1011 + $0x8] sm:$0xff]
        %v1014 = vld [vmem:[%s1011 + $0x10] sm:$0xff]
        %v1015 = vld [vmem:[%s1011 + $0x18] sm:$0xff]
        %v1017 = vsel %vm366, %v1009, 0
        %v1020 = vsel %vm366, %v1010, 0
        %1022 = vmatprep.subr.mxu0 %v1013
        %1023 = vmatpush1.msra.mxu0 %v1012
        %1024 = vmatprep.subr.mxu0 %v1015
        %1025 = vmatpush1.msra.mxu0 %v1014
        %1026 = vmatprep.subr.mxu0 0.0
        %1027 = vmatpush1.msra.mxu0 0.0
        %1028 = vmatprep.subr.mxu0 0.0
        %1029 = vmatpush1.msra.mxu0 0.0
        %1030 = vmatprep.subr.mxu0 0.0
        %1031 = vmatpush1.msra.mxu0 0.0
        %1032 = vmatprep.subr.mxu0 0.0
        %1033 = vmatpush1.msra.mxu0 0.0
        %1034 = vmatprep.subr.mxu0 0.0
        %1035 = vmatpush1.msra.mxu0 0.0
        %1036 = vmatprep.subr.mxu0 0.0
        %1037 = vmatpush1.msra.mxu0 0.0
        %1038 = vmatprep.subr.mxu0 0.0
        %1039 = vmatpush1.msra.mxu0 0.0
        %1040 = vmatprep.subr.mxu0 0.0
        %1041 = vmatpush1.msra.mxu0 0.0
        %1042 = vmatprep.subr.mxu0 0.0
        %1043 = vmatpush1.msra.mxu0 0.0
        %1044 = vmatprep.subr.mxu0 0.0
        %1045 = vmatpush1.msra.mxu0 0.0
        %1046 = vmatprep.subr.mxu0 0.0
        %1047 = vmatpush1.msra.mxu0 0.0
        %1048 = vmatprep.subr.mxu0 0.0
        %1049 = vmatpush1.msra.mxu0 0.0
        %1050 = vmatprep.subr.mxu0 0.0
        %1051 = vmatpush1.msra.mxu0 0.0
        %1052 = vmatprep.subr.mxu0 0.0
        %1053 = vmatpush1.msra.mxu0 0.0
        %1054 = vmatprep.subr.mxu0 0.0
        %1055 = vmatpush1.msra.mxu0 0.0
        %1056 = vmatprep.subr.mxu0 0.0
        %1057 = vmatpush1.msra.mxu0 0.0
        %1058 = vmatprep.subr.mxu0 0.0
        %1059 = vmatpush1.msra.mxu0 0.0
        %1060 = vmatprep.subr.mxu0 0.0
        %1061 = vmatpush1.msra.mxu0 0.0
        %1062 = vmatprep.subr.mxu0 0.0
        %1063 = vmatpush1.msra.mxu0 0.0
        %1064 = vmatprep.subr.mxu0 0.0
        %1065 = vmatpush1.msra.mxu0 0.0
        %1066 = vmatprep.subr.mxu0 0.0
        %1067 = vmatpush1.msra.mxu0 0.0
        %1068 = vmatprep.subr.mxu0 0.0
        %1069 = vmatpush1.msra.mxu0 0.0
        %1070 = vmatprep.subr.mxu0 0.0
        %1071 = vmatpush1.msra.mxu0 0.0
        %1072 = vmatprep.subr.mxu0 0.0
        %1073 = vmatpush1.msra.mxu0 0.0
        %1074 = vmatprep.subr.mxu0 0.0
        %1075 = vmatpush1.msra.mxu0 0.0
        %1076 = vmatprep.subr.mxu0 0.0
        %1077 = vmatpush1.msra.mxu0 0.0
        %1078 = vmatprep.subr.mxu0 0.0
        %1079 = vmatpush1.msra.mxu0 0.0
        %1080 = vmatprep.subr.mxu0 0.0
        %1081 = vmatpush1.msra.mxu0 0.0
        %1082 = vmatprep.subr.mxu0 0.0
        %1083 = vmatpush1.msra.mxu0 0.0
        %1084 = vmatprep.subr.mxu0 0.0
        %1085 = vmatpush1.msra.mxu0 0.0
        %1086 = vmatprep.mubr.f32.mxu0 0.0
        %1087 = vmatmul.mubr.f32.gmra.mrb[0].mxu0 %v1017
        %v1088 = vpop.f32.mrb[0].mxu0
        %v1089 = vadd.f32 0.0, %v1088
        %v1090 = vpop.f32.mrb[0].mxu0
        %v1091 = vadd.f32 0.0, %v1090
        %1092 = vmatprep.mubr.f32.mxu0 0.0
        %1093 = vmatmul.mubr.f32.gmra.mrb[0].mxu0 %v1020
        %v1094 = vpop.f32.mrb[0].mxu0
        %v1095 = vadd.f32 0.0, %v1094
        %v1096 = vpop.f32.mrb[0].mxu0
        %v1097 = vadd.f32 0.0, %v1096
        %1098 = vdwg.mxu0
        %v1099 = vadd.f32 %v1004, %v1089
        %v1100 = vadd.f32 %v1005, %v1091
        %v1101 = vadd.f32 %v1006, %v1095
        %v1102 = vadd.f32 %v1007, %v1097
        %s1103 = scalar_lea.vmem %s1, 128
        %v1104 = vld [vmem:[%s1103] sm:$0xff]
        %v1105 = vld [vmem:[%s1103 + $0x8] sm:$0xff]
        %s1106 = scalar_lea.vmem %s295, 256 [#allocation2]
        %v1107 = vld [vmem:[%s1106] sm:$0xff]
        %v1108 = vld [vmem:[%s1106 + $0x8] sm:$0xff]
        %v1109 = vld [vmem:[%s1106 + $0x10] sm:$0xff]
        %v1110 = vld [vmem:[%s1106 + $0x18] sm:$0xff]
        %v1112 = vsel %vm366, %v1104, 0
        %v1115 = vsel %vm366, %v1105, 0
        %1117 = vmatprep.subr.mxu0 %v1108
        %1118 = vmatpush1.msra.mxu0 %v1107
        %1119 = vmatprep.subr.mxu0 %v1110
        %1120 = vmatpush1.msra.mxu0 %v1109
        %1121 = vmatprep.subr.mxu0 0.0
        %1122 = vmatpush1.msra.mxu0 0.0
        %1123 = vmatprep.subr.mxu0 0.0
        %1124 = vmatpush1.msra.mxu0 0.0
        %1125 = vmatprep.subr.mxu0 0.0
        %1126 = vmatpush1.msra.mxu0 0.0
        %1127 = vmatprep.subr.mxu0 0.0
        %1128 = vmatpush1.msra.mxu0 0.0
        %1129 = vmatprep.subr.mxu0 0.0
        %1130 = vmatpush1.msra.mxu0 0.0
        %1131 = vmatprep.subr.mxu0 0.0
        %1132 = vmatpush1.msra.mxu0 0.0
        %1133 = vmatprep.subr.mxu0 0.0
        %1134 = vmatpush1.msra.mxu0 0.0
        %1135 = vmatprep.subr.mxu0 0.0
        %1136 = vmatpush1.msra.mxu0 0.0
        %1137 = vmatprep.subr.mxu0 0.0
        %1138 = vmatpush1.msra.mxu0 0.0
        %1139 = vmatprep.subr.mxu0 0.0
        %1140 = vmatpush1.msra.mxu0 0.0
        %1141 = vmatprep.subr.mxu0 0.0
        %1142 = vmatpush1.msra.mxu0 0.0
        %1143 = vmatprep.subr.mxu0 0.0
        %1144 = vmatpush1.msra.mxu0 0.0
        %1145 = vmatprep.subr.mxu0 0.0
        %1146 = vmatpush1.msra.mxu0 0.0
        %1147 = vmatprep.subr.mxu0 0.0
        %1148 = vmatpush1.msra.mxu0 0.0
        %1149 = vmatprep.subr.mxu0 0.0
        %1150 = vmatpush1.msra.mxu0 0.0
        %1151 = vmatprep.subr.mxu0 0.0
        %1152 = vmatpush1.msra.mxu0 0.0
        %1153 = vmatprep.subr.mxu0 0.0
        %1154 = vmatpush1.msra.mxu0 0.0
        %1155 = vmatprep.subr.mxu0 0.0
        %1156 = vmatpush1.msra.mxu0 0.0
        %1157 = vmatprep.subr.mxu0 0.0
        %1158 = vmatpush1.msra.mxu0 0.0
        %1159 = vmatprep.subr.mxu0 0.0
        %1160 = vmatpush1.msra.mxu0 0.0
        %1161 = vmatprep.subr.mxu0 0.0
        %1162 = vmatpush1.msra.mxu0 0.0
        %1163 = vmatprep.subr.mxu0 0.0
        %1164 = vmatpush1.msra.mxu0 0.0
        %1165 = vmatprep.subr.mxu0 0.0
        %1166 = vmatpush1.msra.mxu0 0.0
        %1167 = vmatprep.subr.mxu0 0.0
        %1168 = vmatpush1.msra.mxu0 0.0
        %1169 = vmatprep.subr.mxu0 0.0
        %1170 = vmatpush1.msra.mxu0 0.0
        %1171 = vmatprep.subr.mxu0 0.0
        %1172 = vmatpush1.msra.mxu0 0.0
        %1173 = vmatprep.subr.mxu0 0.0
        %1174 = vmatpush1.msra.mxu0 0.0
        %1175 = vmatprep.subr.mxu0 0.0
        %1176 = vmatpush1.msra.mxu0 0.0
        %1177 = vmatprep.subr.mxu0 0.0
        %1178 = vmatpush1.msra.mxu0 0.0
        %1179 = vmatprep.subr.mxu0 0.0
        %1180 = vmatpush1.msra.mxu0 0.0
        %1181 = vmatprep.mubr.f32.mxu0 0.0
        %1182 = vmatmul.mubr.f32.gmra.mrb[0].mxu0 %v1112
        %v1183 = vpop.f32.mrb[0].mxu0
        %v1184 = vadd.f32 0.0, %v1183
        %v1185 = vpop.f32.mrb[0].mxu0
        %v1186 = vadd.f32 0.0, %v1185
        %1187 = vmatprep.mubr.f32.mxu0 0.0
        %1188 = vmatmul.mubr.f32.gmra.mrb[0].mxu0 %v1115
        %v1189 = vpop.f32.mrb[0].mxu0
        %v1190 = vadd.f32 0.0, %v1189
        %v1191 = vpop.f32.mrb[0].mxu0
        %v1192 = vadd.f32 0.0, %v1191
        %1193 = vdwg.mxu0
        %v1194 = vadd.f32 %v1099, %v1184
        %v1195 = vadd.f32 %v1100, %v1186
        %v1196 = vadd.f32 %v1101, %v1190
        %v1197 = vadd.f32 %v1102, %v1192
        %v1198 = vld [vmem:[%s2] sm:$0xff]
        %v1199 = vld [vmem:[%s2 + $0x8] sm:$0xff]
        %1201 = vset.pattern.permute.xlu0 0
        %1202 = vperm.xlu0 %1201, %v1198
        %v1203 = vpop.permute.xlu0 %1202
        %1206 = vset.pattern.permute.xlu0 0
        %1207 = vperm.xlu0 %1206, %v1199
        %v1208 = vpop.permute.xlu0 %1207
        %v1210 = vadd.f32 %v1194, %v1203
        %v1211 = vadd.f32 %v1195, %v1203
        %v1212 = vadd.f32 %v1196, %v1208
        %v1213 = vadd.f32 %v1197, %v1208
        %v1214 = vadd.f32 %v1210, 3.0
        %v1215 = vadd.f32 %v1211, 3.0
        %v1216 = vadd.f32 %v1212, 3.0
        %v1217 = vadd.f32 %v1213, 3.0
        %v1218 = vmax.f32 %v1214, 0.0
        %v1219 = vmax.f32 %v1215, 0.0
        %v1220 = vmax.f32 %v1216, 0.0
        %v1221 = vmax.f32 %v1217, 0.0
        %v1222 = vmin.f32 %v1218, 6.0
        %v1223 = vmin.f32 %v1219, 6.0
        %v1224 = vmin.f32 %v1220, 6.0
        %v1225 = vmin.f32 %v1221, 6.0
        %v1226 = vmul.f32 %v1210, %v1222
        %v1227 = vmul.f32 %v1211, %v1223
        %v1228 = vmul.f32 %v1212, %v1224
        %v1229 = vmul.f32 %v1213, %v1225
        %v1230 = vmul.f32 %v1226, 0.16666667
        %v1231 = vmul.f32 %v1227, 0.16666667
        %v1232 = vmul.f32 %v1228, 0.16666667
        %v1233 = vmul.f32 %v1229, 0.16666667
        %v1234 = vld [vmem:[%s340] sm:$0xff]
        %v1235 = vld [vmem:[%s340 + $0x8] sm:$0xff]
        %v1236 = vld [vmem:[%s340 + $0x10] sm:$0xff]
        %v1237 = vld [vmem:[%s340 + $0x18] sm:$0xff]
        %v1238 = vadd.f32 %v1230, %v1234
        %v1239 = vadd.f32 %v1231, %v1235
        %v1240 = vadd.f32 %v1232, %v1236
        %v1241 = vadd.f32 %v1233, %v1237
        %1242 = vst [vmem:[%s350] sm:$0xff] %v1238
        %1243 = vst [vmem:[%s350 + $0x8] sm:$0xff] %v1239
        %1244 = vst [vmem:[%s350 + $0x10] sm:$0xff] %v1240
        %1245 = vst [vmem:[%s350 + $0x18] sm:$0xff] %v1241
        %s1246 = smul.u32 2, %s20
        %p1247 = scmp.lt.s32.totalorder %s19, 1
        %s1248 = scalar_select %p1247, %s19, 1
        %p1249 = scmp.lt.s32.totalorder %s1246, 1
        %s1250 = scalar_select %p1249, %s1246, 1
        %s1251 = smul.addr %s1248, 4
        %s1252 = sadd.s32 %s1250, %s1251
        %s1253 = smul.addr %s1252, 8
        %s1254 = scalar_lea.vmem %s4, %s1253
        // Predicated region
        $region60: #{c1_forward_pallas.5} parent=54 // pred_check
          %p1255 = pneg %p145
        $region61: #{c1_forward_pallas.5} parent=54 // pred_check_branch
          %1257 = sbr.rel (%p1255) target = $region63
        $region62: #{c1_forward_pallas.5} parent=54 // pred_region
          %s1258 = smul.u32 2, %s20
        $region63: #{c1_forward_pallas.5} parent=54 // pred_fallthru
          _
      $region55: #{c1_forward_pallas.5} parent=5 // pred_fallthru
        _
      %p1259 = scmp.le.s32.totalorder 2, %s10
      // Predicated region
      $region64: #{c1_forward_pallas.5} parent=5 // pred_check
        %p1260 = pneg %p1259
      $region65: #{c1_forward_pallas.5} parent=5 // pred_check_branch
        %1262 = sbr.rel (%p1260) target = $region67
      $region66: #{c1_forward_pallas.5} parent=5 // pred_region
        %s1263 = ssub.s32 %s10, 2
        // Predicated region
        $region68: #{c1_forward_pallas.5} parent=66 // pred_check
          %p1264 = pneg %p151
        $region69: #{c1_forward_pallas.5} parent=66 // pred_check_branch
          %1266 = sbr.rel (%p1264) target = $region71
        $region70: #{c1_forward_pallas.5} parent=66 // pred_region
          %s1267 = smul.u32 2, %s22
          %p1268 = scmp.lt.s32.totalorder %s21, 1
          %s1269 = scalar_select %p1268, %s21, 1
          %p1270 = scmp.lt.s32.totalorder %s1267, 1
          %s1271 = scalar_select %p1270, %s1267, 1
          %s1272 = smul.addr %s1269, 4
          %s1273 = sadd.s32 %s1271, %s1272
          %s1274 = smul.addr %s1273, 8
          %s1275 = scalar_lea.vmem %s4, %s1274
        $region71: #{c1_forward_pallas.5} parent=66 // pred_fallthru
          _
      $region67: #{c1_forward_pallas.5} parent=5 // pred_fallthru
        _
    $region6: #{c1_forward_pallas.5} parent=1 // loop_footer
      %s14 = sadd.s32 1, %s10
    $region7: #{c1_forward_pallas.5} parent=1 // loop_footer_branch
      %9 = sbr.rel target = $region3
    $region8: #{c1_forward_pallas.5} parent=1 // loop_exit
      _

</llo_original>
